<compile_context>
chip_gen: v5e
topology: v5e:2x2
jax: 0.10.0
libtpu: 0.0.40
codegen_flags: <defaults>
</compile_context>

<pallas_src>
import jax
import jax.numpy as jnp
from jax.experimental import pallas as pl
from jax.experimental.pallas import tpu as pltpu

# ----- module hyper-parameters (defaults of the PyTorch module) -----
DIM_IN = 20
DIM_OUT = 20
DIM_EMBED = 512
OBJECTS = DIM_IN          # required by the out-Linear's in_features
B = 2                     # batch
L2_EPS = 1e-8
_N_PARTIAL = 4            # independent accumulators in the out projection


def gcn_kernel(a_ref, x_ref, w1_ref, w2_ref, w3_ref, wout_hbm, bout_ref,
               o_ref, wout_vmem, wout_sem):
    # a_ref:     (B, OBJECTS, OBJECTS)            adjacency
    # x_ref:     (B, OBJECTS, DIM_IN)             node features
    # w1_ref:    (DIM_IN, DIM_IN)                 fc1.weight.T
    # w2_ref:    (DIM_IN, DIM_IN//2)              fc2.weight.T
    # w3_ref:    (DIM_IN//2, DIM_OUT)             fc3.weight.T
    # wout_hbm:  (OBJECTS, DIM_OUT, DIM_EMBED)    out.weight.T reshaped (HBM, pl.ANY)
    # bout_ref:  (1, DIM_EMBED)                   out.bias
    # o_ref:     (B, DIM_EMBED)                   l2-normalized embeddings
    # wout_vmem: VMEM scratch, landing buffer for wout_hbm
    # wout_sem:  DMA semaphore

    # ---- start streaming the big out-projection weight NOW; the conv chain
    #      below runs while the DMA is in flight (P4-style manual overlap) ----
    wout_cp = pltpu.make_async_copy(wout_hbm, wout_vmem, wout_sem)
    wout_cp.start()

    batch = a_ref.shape[0]
    n_obj = a_ref.shape[1]

    w1 = w1_ref[...]
    w2 = w2_ref[...]
    w3 = w3_ref[...]

    # ---- 3-layer graph-conv chain, statically unrolled over the batch so the
    #      two independent matmul chains interleave in the VLIW schedule ----
    hs = []
    for b in range(batch):
        adj = a_ref[b]                                             # (n_obj, n_obj)
        h = jnp.dot(adj, x_ref[b], preferred_element_type=jnp.float32)
        h = jnp.maximum(jnp.dot(h, w1, preferred_element_type=jnp.float32), 0.0)
        h = jnp.dot(adj, h, preferred_element_type=jnp.float32)
        h = jnp.maximum(jnp.dot(h, w2, preferred_element_type=jnp.float32), 0.0)
        h = jnp.dot(adj, h, preferred_element_type=jnp.float32)
        h = jnp.maximum(jnp.dot(h, w3, preferred_element_type=jnp.float32), 0.0)
        hs.append(h)                                               # (n_obj, DIM_OUT)

    # ---- the projection needs wout: wait only now ----
    wout_cp.wait()

    bias = bout_ref[...]                                           # (1, DIM_EMBED)
    for b in range(batch):
        h = hs[b]
        # flat(h) @ Wout.T  ==  sum_o  h[o:o+1, :] @ Wout_r[o]
        # Round-robin over _N_PARTIAL independent accumulators so the MXU push
        # for object o+1 overlaps the pop/add of object o (no 20-deep chain).
        partials = [jnp.zeros_like(bias) for _ in range(_N_PARTIAL)]
        for o in range(n_obj):
            partials[o % _N_PARTIAL] = partials[o % _N_PARTIAL] + jnp.dot(
                h[o:o + 1, :], wout_vmem[o], preferred_element_type=jnp.float32)
        y = bias
        for p in partials:
            y = y + p

        # l2norm matching the reference: x / (sqrt(sum(x^2)) + eps)
        norm = jnp.sqrt(jnp.sum(y * y, axis=-1, keepdims=True)) + L2_EPS
        o_ref[b:b + 1, :] = y / norm


def gcn_forward(A, X, params):
    batch, n_obj, d_in = X.shape
    d_hid = params["w2t"].shape[1]
    d_out = params["w3t"].shape[1]
    d_emb = params["bout"].shape[1]

    # The out-Linear has in_features = dim_out*dim_in while the flattened feature
    # is objects*dim_out => the module requires objects == dim_in.
    assert n_obj == d_in, "GCN requires objects == dim_in (out-Linear in_features)"
    assert params["wout_t"].shape[0] == n_obj * d_out

    # Pre-reshape out.weight.T wrapper-side so the kernel never reshapes activations.
    wout_r = params["wout_t"].reshape(n_obj, d_out, d_emb)

    def vmem_full(shape):
        n = len(shape)
        return pl.BlockSpec(shape, lambda i, _n=n: (0,) * _n)

    out = pl.pallas_call(
        gcn_kernel,
        out_shape=jax.ShapeDtypeStruct((batch, d_emb), jnp.float32),
        grid_spec=pltpu.PrefetchScalarGridSpec(
            num_scalar_prefetch=0,
            grid=(1,),                                    # single fused step (batch folded in)
            in_specs=[
                vmem_full((batch, n_obj, n_obj)),         # A
                vmem_full((batch, n_obj, d_in)),          # X
                vmem_full((d_in, d_in)),                  # fc1.weight.T
                vmem_full((d_in, d_hid)),                 # fc2.weight.T
                vmem_full((d_hid, d_out)),                # fc3.weight.T
                pl.BlockSpec(memory_space=pl.ANY),        # out.weight.T: stays in HBM, manual DMA
                vmem_full((1, d_emb)),                    # out.bias
            ],
            out_specs=vmem_full((batch, d_emb)),
            scratch_shapes=[
                pltpu.VMEM((n_obj, d_out, d_emb), jnp.float32),  # wout landing buffer
                pltpu.SemaphoreType.DMA(()),
            ],
        ),
        compiler_params=pltpu.CompilerParams(dimension_semantics=("arbitrary",)),
    )(A, X, params["w1t"], params["w2t"], params["w3t"], wout_r, params["bout"])
    return out


# ----- pure-JAX reference (mirrors the PyTorch forward) -----
def reference_forward(A, X, p):
    hp = jax.lax.Precision.HIGHEST
    bmm = lambda a, x: jnp.einsum("bij,bjk->bik", a, x, precision=hp)
    lin = lambda x, w: jnp.einsum("...ij,jk->...ik", x, w, precision=hp)

    h = jax.nn.relu(lin(bmm(A, X), p["w1t"]))
    h = jax.nn.relu(lin(bmm(A, h), p["w2t"]))
    h = jax.nn.relu(lin(bmm(A, h), p["w3t"]))
    flat = h.reshape(h.shape[0], -1)                       # (B, objects*dim_out)
    y = lin(flat, p["wout_t"]) + p["bout"]                 # (B, dim_embed)
    norm = jnp.sqrt(jnp.sum(y * y, axis=-1, keepdims=True)) + L2_EPS
    return y / norm


def init_params(key):
    k1, k2, k3, k4, k5 = jax.random.split(key, 5)
    return {
        # stored already transposed (y = x @ W.T layout)
        "w1t":    0.2 * jax.random.normal(k1, (DIM_IN, DIM_IN), jnp.float32),
        "w2t":    0.2 * jax.random.normal(k2, (DIM_IN, DIM_IN // 2), jnp.float32),
        "w3t":    0.2 * jax.random.normal(k3, (DIM_IN // 2, DIM_OUT), jnp.float32),
        "wout_t": 0.05 * jax.random.normal(k4, (OBJECTS * DIM_OUT, DIM_EMBED), jnp.float32),
        "bout":   0.01 * jax.random.normal(k5, (1, DIM_EMBED), jnp.float32),
    }


if __name__ == "__main__":
    key = jax.random.PRNGKey(0)
    kA, kX, kP = jax.random.split(key, 3)

    A = jax.random.uniform(kA, (B, OBJECTS, OBJECTS), jnp.float32)
    A = A / jnp.sum(A, axis=-1, keepdims=True)   # row-normalized adjacency
    X = jax.random.normal(kX, (B, OBJECTS, DIM_IN), jnp.float32)
    params = init_params(kP)

    out = gcn_forward(A, X, params)
    out = jax.block_until_ready(out)

    ref = reference_forward(A, X, params)
    assert out.shape == (B, DIM_EMBED)
    assert jnp.allclose(out, ref, atol=1e-4, rtol=1e-4), "mismatch vs JAX reference"
    print("KERNEL_OK")
</pallas_src>

<mosaic_0001>
module attributes {stable_mosaic.version = 11 : i64} {
  func.func @gcn_kernel(%arg0: i32, %arg1: memref<2x20x20xf32, #tpu.memory_space<vmem>>, %arg2: memref<2x20x20xf32, #tpu.memory_space<vmem>>, %arg3: memref<20x20xf32, #tpu.memory_space<vmem>>, %arg4: memref<20x10xf32, #tpu.memory_space<vmem>>, %arg5: memref<10x20xf32, #tpu.memory_space<vmem>>, %arg6: memref<20x20x512xf32, #tpu.memory_space<any>>, %arg7: memref<1x512xf32, #tpu.memory_space<vmem>>, %arg8: memref<2x512xf32, #tpu.memory_space<vmem>>, %arg9: memref<20x20x512xf32, #tpu.memory_space<vmem>>, %arg10: memref<!tpu.dma_semaphore, #tpu.memory_space<semaphore_mem>>) attributes {dimension_semantics = [#tpu.dimension_semantics<arbitrary>], iteration_bounds = array<i64: 1>, scalar_prefetch = 0 : i64, scratch_operands = 2 : i64, tpu.core_type = #tpu.core_type<tc>, window_params = [{pipeline_mode = #tpu.pipeline_mode<synchronous>, transform_indices = @transform_0, window_bounds = array<i64: 2, 20, 20>}, {pipeline_mode = #tpu.pipeline_mode<synchronous>, transform_indices = @transform_1, window_bounds = array<i64: 2, 20, 20>}, {pipeline_mode = #tpu.pipeline_mode<synchronous>, transform_indices = @transform_2, window_bounds = array<i64: 20, 20>}, {pipeline_mode = #tpu.pipeline_mode<synchronous>, transform_indices = @transform_3, window_bounds = array<i64: 20, 10>}, {pipeline_mode = #tpu.pipeline_mode<synchronous>, transform_indices = @transform_4, window_bounds = array<i64: 10, 20>}, {}, {pipeline_mode = #tpu.pipeline_mode<synchronous>, transform_indices = @transform_6, window_bounds = array<i64: 1, 512>}, {pipeline_mode = #tpu.pipeline_mode<synchronous>, transform_indices = @transform_7, window_bounds = array<i64: 2, 512>}]} {
    tpu.enqueue_dma source(%arg6 : memref<20x20x512xf32, #tpu.memory_space<any>>) target(%arg9 : memref<20x20x512xf32, #tpu.memory_space<vmem>>) target_semaphore(%arg10 : memref<!tpu.dma_semaphore, #tpu.memory_space<semaphore_mem>>)
    %c0 = arith.constant 0 : index
    %c0_0 = arith.constant 0 : index
    %0 = vector.load %arg3[%c0, %c0_0] : memref<20x20xf32, #tpu.memory_space<vmem>>, vector<20x20xf32>
    %c0_1 = arith.constant 0 : index
    %c0_2 = arith.constant 0 : index
    %1 = vector.load %arg4[%c0_1, %c0_2] : memref<20x10xf32, #tpu.memory_space<vmem>>, vector<20x10xf32>
    %c0_3 = arith.constant 0 : index
    %c0_4 = arith.constant 0 : index
    %2 = vector.load %arg5[%c0_3, %c0_4] : memref<10x20xf32, #tpu.memory_space<vmem>>, vector<10x20xf32>
    %c0_5 = arith.constant 0 : index
    %c0_6 = arith.constant 0 : index
    %c0_7 = arith.constant 0 : index
    %3 = vector.load %arg1[%c0_5, %c0_6, %c0_7] : memref<2x20x20xf32, #tpu.memory_space<vmem>>, vector<1x20x20xf32>
    %4 = vector.shape_cast %3 : vector<1x20x20xf32> to vector<20x20xf32>
    %c0_8 = arith.constant 0 : index
    %c0_9 = arith.constant 0 : index
    %c0_10 = arith.constant 0 : index
    %5 = vector.load %arg2[%c0_8, %c0_9, %c0_10] : memref<2x20x20xf32, #tpu.memory_space<vmem>>, vector<1x20x20xf32>
    %6 = vector.shape_cast %5 : vector<1x20x20xf32> to vector<20x20xf32>
    %cst = arith.constant dense<0.000000e+00> : vector<20x20xf32>
    %7 = tpu.matmul %4, %6, %cst {dimension_numbers = #tpu.dot_dimension_numbers<[1], [0], [0], [1], [0, 0, 1, 1], [], []>} : vector<20x20xf32>, vector<20x20xf32>, vector<20x20xf32> -> vector<20x20xf32>
    %cst_11 = arith.constant dense<0.000000e+00> : vector<20x20xf32>
    %8 = tpu.matmul %7, %0, %cst_11 {dimension_numbers = #tpu.dot_dimension_numbers<[1], [0], [0], [1], [0, 0, 1, 1], [], []>} : vector<20x20xf32>, vector<20x20xf32>, vector<20x20xf32> -> vector<20x20xf32>
    %cst_12 = arith.constant 0.000000e+00 : f32
    %9 = vector.broadcast %cst_12 : f32 to vector<20x20xf32>
    %10 = arith.maximumf %8, %9 : vector<20x20xf32>
    %cst_13 = arith.constant dense<0.000000e+00> : vector<20x20xf32>
    %11 = tpu.matmul %4, %10, %cst_13 {dimension_numbers = #tpu.dot_dimension_numbers<[1], [0], [0], [1], [0, 0, 1, 1], [], []>} : vector<20x20xf32>, vector<20x20xf32>, vector<20x20xf32> -> vector<20x20xf32>
    %cst_14 = arith.constant dense<0.000000e+00> : vector<20x10xf32>
    %12 = tpu.matmul %11, %1, %cst_14 {dimension_numbers = #tpu.dot_dimension_numbers<[1], [0], [0], [1], [0, 0, 1, 1], [], []>} : vector<20x20xf32>, vector<20x10xf32>, vector<20x10xf32> -> vector<20x10xf32>
    %cst_15 = arith.constant 0.000000e+00 : f32
    %13 = vector.broadcast %cst_15 : f32 to vector<20x10xf32>
    %14 = arith.maximumf %12, %13 : vector<20x10xf32>
    %cst_16 = arith.constant dense<0.000000e+00> : vector<20x10xf32>
    %15 = tpu.matmul %4, %14, %cst_16 {dimension_numbers = #tpu.dot_dimension_numbers<[1], [0], [0], [1], [0, 0, 1, 1], [], []>} : vector<20x20xf32>, vector<20x10xf32>, vector<20x10xf32> -> vector<20x10xf32>
    %cst_17 = arith.constant dense<0.000000e+00> : vector<20x20xf32>
    %16 = tpu.matmul %15, %2, %cst_17 {dimension_numbers = #tpu.dot_dimension_numbers<[1], [0], [0], [1], [0, 0, 1, 1], [], []>} : vector<20x10xf32>, vector<10x20xf32>, vector<20x20xf32> -> vector<20x20xf32>
    %cst_18 = arith.constant 0.000000e+00 : f32
    %17 = vector.broadcast %cst_18 : f32 to vector<20x20xf32>
    %18 = arith.maximumf %16, %17 : vector<20x20xf32>
    %c1 = arith.constant 1 : index
    %c0_19 = arith.constant 0 : index
    %c0_20 = arith.constant 0 : index
    %19 = vector.load %arg1[%c1, %c0_19, %c0_20] : memref<2x20x20xf32, #tpu.memory_space<vmem>>, vector<1x20x20xf32>
    %20 = vector.shape_cast %19 : vector<1x20x20xf32> to vector<20x20xf32>
    %c1_21 = arith.constant 1 : index
    %c0_22 = arith.constant 0 : index
    %c0_23 = arith.constant 0 : index
    %21 = vector.load %arg2[%c1_21, %c0_22, %c0_23] : memref<2x20x20xf32, #tpu.memory_space<vmem>>, vector<1x20x20xf32>
    %22 = vector.shape_cast %21 : vector<1x20x20xf32> to vector<20x20xf32>
    %cst_24 = arith.constant dense<0.000000e+00> : vector<20x20xf32>
    %23 = tpu.matmul %20, %22, %cst_24 {dimension_numbers = #tpu.dot_dimension_numbers<[1], [0], [0], [1], [0, 0, 1, 1], [], []>} : vector<20x20xf32>, vector<20x20xf32>, vector<20x20xf32> -> vector<20x20xf32>
    %cst_25 = arith.constant dense<0.000000e+00> : vector<20x20xf32>
    %24 = tpu.matmul %23, %0, %cst_25 {dimension_numbers = #tpu.dot_dimension_numbers<[1], [0], [0], [1], [0, 0, 1, 1], [], []>} : vector<20x20xf32>, vector<20x20xf32>, vector<20x20xf32> -> vector<20x20xf32>
    %cst_26 = arith.constant 0.000000e+00 : f32
    %25 = vector.broadcast %cst_26 : f32 to vector<20x20xf32>
    %26 = arith.maximumf %24, %25 : vector<20x20xf32>
    %cst_27 = arith.constant dense<0.000000e+00> : vector<20x20xf32>
    %27 = tpu.matmul %20, %26, %cst_27 {dimension_numbers = #tpu.dot_dimension_numbers<[1], [0], [0], [1], [0, 0, 1, 1], [], []>} : vector<20x20xf32>, vector<20x20xf32>, vector<20x20xf32> -> vector<20x20xf32>
    %cst_28 = arith.constant dense<0.000000e+00> : vector<20x10xf32>
    %28 = tpu.matmul %27, %1, %cst_28 {dimension_numbers = #tpu.dot_dimension_numbers<[1], [0], [0], [1], [0, 0, 1, 1], [], []>} : vector<20x20xf32>, vector<20x10xf32>, vector<20x10xf32> -> vector<20x10xf32>
    %cst_29 = arith.constant 0.000000e+00 : f32
    %29 = vector.broadcast %cst_29 : f32 to vector<20x10xf32>
    %30 = arith.maximumf %28, %29 : vector<20x10xf32>
    %cst_30 = arith.constant dense<0.000000e+00> : vector<20x10xf32>
    %31 = tpu.matmul %20, %30, %cst_30 {dimension_numbers = #tpu.dot_dimension_numbers<[1], [0], [0], [1], [0, 0, 1, 1], [], []>} : vector<20x20xf32>, vector<20x10xf32>, vector<20x10xf32> -> vector<20x10xf32>
    %cst_31 = arith.constant dense<0.000000e+00> : vector<20x20xf32>
    %32 = tpu.matmul %31, %2, %cst_31 {dimension_numbers = #tpu.dot_dimension_numbers<[1], [0], [0], [1], [0, 0, 1, 1], [], []>} : vector<20x10xf32>, vector<10x20xf32>, vector<20x20xf32> -> vector<20x20xf32>
    %cst_32 = arith.constant 0.000000e+00 : f32
    %33 = vector.broadcast %cst_32 : f32 to vector<20x20xf32>
    %34 = arith.maximumf %32, %33 : vector<20x20xf32>
    tpu.wait_dma2 semaphore(%arg10 : memref<!tpu.dma_semaphore, #tpu.memory_space<semaphore_mem>>) src(%arg6 : memref<20x20x512xf32, #tpu.memory_space<any>>) dst(%arg9 : memref<20x20x512xf32, #tpu.memory_space<vmem>>)
    %c0_33 = arith.constant 0 : index
    %c0_34 = arith.constant 0 : index
    %35 = vector.load %arg7[%c0_33, %c0_34] : memref<1x512xf32, #tpu.memory_space<vmem>>, vector<1x512xf32>
    %cst_35 = arith.constant 0.000000e+00 : f32
    %36 = vector.broadcast %cst_35 : f32 to vector<1x512xf32>
    %cst_36 = arith.constant 0.000000e+00 : f32
    %37 = vector.broadcast %cst_36 : f32 to vector<1x512xf32>
    %cst_37 = arith.constant 0.000000e+00 : f32
    %38 = vector.broadcast %cst_37 : f32 to vector<1x512xf32>
    %cst_38 = arith.constant 0.000000e+00 : f32
    %39 = vector.broadcast %cst_38 : f32 to vector<1x512xf32>
    %40 = vector.extract_strided_slice %18 {offsets = [0, 0], sizes = [1, 20], strides = [1, 1]} : vector<20x20xf32> to vector<1x20xf32>
    %c0_39 = arith.constant 0 : index
    %c0_40 = arith.constant 0 : index
    %c0_41 = arith.constant 0 : index
    %41 = vector.load %arg9[%c0_39, %c0_40, %c0_41] : memref<20x20x512xf32, #tpu.memory_space<vmem>>, vector<1x20x512xf32>
    %42 = vector.shape_cast %41 : vector<1x20x512xf32> to vector<20x512xf32>
    %cst_42 = arith.constant dense<0.000000e+00> : vector<1x512xf32>
    %43 = tpu.matmul %40, %42, %cst_42 {dimension_numbers = #tpu.dot_dimension_numbers<[1], [0], [0], [1], [0, 0, 1, 1], [], []>} : vector<1x20xf32>, vector<20x512xf32>, vector<1x512xf32> -> vector<1x512xf32>
    %44 = arith.addf %36, %43 : vector<1x512xf32>
    %45 = vector.extract_strided_slice %18 {offsets = [1, 0], sizes = [1, 20], strides = [1, 1]} : vector<20x20xf32> to vector<1x20xf32>
    %c1_43 = arith.constant 1 : index
    %c0_44 = arith.constant 0 : index
    %c0_45 = arith.constant 0 : index
    %46 = vector.load %arg9[%c1_43, %c0_44, %c0_45] : memref<20x20x512xf32, #tpu.memory_space<vmem>>, vector<1x20x512xf32>
    %47 = vector.shape_cast %46 : vector<1x20x512xf32> to vector<20x512xf32>
    %cst_46 = arith.constant dense<0.000000e+00> : vector<1x512xf32>
    %48 = tpu.matmul %45, %47, %cst_46 {dimension_numbers = #tpu.dot_dimension_numbers<[1], [0], [0], [1], [0, 0, 1, 1], [], []>} : vector<1x20xf32>, vector<20x512xf32>, vector<1x512xf32> -> vector<1x512xf32>
    %49 = arith.addf %37, %48 : vector<1x512xf32>
    %50 = vector.extract_strided_slice %18 {offsets = [2, 0], sizes = [1, 20], strides = [1, 1]} : vector<20x20xf32> to vector<1x20xf32>
    %c2 = arith.constant 2 : index
    %c0_47 = arith.constant 0 : index
    %c0_48 = arith.constant 0 : index
    %51 = vector.load %arg9[%c2, %c0_47, %c0_48] : memref<20x20x512xf32, #tpu.memory_space<vmem>>, vector<1x20x512xf32>
    %52 = vector.shape_cast %51 : vector<1x20x512xf32> to vector<20x512xf32>
    %cst_49 = arith.constant dense<0.000000e+00> : vector<1x512xf32>
    %53 = tpu.matmul %50, %52, %cst_49 {dimension_numbers = #tpu.dot_dimension_numbers<[1], [0], [0], [1], [0, 0, 1, 1], [], []>} : vector<1x20xf32>, vector<20x512xf32>, vector<1x512xf32> -> vector<1x512xf32>
    %54 = arith.addf %38, %53 : vector<1x512xf32>
    %55 = vector.extract_strided_slice %18 {offsets = [3, 0], sizes = [1, 20], strides = [1, 1]} : vector<20x20xf32> to vector<1x20xf32>
    %c3 = arith.constant 3 : index
    %c0_50 = arith.constant 0 : index
    %c0_51 = arith.constant 0 : index
    %56 = vector.load %arg9[%c3, %c0_50, %c0_51] : memref<20x20x512xf32, #tpu.memory_space<vmem>>, vector<1x20x512xf32>
    %57 = vector.shape_cast %56 : vector<1x20x512xf32> to vector<20x512xf32>
    %cst_52 = arith.constant dense<0.000000e+00> : vector<1x512xf32>
    %58 = tpu.matmul %55, %57, %cst_52 {dimension_numbers = #tpu.dot_dimension_numbers<[1], [0], [0], [1], [0, 0, 1, 1], [], []>} : vector<1x20xf32>, vector<20x512xf32>, vector<1x512xf32> -> vector<1x512xf32>
    %59 = arith.addf %39, %58 : vector<1x512xf32>
    %60 = vector.extract_strided_slice %18 {offsets = [4, 0], sizes = [1, 20], strides = [1, 1]} : vector<20x20xf32> to vector<1x20xf32>
    %c4 = arith.constant 4 : index
    %c0_53 = arith.constant 0 : index
    %c0_54 = arith.constant 0 : index
    %61 = vector.load %arg9[%c4, %c0_53, %c0_54] : memref<20x20x512xf32, #tpu.memory_space<vmem>>, vector<1x20x512xf32>
    %62 = vector.shape_cast %61 : vector<1x20x512xf32> to vector<20x512xf32>
    %cst_55 = arith.constant dense<0.000000e+00> : vector<1x512xf32>
    %63 = tpu.matmul %60, %62, %cst_55 {dimension_numbers = #tpu.dot_dimension_numbers<[1], [0], [0], [1], [0, 0, 1, 1], [], []>} : vector<1x20xf32>, vector<20x512xf32>, vector<1x512xf32> -> vector<1x512xf32>
    %64 = arith.addf %44, %63 : vector<1x512xf32>
    %65 = vector.extract_strided_slice %18 {offsets = [5, 0], sizes = [1, 20], strides = [1, 1]} : vector<20x20xf32> to vector<1x20xf32>
    %c5 = arith.constant 5 : index
    %c0_56 = arith.constant 0 : index
    %c0_57 = arith.constant 0 : index
    %66 = vector.load %arg9[%c5, %c0_56, %c0_57] : memref<20x20x512xf32, #tpu.memory_space<vmem>>, vector<1x20x512xf32>
    %67 = vector.shape_cast %66 : vector<1x20x512xf32> to vector<20x512xf32>
    %cst_58 = arith.constant dense<0.000000e+00> : vector<1x512xf32>
    %68 = tpu.matmul %65, %67, %cst_58 {dimension_numbers = #tpu.dot_dimension_numbers<[1], [0], [0], [1], [0, 0, 1, 1], [], []>} : vector<1x20xf32>, vector<20x512xf32>, vector<1x512xf32> -> vector<1x512xf32>
    %69 = arith.addf %49, %68 : vector<1x512xf32>
    %70 = vector.extract_strided_slice %18 {offsets = [6, 0], sizes = [1, 20], strides = [1, 1]} : vector<20x20xf32> to vector<1x20xf32>
    %c6 = arith.constant 6 : index
    %c0_59 = arith.constant 0 : index
    %c0_60 = arith.constant 0 : index
    %71 = vector.load %arg9[%c6, %c0_59, %c0_60] : memref<20x20x512xf32, #tpu.memory_space<vmem>>, vector<1x20x512xf32>
    %72 = vector.shape_cast %71 : vector<1x20x512xf32> to vector<20x512xf32>
    %cst_61 = arith.constant dense<0.000000e+00> : vector<1x512xf32>
    %73 = tpu.matmul %70, %72, %cst_61 {dimension_numbers = #tpu.dot_dimension_numbers<[1], [0], [0], [1], [0, 0, 1, 1], [], []>} : vector<1x20xf32>, vector<20x512xf32>, vector<1x512xf32> -> vector<1x512xf32>
    %74 = arith.addf %54, %73 : vector<1x512xf32>
    %75 = vector.extract_strided_slice %18 {offsets = [7, 0], sizes = [1, 20], strides = [1, 1]} : vector<20x20xf32> to vector<1x20xf32>
    %c7 = arith.constant 7 : index
    %c0_62 = arith.constant 0 : index
    %c0_63 = arith.constant 0 : index
    %76 = vector.load %arg9[%c7, %c0_62, %c0_63] : memref<20x20x512xf32, #tpu.memory_space<vmem>>, vector<1x20x512xf32>
    %77 = vector.shape_cast %76 : vector<1x20x512xf32> to vector<20x512xf32>
    %cst_64 = arith.constant dense<0.000000e+00> : vector<1x512xf32>
    %78 = tpu.matmul %75, %77, %cst_64 {dimension_numbers = #tpu.dot_dimension_numbers<[1], [0], [0], [1], [0, 0, 1, 1], [], []>} : vector<1x20xf32>, vector<20x512xf32>, vector<1x512xf32> -> vector<1x512xf32>
    %79 = arith.addf %59, %78 : vector<1x512xf32>
    %80 = vector.extract_strided_slice %18 {offsets = [8, 0], sizes = [1, 20], strides = [1, 1]} : vector<20x20xf32> to vector<1x20xf32>
    %c8 = arith.constant 8 : index
    %c0_65 = arith.constant 0 : index
    %c0_66 = arith.constant 0 : index
    %81 = vector.load %arg9[%c8, %c0_65, %c0_66] : memref<20x20x512xf32, #tpu.memory_space<vmem>>, vector<1x20x512xf32>
    %82 = vector.shape_cast %81 : vector<1x20x512xf32> to vector<20x512xf32>
    %cst_67 = arith.constant dense<0.000000e+00> : vector<1x512xf32>
    %83 = tpu.matmul %80, %82, %cst_67 {dimension_numbers = #tpu.dot_dimension_numbers<[1], [0], [0], [1], [0, 0, 1, 1], [], []>} : vector<1x20xf32>, vector<20x512xf32>, vector<1x512xf32> -> vector<1x512xf32>
    %84 = arith.addf %64, %83 : vector<1x512xf32>
    %85 = vector.extract_strided_slice %18 {offsets = [9, 0], sizes = [1, 20], strides = [1, 1]} : vector<20x20xf32> to vector<1x20xf32>
    %c9 = arith.constant 9 : index
    %c0_68 = arith.constant 0 : index
    %c0_69 = arith.constant 0 : index
    %86 = vector.load %arg9[%c9, %c0_68, %c0_69] : memref<20x20x512xf32, #tpu.memory_space<vmem>>, vector<1x20x512xf32>
    %87 = vector.shape_cast %86 : vector<1x20x512xf32> to vector<20x512xf32>
    %cst_70 = arith.constant dense<0.000000e+00> : vector<1x512xf32>
    %88 = tpu.matmul %85, %87, %cst_70 {dimension_numbers = #tpu.dot_dimension_numbers<[1], [0], [0], [1], [0, 0, 1, 1], [], []>} : vector<1x20xf32>, vector<20x512xf32>, vector<1x512xf32> -> vector<1x512xf32>
    %89 = arith.addf %69, %88 : vector<1x512xf32>
    %90 = vector.extract_strided_slice %18 {offsets = [10, 0], sizes = [1, 20], strides = [1, 1]} : vector<20x20xf32> to vector<1x20xf32>
    %c10 = arith.constant 10 : index
    %c0_71 = arith.constant 0 : index
    %c0_72 = arith.constant 0 : index
    %91 = vector.load %arg9[%c10, %c0_71, %c0_72] : memref<20x20x512xf32, #tpu.memory_space<vmem>>, vector<1x20x512xf32>
    %92 = vector.shape_cast %91 : vector<1x20x512xf32> to vector<20x512xf32>
    %cst_73 = arith.constant dense<0.000000e+00> : vector<1x512xf32>
    %93 = tpu.matmul %90, %92, %cst_73 {dimension_numbers = #tpu.dot_dimension_numbers<[1], [0], [0], [1], [0, 0, 1, 1], [], []>} : vector<1x20xf32>, vector<20x512xf32>, vector<1x512xf32> -> vector<1x512xf32>
    %94 = arith.addf %74, %93 : vector<1x512xf32>
    %95 = vector.extract_strided_slice %18 {offsets = [11, 0], sizes = [1, 20], strides = [1, 1]} : vector<20x20xf32> to vector<1x20xf32>
    %c11 = arith.constant 11 : index
    %c0_74 = arith.constant 0 : index
    %c0_75 = arith.constant 0 : index
    %96 = vector.load %arg9[%c11, %c0_74, %c0_75] : memref<20x20x512xf32, #tpu.memory_space<vmem>>, vector<1x20x512xf32>
    %97 = vector.shape_cast %96 : vector<1x20x512xf32> to vector<20x512xf32>
    %cst_76 = arith.constant dense<0.000000e+00> : vector<1x512xf32>
    %98 = tpu.matmul %95, %97, %cst_76 {dimension_numbers = #tpu.dot_dimension_numbers<[1], [0], [0], [1], [0, 0, 1, 1], [], []>} : vector<1x20xf32>, vector<20x512xf32>, vector<1x512xf32> -> vector<1x512xf32>
    %99 = arith.addf %79, %98 : vector<1x512xf32>
    %100 = vector.extract_strided_slice %18 {offsets = [12, 0], sizes = [1, 20], strides = [1, 1]} : vector<20x20xf32> to vector<1x20xf32>
    %c12 = arith.constant 12 : index
    %c0_77 = arith.constant 0 : index
    %c0_78 = arith.constant 0 : index
    %101 = vector.load %arg9[%c12, %c0_77, %c0_78] : memref<20x20x512xf32, #tpu.memory_space<vmem>>, vector<1x20x512xf32>
    %102 = vector.shape_cast %101 : vector<1x20x512xf32> to vector<20x512xf32>
    %cst_79 = arith.constant dense<0.000000e+00> : vector<1x512xf32>
    %103 = tpu.matmul %100, %102, %cst_79 {dimension_numbers = #tpu.dot_dimension_numbers<[1], [0], [0], [1], [0, 0, 1, 1], [], []>} : vector<1x20xf32>, vector<20x512xf32>, vector<1x512xf32> -> vector<1x512xf32>
    %104 = arith.addf %84, %103 : vector<1x512xf32>
    %105 = vector.extract_strided_slice %18 {offsets = [13, 0], sizes = [1, 20], strides = [1, 1]} : vector<20x20xf32> to vector<1x20xf32>
    %c13 = arith.constant 13 : index
    %c0_80 = arith.constant 0 : index
    %c0_81 = arith.constant 0 : index
    %106 = vector.load %arg9[%c13, %c0_80, %c0_81] : memref<20x20x512xf32, #tpu.memory_space<vmem>>, vector<1x20x512xf32>
    %107 = vector.shape_cast %106 : vector<1x20x512xf32> to vector<20x512xf32>
    %cst_82 = arith.constant dense<0.000000e+00> : vector<1x512xf32>
    %108 = tpu.matmul %105, %107, %cst_82 {dimension_numbers = #tpu.dot_dimension_numbers<[1], [0], [0], [1], [0, 0, 1, 1], [], []>} : vector<1x20xf32>, vector<20x512xf32>, vector<1x512xf32> -> vector<1x512xf32>
    %109 = arith.addf %89, %108 : vector<1x512xf32>
    %110 = vector.extract_strided_slice %18 {offsets = [14, 0], sizes = [1, 20], strides = [1, 1]} : vector<20x20xf32> to vector<1x20xf32>
    %c14 = arith.constant 14 : index
    %c0_83 = arith.constant 0 : index
    %c0_84 = arith.constant 0 : index
    %111 = vector.load %arg9[%c14, %c0_83, %c0_84] : memref<20x20x512xf32, #tpu.memory_space<vmem>>, vector<1x20x512xf32>
    %112 = vector.shape_cast %111 : vector<1x20x512xf32> to vector<20x512xf32>
    %cst_85 = arith.constant dense<0.000000e+00> : vector<1x512xf32>
    %113 = tpu.matmul %110, %112, %cst_85 {dimension_numbers = #tpu.dot_dimension_numbers<[1], [0], [0], [1], [0, 0, 1, 1], [], []>} : vector<1x20xf32>, vector<20x512xf32>, vector<1x512xf32> -> vector<1x512xf32>
    %114 = arith.addf %94, %113 : vector<1x512xf32>
    %115 = vector.extract_strided_slice %18 {offsets = [15, 0], sizes = [1, 20], strides = [1, 1]} : vector<20x20xf32> to vector<1x20xf32>
    %c15 = arith.constant 15 : index
    %c0_86 = arith.constant 0 : index
    %c0_87 = arith.constant 0 : index
    %116 = vector.load %arg9[%c15, %c0_86, %c0_87] : memref<20x20x512xf32, #tpu.memory_space<vmem>>, vector<1x20x512xf32>
    %117 = vector.shape_cast %116 : vector<1x20x512xf32> to vector<20x512xf32>
    %cst_88 = arith.constant dense<0.000000e+00> : vector<1x512xf32>
    %118 = tpu.matmul %115, %117, %cst_88 {dimension_numbers = #tpu.dot_dimension_numbers<[1], [0], [0], [1], [0, 0, 1, 1], [], []>} : vector<1x20xf32>, vector<20x512xf32>, vector<1x512xf32> -> vector<1x512xf32>
    %119 = arith.addf %99, %118 : vector<1x512xf32>
    %120 = vector.extract_strided_slice %18 {offsets = [16, 0], sizes = [1, 20], strides = [1, 1]} : vector<20x20xf32> to vector<1x20xf32>
    %c16 = arith.constant 16 : index
    %c0_89 = arith.constant 0 : index
    %c0_90 = arith.constant 0 : index
    %121 = vector.load %arg9[%c16, %c0_89, %c0_90] : memref<20x20x512xf32, #tpu.memory_space<vmem>>, vector<1x20x512xf32>
    %122 = vector.shape_cast %121 : vector<1x20x512xf32> to vector<20x512xf32>
    %cst_91 = arith.constant dense<0.000000e+00> : vector<1x512xf32>
    %123 = tpu.matmul %120, %122, %cst_91 {dimension_numbers = #tpu.dot_dimension_numbers<[1], [0], [0], [1], [0, 0, 1, 1], [], []>} : vector<1x20xf32>, vector<20x512xf32>, vector<1x512xf32> -> vector<1x512xf32>
    %124 = arith.addf %104, %123 : vector<1x512xf32>
    %125 = vector.extract_strided_slice %18 {offsets = [17, 0], sizes = [1, 20], strides = [1, 1]} : vector<20x20xf32> to vector<1x20xf32>
    %c17 = arith.constant 17 : index
    %c0_92 = arith.constant 0 : index
    %c0_93 = arith.constant 0 : index
    %126 = vector.load %arg9[%c17, %c0_92, %c0_93] : memref<20x20x512xf32, #tpu.memory_space<vmem>>, vector<1x20x512xf32>
    %127 = vector.shape_cast %126 : vector<1x20x512xf32> to vector<20x512xf32>
    %cst_94 = arith.constant dense<0.000000e+00> : vector<1x512xf32>
    %128 = tpu.matmul %125, %127, %cst_94 {dimension_numbers = #tpu.dot_dimension_numbers<[1], [0], [0], [1], [0, 0, 1, 1], [], []>} : vector<1x20xf32>, vector<20x512xf32>, vector<1x512xf32> -> vector<1x512xf32>
    %129 = arith.addf %109, %128 : vector<1x512xf32>
    %130 = vector.extract_strided_slice %18 {offsets = [18, 0], sizes = [1, 20], strides = [1, 1]} : vector<20x20xf32> to vector<1x20xf32>
    %c18 = arith.constant 18 : index
    %c0_95 = arith.constant 0 : index
    %c0_96 = arith.constant 0 : index
    %131 = vector.load %arg9[%c18, %c0_95, %c0_96] : memref<20x20x512xf32, #tpu.memory_space<vmem>>, vector<1x20x512xf32>
    %132 = vector.shape_cast %131 : vector<1x20x512xf32> to vector<20x512xf32>
    %cst_97 = arith.constant dense<0.000000e+00> : vector<1x512xf32>
    %133 = tpu.matmul %130, %132, %cst_97 {dimension_numbers = #tpu.dot_dimension_numbers<[1], [0], [0], [1], [0, 0, 1, 1], [], []>} : vector<1x20xf32>, vector<20x512xf32>, vector<1x512xf32> -> vector<1x512xf32>
    %134 = arith.addf %114, %133 : vector<1x512xf32>
    %135 = vector.extract_strided_slice %18 {offsets = [19, 0], sizes = [1, 20], strides = [1, 1]} : vector<20x20xf32> to vector<1x20xf32>
    %c19 = arith.constant 19 : index
    %c0_98 = arith.constant 0 : index
    %c0_99 = arith.constant 0 : index
    %136 = vector.load %arg9[%c19, %c0_98, %c0_99] : memref<20x20x512xf32, #tpu.memory_space<vmem>>, vector<1x20x512xf32>
    %137 = vector.shape_cast %136 : vector<1x20x512xf32> to vector<20x512xf32>
    %cst_100 = arith.constant dense<0.000000e+00> : vector<1x512xf32>
    %138 = tpu.matmul %135, %137, %cst_100 {dimension_numbers = #tpu.dot_dimension_numbers<[1], [0], [0], [1], [0, 0, 1, 1], [], []>} : vector<1x20xf32>, vector<20x512xf32>, vector<1x512xf32> -> vector<1x512xf32>
    %139 = arith.addf %119, %138 : vector<1x512xf32>
    %140 = arith.addf %35, %124 : vector<1x512xf32>
    %141 = arith.addf %140, %129 : vector<1x512xf32>
    %142 = arith.addf %141, %134 : vector<1x512xf32>
    %143 = arith.addf %142, %139 : vector<1x512xf32>
    %144 = arith.mulf %143, %143 : vector<1x512xf32>
    %cst_101 = arith.constant dense<0.000000e+00> : vector<1xf32>
    %145 = vector.multi_reduction <add>, %144, %cst_101 [1] : vector<1x512xf32> to vector<1xf32>
    %146 = vector.shape_cast %145 : vector<1xf32> to vector<1x1xf32>
    %147 = math.sqrt %146 : vector<1x1xf32>
    %cst_102 = arith.constant 9.99999993E-9 : f32
    %148 = vector.broadcast %cst_102 : f32 to vector<1x1xf32>
    %149 = arith.addf %147, %148 : vector<1x1xf32>
    %150 = vector.broadcast %149 : vector<1x1xf32> to vector<1x512xf32>
    %151 = arith.divf %143, %150 : vector<1x512xf32>
    %c0_103 = arith.constant 0 : index
    %c0_104 = arith.constant 0 : index
    %152 = vector.load %arg8[%c0_103, %c0_104] : memref<2x512xf32, #tpu.memory_space<vmem>>, vector<1x512xf32>
    tpu.vector_store %arg8[%c0_103, %c0_104], %151 {strides = array<i32>} : memref<2x512xf32, #tpu.memory_space<vmem>>, vector<1x512xf32>,
    %cst_105 = arith.constant 0.000000e+00 : f32
    %153 = vector.broadcast %cst_105 : f32 to vector<1x512xf32>
    %cst_106 = arith.constant 0.000000e+00 : f32
    %154 = vector.broadcast %cst_106 : f32 to vector<1x512xf32>
    %cst_107 = arith.constant 0.000000e+00 : f32
    %155 = vector.broadcast %cst_107 : f32 to vector<1x512xf32>
    %cst_108 = arith.constant 0.000000e+00 : f32
    %156 = vector.broadcast %cst_108 : f32 to vector<1x512xf32>
    %157 = vector.extract_strided_slice %34 {offsets = [0, 0], sizes = [1, 20], strides = [1, 1]} : vector<20x20xf32> to vector<1x20xf32>
    %c0_109 = arith.constant 0 : index
    %c0_110 = arith.constant 0 : index
    %c0_111 = arith.constant 0 : index
    %158 = vector.load %arg9[%c0_109, %c0_110, %c0_111] : memref<20x20x512xf32, #tpu.memory_space<vmem>>, vector<1x20x512xf32>
    %159 = vector.shape_cast %158 : vector<1x20x512xf32> to vector<20x512xf32>
    %cst_112 = arith.constant dense<0.000000e+00> : vector<1x512xf32>
    %160 = tpu.matmul %157, %159, %cst_112 {dimension_numbers = #tpu.dot_dimension_numbers<[1], [0], [0], [1], [0, 0, 1, 1], [], []>} : vector<1x20xf32>, vector<20x512xf32>, vector<1x512xf32> -> vector<1x512xf32>
    %161 = arith.addf %153, %160 : vector<1x512xf32>
    %162 = vector.extract_strided_slice %34 {offsets = [1, 0], sizes = [1, 20], strides = [1, 1]} : vector<20x20xf32> to vector<1x20xf32>
    %c1_113 = arith.constant 1 : index
    %c0_114 = arith.constant 0 : index
    %c0_115 = arith.constant 0 : index
    %163 = vector.load %arg9[%c1_113, %c0_114, %c0_115] : memref<20x20x512xf32, #tpu.memory_space<vmem>>, vector<1x20x512xf32>
    %164 = vector.shape_cast %163 : vector<1x20x512xf32> to vector<20x512xf32>
    %cst_116 = arith.constant dense<0.000000e+00> : vector<1x512xf32>
    %165 = tpu.matmul %162, %164, %cst_116 {dimension_numbers = #tpu.dot_dimension_numbers<[1], [0], [0], [1], [0, 0, 1, 1], [], []>} : vector<1x20xf32>, vector<20x512xf32>, vector<1x512xf32> -> vector<1x512xf32>
    %166 = arith.addf %154, %165 : vector<1x512xf32>
    %167 = vector.extract_strided_slice %34 {offsets = [2, 0], sizes = [1, 20], strides = [1, 1]} : vector<20x20xf32> to vector<1x20xf32>
    %c2_117 = arith.constant 2 : index
    %c0_118 = arith.constant 0 : index
    %c0_119 = arith.constant 0 : index
    %168 = vector.load %arg9[%c2_117, %c0_118, %c0_119] : memref<20x20x512xf32, #tpu.memory_space<vmem>>, vector<1x20x512xf32>
    %169 = vector.shape_cast %168 : vector<1x20x512xf32> to vector<20x512xf32>
    %cst_120 = arith.constant dense<0.000000e+00> : vector<1x512xf32>
    %170 = tpu.matmul %167, %169, %cst_120 {dimension_numbers = #tpu.dot_dimension_numbers<[1], [0], [0], [1], [0, 0, 1, 1], [], []>} : vector<1x20xf32>, vector<20x512xf32>, vector<1x512xf32> -> vector<1x512xf32>
    %171 = arith.addf %155, %170 : vector<1x512xf32>
    %172 = vector.extract_strided_slice %34 {offsets = [3, 0], sizes = [1, 20], strides = [1, 1]} : vector<20x20xf32> to vector<1x20xf32>
    %c3_121 = arith.constant 3 : index
    %c0_122 = arith.constant 0 : index
    %c0_123 = arith.constant 0 : index
    %173 = vector.load %arg9[%c3_121, %c0_122, %c0_123] : memref<20x20x512xf32, #tpu.memory_space<vmem>>, vector<1x20x512xf32>
    %174 = vector.shape_cast %173 : vector<1x20x512xf32> to vector<20x512xf32>
    %cst_124 = arith.constant dense<0.000000e+00> : vector<1x512xf32>
    %175 = tpu.matmul %172, %174, %cst_124 {dimension_numbers = #tpu.dot_dimension_numbers<[1], [0], [0], [1], [0, 0, 1, 1], [], []>} : vector<1x20xf32>, vector<20x512xf32>, vector<1x512xf32> -> vector<1x512xf32>
    %176 = arith.addf %156, %175 : vector<1x512xf32>
    %177 = vector.extract_strided_slice %34 {offsets = [4, 0], sizes = [1, 20], strides = [1, 1]} : vector<20x20xf32> to vector<1x20xf32>
    %c4_125 = arith.constant 4 : index
    %c0_126 = arith.constant 0 : index
    %c0_127 = arith.constant 0 : index
    %178 = vector.load %arg9[%c4_125, %c0_126, %c0_127] : memref<20x20x512xf32, #tpu.memory_space<vmem>>, vector<1x20x512xf32>
    %179 = vector.shape_cast %178 : vector<1x20x512xf32> to vector<20x512xf32>
    %cst_128 = arith.constant dense<0.000000e+00> : vector<1x512xf32>
    %180 = tpu.matmul %177, %179, %cst_128 {dimension_numbers = #tpu.dot_dimension_numbers<[1], [0], [0], [1], [0, 0, 1, 1], [], []>} : vector<1x20xf32>, vector<20x512xf32>, vector<1x512xf32> -> vector<1x512xf32>
    %181 = arith.addf %161, %180 : vector<1x512xf32>
    %182 = vector.extract_strided_slice %34 {offsets = [5, 0], sizes = [1, 20], strides = [1, 1]} : vector<20x20xf32> to vector<1x20xf32>
    %c5_129 = arith.constant 5 : index
    %c0_130 = arith.constant 0 : index
    %c0_131 = arith.constant 0 : index
    %183 = vector.load %arg9[%c5_129, %c0_130, %c0_131] : memref<20x20x512xf32, #tpu.memory_space<vmem>>, vector<1x20x512xf32>
    %184 = vector.shape_cast %183 : vector<1x20x512xf32> to vector<20x512xf32>
    %cst_132 = arith.constant dense<0.000000e+00> : vector<1x512xf32>
    %185 = tpu.matmul %182, %184, %cst_132 {dimension_numbers = #tpu.dot_dimension_numbers<[1], [0], [0], [1], [0, 0, 1, 1], [], []>} : vector<1x20xf32>, vector<20x512xf32>, vector<1x512xf32> -> vector<1x512xf32>
    %186 = arith.addf %166, %185 : vector<1x512xf32>
    %187 = vector.extract_strided_slice %34 {offsets = [6, 0], sizes = [1, 20], strides = [1, 1]} : vector<20x20xf32> to vector<1x20xf32>
    %c6_133 = arith.constant 6 : index
    %c0_134 = arith.constant 0 : index
    %c0_135 = arith.constant 0 : index
    %188 = vector.load %arg9[%c6_133, %c0_134, %c0_135] : memref<20x20x512xf32, #tpu.memory_space<vmem>>, vector<1x20x512xf32>
    %189 = vector.shape_cast %188 : vector<1x20x512xf32> to vector<20x512xf32>
    %cst_136 = arith.constant dense<0.000000e+00> : vector<1x512xf32>
    %190 = tpu.matmul %187, %189, %cst_136 {dimension_numbers = #tpu.dot_dimension_numbers<[1], [0], [0], [1], [0, 0, 1, 1], [], []>} : vector<1x20xf32>, vector<20x512xf32>, vector<1x512xf32> -> vector<1x512xf32>
    %191 = arith.addf %171, %190 : vector<1x512xf32>
    %192 = vector.extract_strided_slice %34 {offsets = [7, 0], sizes = [1, 20], strides = [1, 1]} : vector<20x20xf32> to vector<1x20xf32>
    %c7_137 = arith.constant 7 : index
    %c0_138 = arith.constant 0 : index
    %c0_139 = arith.constant 0 : index
    %193 = vector.load %arg9[%c7_137, %c0_138, %c0_139] : memref<20x20x512xf32, #tpu.memory_space<vmem>>, vector<1x20x512xf32>
    %194 = vector.shape_cast %193 : vector<1x20x512xf32> to vector<20x512xf32>
    %cst_140 = arith.constant dense<0.000000e+00> : vector<1x512xf32>
    %195 = tpu.matmul %192, %194, %cst_140 {dimension_numbers = #tpu.dot_dimension_numbers<[1], [0], [0], [1], [0, 0, 1, 1], [], []>} : vector<1x20xf32>, vector<20x512xf32>, vector<1x512xf32> -> vector<1x512xf32>
    %196 = arith.addf %176, %195 : vector<1x512xf32>
    %197 = vector.extract_strided_slice %34 {offsets = [8, 0], sizes = [1, 20], strides = [1, 1]} : vector<20x20xf32> to vector<1x20xf32>
    %c8_141 = arith.constant 8 : index
    %c0_142 = arith.constant 0 : index
    %c0_143 = arith.constant 0 : index
    %198 = vector.load %arg9[%c8_141, %c0_142, %c0_143] : memref<20x20x512xf32, #tpu.memory_space<vmem>>, vector<1x20x512xf32>
    %199 = vector.shape_cast %198 : vector<1x20x512xf32> to vector<20x512xf32>
    %cst_144 = arith.constant dense<0.000000e+00> : vector<1x512xf32>
    %200 = tpu.matmul %197, %199, %cst_144 {dimension_numbers = #tpu.dot_dimension_numbers<[1], [0], [0], [1], [0, 0, 1, 1], [], []>} : vector<1x20xf32>, vector<20x512xf32>, vector<1x512xf32> -> vector<1x512xf32>
    %201 = arith.addf %181, %200 : vector<1x512xf32>
    %202 = vector.extract_strided_slice %34 {offsets = [9, 0], sizes = [1, 20], strides = [1, 1]} : vector<20x20xf32> to vector<1x20xf32>
    %c9_145 = arith.constant 9 : index
    %c0_146 = arith.constant 0 : index
    %c0_147 = arith.constant 0 : index
    %203 = vector.load %arg9[%c9_145, %c0_146, %c0_147] : memref<20x20x512xf32, #tpu.memory_space<vmem>>, vector<1x20x512xf32>
    %204 = vector.shape_cast %203 : vector<1x20x512xf32> to vector<20x512xf32>
    %cst_148 = arith.constant dense<0.000000e+00> : vector<1x512xf32>
    %205 = tpu.matmul %202, %204, %cst_148 {dimension_numbers = #tpu.dot_dimension_numbers<[1], [0], [0], [1], [0, 0, 1, 1], [], []>} : vector<1x20xf32>, vector<20x512xf32>, vector<1x512xf32> -> vector<1x512xf32>
    %206 = arith.addf %186, %205 : vector<1x512xf32>
    %207 = vector.extract_strided_slice %34 {offsets = [10, 0], sizes = [1, 20], strides = [1, 1]} : vector<20x20xf32> to vector<1x20xf32>
    %c10_149 = arith.constant 10 : index
    %c0_150 = arith.constant 0 : index
    %c0_151 = arith.constant 0 : index
    %208 = vector.load %arg9[%c10_149, %c0_150, %c0_151] : memref<20x20x512xf32, #tpu.memory_space<vmem>>, vector<1x20x512xf32>
    %209 = vector.shape_cast %208 : vector<1x20x512xf32> to vector<20x512xf32>
    %cst_152 = arith.constant dense<0.000000e+00> : vector<1x512xf32>
    %210 = tpu.matmul %207, %209, %cst_152 {dimension_numbers = #tpu.dot_dimension_numbers<[1], [0], [0], [1], [0, 0, 1, 1], [], []>} : vector<1x20xf32>, vector<20x512xf32>, vector<1x512xf32> -> vector<1x512xf32>
    %211 = arith.addf %191, %210 : vector<1x512xf32>
    %212 = vector.extract_strided_slice %34 {offsets = [11, 0], sizes = [1, 20], strides = [1, 1]} : vector<20x20xf32> to vector<1x20xf32>
    %c11_153 = arith.constant 11 : index
    %c0_154 = arith.constant 0 : index
    %c0_155 = arith.constant 0 : index
    %213 = vector.load %arg9[%c11_153, %c0_154, %c0_155] : memref<20x20x512xf32, #tpu.memory_space<vmem>>, vector<1x20x512xf32>
    %214 = vector.shape_cast %213 : vector<1x20x512xf32> to vector<20x512xf32>
    %cst_156 = arith.constant dense<0.000000e+00> : vector<1x512xf32>
    %215 = tpu.matmul %212, %214, %cst_156 {dimension_numbers = #tpu.dot_dimension_numbers<[1], [0], [0], [1], [0, 0, 1, 1], [], []>} : vector<1x20xf32>, vector<20x512xf32>, vector<1x512xf32> -> vector<1x512xf32>
    %216 = arith.addf %196, %215 : vector<1x512xf32>
    %217 = vector.extract_strided_slice %34 {offsets = [12, 0], sizes = [1, 20], strides = [1, 1]} : vector<20x20xf32> to vector<1x20xf32>
    %c12_157 = arith.constant 12 : index
    %c0_158 = arith.constant 0 : index
    %c0_159 = arith.constant 0 : index
    %218 = vector.load %arg9[%c12_157, %c0_158, %c0_159] : memref<20x20x512xf32, #tpu.memory_space<vmem>>, vector<1x20x512xf32>
    %219 = vector.shape_cast %218 : vector<1x20x512xf32> to vector<20x512xf32>
    %cst_160 = arith.constant dense<0.000000e+00> : vector<1x512xf32>
    %220 = tpu.matmul %217, %219, %cst_160 {dimension_numbers = #tpu.dot_dimension_numbers<[1], [0], [0], [1], [0, 0, 1, 1], [], []>} : vector<1x20xf32>, vector<20x512xf32>, vector<1x512xf32> -> vector<1x512xf32>
    %221 = arith.addf %201, %220 : vector<1x512xf32>
    %222 = vector.extract_strided_slice %34 {offsets = [13, 0], sizes = [1, 20], strides = [1, 1]} : vector<20x20xf32> to vector<1x20xf32>
    %c13_161 = arith.constant 13 : index
    %c0_162 = arith.constant 0 : index
    %c0_163 = arith.constant 0 : index
    %223 = vector.load %arg9[%c13_161, %c0_162, %c0_163] : memref<20x20x512xf32, #tpu.memory_space<vmem>>, vector<1x20x512xf32>
    %224 = vector.shape_cast %223 : vector<1x20x512xf32> to vector<20x512xf32>
    %cst_164 = arith.constant dense<0.000000e+00> : vector<1x512xf32>
    %225 = tpu.matmul %222, %224, %cst_164 {dimension_numbers = #tpu.dot_dimension_numbers<[1], [0], [0], [1], [0, 0, 1, 1], [], []>} : vector<1x20xf32>, vector<20x512xf32>, vector<1x512xf32> -> vector<1x512xf32>
    %226 = arith.addf %206, %225 : vector<1x512xf32>
    %227 = vector.extract_strided_slice %34 {offsets = [14, 0], sizes = [1, 20], strides = [1, 1]} : vector<20x20xf32> to vector<1x20xf32>
    %c14_165 = arith.constant 14 : index
    %c0_166 = arith.constant 0 : index
    %c0_167 = arith.constant 0 : index
    %228 = vector.load %arg9[%c14_165, %c0_166, %c0_167] : memref<20x20x512xf32, #tpu.memory_space<vmem>>, vector<1x20x512xf32>
    %229 = vector.shape_cast %228 : vector<1x20x512xf32> to vector<20x512xf32>
    %cst_168 = arith.constant dense<0.000000e+00> : vector<1x512xf32>
    %230 = tpu.matmul %227, %229, %cst_168 {dimension_numbers = #tpu.dot_dimension_numbers<[1], [0], [0], [1], [0, 0, 1, 1], [], []>} : vector<1x20xf32>, vector<20x512xf32>, vector<1x512xf32> -> vector<1x512xf32>
    %231 = arith.addf %211, %230 : vector<1x512xf32>
    %232 = vector.extract_strided_slice %34 {offsets = [15, 0], sizes = [1, 20], strides = [1, 1]} : vector<20x20xf32> to vector<1x20xf32>
    %c15_169 = arith.constant 15 : index
    %c0_170 = arith.constant 0 : index
    %c0_171 = arith.constant 0 : index
    %233 = vector.load %arg9[%c15_169, %c0_170, %c0_171] : memref<20x20x512xf32, #tpu.memory_space<vmem>>, vector<1x20x512xf32>
    %234 = vector.shape_cast %233 : vector<1x20x512xf32> to vector<20x512xf32>
    %cst_172 = arith.constant dense<0.000000e+00> : vector<1x512xf32>
    %235 = tpu.matmul %232, %234, %cst_172 {dimension_numbers = #tpu.dot_dimension_numbers<[1], [0], [0], [1], [0, 0, 1, 1], [], []>} : vector<1x20xf32>, vector<20x512xf32>, vector<1x512xf32> -> vector<1x512xf32>
    %236 = arith.addf %216, %235 : vector<1x512xf32>
    %237 = vector.extract_strided_slice %34 {offsets = [16, 0], sizes = [1, 20], strides = [1, 1]} : vector<20x20xf32> to vector<1x20xf32>
    %c16_173 = arith.constant 16 : index
    %c0_174 = arith.constant 0 : index
    %c0_175 = arith.constant 0 : index
    %238 = vector.load %arg9[%c16_173, %c0_174, %c0_175] : memref<20x20x512xf32, #tpu.memory_space<vmem>>, vector<1x20x512xf32>
    %239 = vector.shape_cast %238 : vector<1x20x512xf32> to vector<20x512xf32>
    %cst_176 = arith.constant dense<0.000000e+00> : vector<1x512xf32>
    %240 = tpu.matmul %237, %239, %cst_176 {dimension_numbers = #tpu.dot_dimension_numbers<[1], [0], [0], [1], [0, 0, 1, 1], [], []>} : vector<1x20xf32>, vector<20x512xf32>, vector<1x512xf32> -> vector<1x512xf32>
    %241 = arith.addf %221, %240 : vector<1x512xf32>
    %242 = vector.extract_strided_slice %34 {offsets = [17, 0], sizes = [1, 20], strides = [1, 1]} : vector<20x20xf32> to vector<1x20xf32>
    %c17_177 = arith.constant 17 : index
    %c0_178 = arith.constant 0 : index
    %c0_179 = arith.constant 0 : index
    %243 = vector.load %arg9[%c17_177, %c0_178, %c0_179] : memref<20x20x512xf32, #tpu.memory_space<vmem>>, vector<1x20x512xf32>
    %244 = vector.shape_cast %243 : vector<1x20x512xf32> to vector<20x512xf32>
    %cst_180 = arith.constant dense<0.000000e+00> : vector<1x512xf32>
    %245 = tpu.matmul %242, %244, %cst_180 {dimension_numbers = #tpu.dot_dimension_numbers<[1], [0], [0], [1], [0, 0, 1, 1], [], []>} : vector<1x20xf32>, vector<20x512xf32>, vector<1x512xf32> -> vector<1x512xf32>
    %246 = arith.addf %226, %245 : vector<1x512xf32>
    %247 = vector.extract_strided_slice %34 {offsets = [18, 0], sizes = [1, 20], strides = [1, 1]} : vector<20x20xf32> to vector<1x20xf32>
    %c18_181 = arith.constant 18 : index
    %c0_182 = arith.constant 0 : index
    %c0_183 = arith.constant 0 : index
    %248 = vector.load %arg9[%c18_181, %c0_182, %c0_183] : memref<20x20x512xf32, #tpu.memory_space<vmem>>, vector<1x20x512xf32>
    %249 = vector.shape_cast %248 : vector<1x20x512xf32> to vector<20x512xf32>
    %cst_184 = arith.constant dense<0.000000e+00> : vector<1x512xf32>
    %250 = tpu.matmul %247, %249, %cst_184 {dimension_numbers = #tpu.dot_dimension_numbers<[1], [0], [0], [1], [0, 0, 1, 1], [], []>} : vector<1x20xf32>, vector<20x512xf32>, vector<1x512xf32> -> vector<1x512xf32>
    %251 = arith.addf %231, %250 : vector<1x512xf32>
    %252 = vector.extract_strided_slice %34 {offsets = [19, 0], sizes = [1, 20], strides = [1, 1]} : vector<20x20xf32> to vector<1x20xf32>
    %c19_185 = arith.constant 19 : index
    %c0_186 = arith.constant 0 : index
    %c0_187 = arith.constant 0 : index
    %253 = vector.load %arg9[%c19_185, %c0_186, %c0_187] : memref<20x20x512xf32, #tpu.memory_space<vmem>>, vector<1x20x512xf32>
    %254 = vector.shape_cast %253 : vector<1x20x512xf32> to vector<20x512xf32>
    %cst_188 = arith.constant dense<0.000000e+00> : vector<1x512xf32>
    %255 = tpu.matmul %252, %254, %cst_188 {dimension_numbers = #tpu.dot_dimension_numbers<[1], [0], [0], [1], [0, 0, 1, 1], [], []>} : vector<1x20xf32>, vector<20x512xf32>, vector<1x512xf32> -> vector<1x512xf32>
    %256 = arith.addf %236, %255 : vector<1x512xf32>
    %257 = arith.addf %35, %241 : vector<1x512xf32>
    %258 = arith.addf %257, %246 : vector<1x512xf32>
    %259 = arith.addf %258, %251 : vector<1x512xf32>
    %260 = arith.addf %259, %256 : vector<1x512xf32>
    %261 = arith.mulf %260, %260 : vector<1x512xf32>
    %cst_189 = arith.constant dense<0.000000e+00> : vector<1xf32>
    %262 = vector.multi_reduction <add>, %261, %cst_189 [1] : vector<1x512xf32> to vector<1xf32>
    %263 = vector.shape_cast %262 : vector<1xf32> to vector<1x1xf32>
    %264 = math.sqrt %263 : vector<1x1xf32>
    %cst_190 = arith.constant 9.99999993E-9 : f32
    %265 = vector.broadcast %cst_190 : f32 to vector<1x1xf32>
    %266 = arith.addf %264, %265 : vector<1x1xf32>
    %267 = vector.broadcast %266 : vector<1x1xf32> to vector<1x512xf32>
    %268 = arith.divf %260, %267 : vector<1x512xf32>
    %c1_191 = arith.constant 1 : index
    %c0_192 = arith.constant 0 : index
    %269 = vector.load %arg8[%c1_191, %c0_192] : memref<2x512xf32, #tpu.memory_space<vmem>>, vector<1x512xf32>
    tpu.vector_store %arg8[%c1_191, %c0_192], %268 {strides = array<i32>} : memref<2x512xf32, #tpu.memory_space<vmem>>, vector<1x512xf32>,
    return
  }
  func.func @transform_0(%arg0: i32) -> (i32, i32, i32) {
    %c0_i32 = arith.constant 0 : i32
    %c0_i32_0 = arith.constant 0 : i32
    %c0_i32_1 = arith.constant 0 : i32
    %c0_i32_2 = arith.constant 0 : i32
    return %c0_i32, %c0_i32_0, %c0_i32_1 : i32, i32, i32
  }
  func.func @transform_1(%arg0: i32) -> (i32, i32, i32) {
    %c0_i32 = arith.constant 0 : i32
    %c0_i32_0 = arith.constant 0 : i32
    %c0_i32_1 = arith.constant 0 : i32
    %c0_i32_2 = arith.constant 0 : i32
    return %c0_i32, %c0_i32_0, %c0_i32_1 : i32, i32, i32
  }
  func.func @transform_2(%arg0: i32) -> (i32, i32) {
    %c0_i32 = arith.constant 0 : i32
    %c0_i32_0 = arith.constant 0 : i32
    %c0_i32_1 = arith.constant 0 : i32
    return %c0_i32, %c0_i32_0 : i32, i32
  }
  func.func @transform_3(%arg0: i32) -> (i32, i32) {
    %c0_i32 = arith.constant 0 : i32
    %c0_i32_0 = arith.constant 0 : i32
    %c0_i32_1 = arith.constant 0 : i32
    return %c0_i32, %c0_i32_0 : i32, i32
  }
  func.func @transform_4(%arg0: i32) -> (i32, i32) {
    %c0_i32 = arith.constant 0 : i32
    %c0_i32_0 = arith.constant 0 : i32
    %c0_i32_1 = arith.constant 0 : i32
    return %c0_i32, %c0_i32_0 : i32, i32
  }
  func.func @transform_6(%arg0: i32) -> (i32, i32) {
    %c0_i32 = arith.constant 0 : i32
    %c0_i32_0 = arith.constant 0 : i32
    %c0_i32_1 = arith.constant 0 : i32
    return %c0_i32, %c0_i32_0 : i32, i32
  }
  func.func @transform_7(%arg0: i32) -> (i32, i32) {
    %c0_i32 = arith.constant 0 : i32
    %c0_i32_0 = arith.constant 0 : i32
    %c0_i32_1 = arith.constant 0 : i32
    return %c0_i32, %c0_i32_0 : i32, i32
  }
}

</mosaic_0001>

<llo_original>
// kernel: tpu_custom_call.1
$region0: #{tpu_custom_call.1}
  #allocation0 [shape = 'u32[]', space=smem, size = 0x4, offset = 0x4, fixed_abs, tag = 'smem constant byte address 0x4 - core index']
  #allocation1 [shape = 'u32[72,128]{1,0:T(1,128)}', space=vmem, size = 0x9000, scoped, tag = 'internal scratch']
  #allocation2 [shape = 'f32[20,20,512]{2,1,0:T(8,128)}', space=vmem, size = 0xf0000, scoped, tag = 'scratch operand']
  #allocation3 [shape = 's32[1]{0}', space=sflag, size = 0x4, scoped, tag = 'scratch operand']
  #allocation6 [shape = 's32[]', space=sflag, size = 0x4, offset = 0, fixed_abs, tag = 'sflag constant byte address 0x0 - dummy sync flag']
  #allocation7 [shape = 's32[]', space=sflag, size = 0x4, offset = 0, fixed_abs, tag = 'sflag constant byte address 0x0 - dummy sync flag']
  #allocation8 [shape = 'u32[]', space=smem, size = 0x4, offset = 0x44, fixed_abs, tag = 'smem constant byte address 0x44 - assertion arg 0']
  #allocation9 [shape = 'u32[]', space=smem, size = 0x4, offset = 0x48, fixed_abs, tag = 'smem constant byte address 0x48 - assertion arg 1']
  %s0 = inlined_call_operand.vmem [shape: f32[2,20,20], index: 0, kind: input, shape index: {}]
  %s1 = inlined_call_operand.vmem [shape: f32[2,20,20], index: 1, kind: input, shape index: {}]
  %s2 = inlined_call_operand.vmem [shape: f32[20,20], index: 2, kind: input, shape index: {}]
  %s3 = inlined_call_operand.vmem [shape: f32[20,10], index: 3, kind: input, shape index: {}]
  %s4 = inlined_call_operand.vmem [shape: f32[10,20], index: 4, kind: input, shape index: {}]
  %s5 = inlined_call_operand.hbm [shape: f32[20,20,512], index: 5, kind: input, shape index: {}]
  %s6 = inlined_call_operand.vmem [shape: f32[1,512], index: 6, kind: input, shape index: {}]
  %s7 = inlined_call_operand.hbm [shape: f32[2,512], index: 7, kind: output, shape index: {}]
  %s8 = sld [smem:[#allocation0]]
  $region38: #{tpu_custom_call.1} parent=0
    _
  %s10 = ssub.s32 1, %s8
  %s11 = scalar_select 0, %s10, %s8
  $region1: #{tpu_custom_call.1} parent=0
    #allocation4 [shape = 'u8[4096]{0}', space=vmem, size = 0x1000, scoped, tag = 'output window, operand 0, single buffered']
    #allocation5 [shape = 's32[1]{0}', space=sflag, size = 0x4, scoped, tag = 'scoped memory for tpu_custom_call.1']
    %12 = vsyncpa [#allocation5], 0
    // Predicated region
    $region2: #{tpu_custom_call.1} parent=1 // pred_check
      _
    $region3: #{tpu_custom_call.1} parent=1 // pred_check_branch
      %14 = sbr.rel (0) target = $region5
    $region4: #{tpu_custom_call.1} parent=1 // pred_region
      _
    $region5: #{tpu_custom_call.1} parent=1 // pred_fallthru
      _
    // Predicated region
    $region6: #{tpu_custom_call.1} parent=1 // pred_check
      _
    $region7: #{tpu_custom_call.1} parent=1 // pred_check_branch
      %16 = sbr.rel (0) target = $region9
    $region8: #{tpu_custom_call.1} parent=1 // pred_region
      _
    $region9: #{tpu_custom_call.1} parent=1 // pred_fallthru
      _
    // Predicated region
    $region10: #{tpu_custom_call.1} parent=1 // pred_check
      _
    $region11: #{tpu_custom_call.1} parent=1 // pred_check_branch
      %18 = sbr.rel (0) target = $region13
    $region12: #{tpu_custom_call.1} parent=1 // pred_region
      _
    $region13: #{tpu_custom_call.1} parent=1 // pred_fallthru
      _
    // Predicated region
    $region14: #{tpu_custom_call.1} parent=1 // pred_check
      _
    $region15: #{tpu_custom_call.1} parent=1 // pred_check_branch
      %20 = sbr.rel (0) target = $region17
    $region16: #{tpu_custom_call.1} parent=1 // pred_region
      _
    $region17: #{tpu_custom_call.1} parent=1 // pred_fallthru
      _
    // Predicated region
    $region18: #{tpu_custom_call.1} parent=1 // pred_check
      _
    $region19: #{tpu_custom_call.1} parent=1 // pred_check_branch
      %22 = sbr.rel (0) target = $region21
    $region20: #{tpu_custom_call.1} parent=1 // pred_region
      _
    $region21: #{tpu_custom_call.1} parent=1 // pred_fallthru
      _
    // Predicated region
    $region22: #{tpu_custom_call.1} parent=1 // pred_check
      _
    $region23: #{tpu_custom_call.1} parent=1 // pred_check_branch
      %24 = sbr.rel (0) target = $region25
    $region24: #{tpu_custom_call.1} parent=1 // pred_region
      _
    $region25: #{tpu_custom_call.1} parent=1 // pred_fallthru
      _
    // Predicated region
    $region26: #{tpu_custom_call.1} parent=1 // pred_check
      _
    $region27: #{tpu_custom_call.1} parent=1 // pred_check_branch
      %26 = sbr.rel target = $region29
    $region28: #{tpu_custom_call.1} parent=1 // pred_region
      %27 = sst [smem:[#allocation8]] [#allocation7]
      %28 = sst [smem:[#allocation9]] [#allocation6]
    $region29: #{tpu_custom_call.1} parent=1 // pred_fallthru
      _
    %30 = shalt.err (0)
    %s32 = sshll.u32 %s5, 4
    %s33 = int_to_ptr.hbm [resolvable:$true] %s32
    %s34 = sshll.u32 [#allocation2], 4
    %s35 = int_to_ptr.vmem [resolvable:$true] %s34
    %37 = dma.hbm_to_vmem [thread:$0]  %s33, 30720, %s35, [#allocation3]
    %v38 = vld [vmem:[%s2] sm:$0xff]
    %v39 = vld [vmem:[%s2 + $0x8] sm:$0xff]
    %v40 = vld [vmem:[%s2 + $0x10] sm:$0xf]
    %v41 = vld [vmem:[%s3] sm:$0xff]
    %v42 = vld [vmem:[%s3 + $0x8] sm:$0xff]
    %v43 = vld [vmem:[%s3 + $0x10] sm:$0xf]
    %v44 = vld [vmem:[%s4] sm:$0xff]
    %v45 = vld [vmem:[%s4 + $0x8] sm:$0x3]
    %v46 = vld [vmem:[%s0] sm:$0xff]
    %v47 = vld [vmem:[%s0 + $0x8] sm:$0xff]
    %v48 = vld [vmem:[%s0 + $0x10] sm:$0xf]
    %v49 = vld [vmem:[%s1] sm:$0xff]
    %v50 = vld [vmem:[%s1 + $0x8] sm:$0xff]
    %v51 = vld [vmem:[%s1 + $0x10] sm:$0xf]
    %vm52 = vcmask 162816
    %v54 = vsel %vm52, %v46, 0
    %v57 = vsel %vm52, %v47, 0
    %v60 = vsel %vm52, %v48, 0
    %vm62 = vcmask 1043456
    %v64 = vsel %vm62, %v51, 0
    %66 = vmatpush.msra.mxu0 0.0
    %67 = vmatpush.msra.mxu0 0.0
    %68 = vmatpush.msra.mxu0 0.0
    %69 = vmatpush.msra.mxu0 0.0
    %70 = vmatpush.msra.mxu0 0.0
    %71 = vmatpush.msra.mxu0 0.0
    %72 = vmatpush.msra.mxu0 0.0
    %73 = vmatpush.msra.mxu0 0.0
    %74 = vmatpush.msra.mxu0 0.0
    %75 = vmatpush.msra.mxu0 0.0
    %76 = vmatpush.msra.mxu0 0.0
    %77 = vmatpush.msra.mxu0 0.0
    %78 = vmatpush.msra.mxu0 0.0
    %79 = vmatpush.msra.mxu0 %v64
    %80 = vmatpush.msra.mxu0 %v50
    %81 = vmatpush.msra.mxu0 %v49
    %82 = vmatmul.f32.gmra.mxu0 %v54
    %v83 = vpop.f32.mrf.mxu0
    %v84 = vadd.f32 0.0, %v83
    %85 = vmatmul.f32.gmra.mxu0 %v57
    %v86 = vpop.f32.mrf.mxu0
    %v87 = vadd.f32 0.0, %v86
    %88 = vmatmul.f32.gmra.mxu0 %v60
    %v89 = vpop.f32.mrf.mxu0
    %v90 = vadd.f32 0.0, %v89
    %91 = vdwg.mxu0
    %v93 = vsel %vm52, %v84, 0
    %v96 = vsel %vm52, %v87, 0
    %v99 = vsel %vm52, %v90, 0
    %v102 = vsel %vm62, %v40, 0
    %104 = vmatpush.msra.mxu0 0.0
    %105 = vmatpush.msra.mxu0 0.0
    %106 = vmatpush.msra.mxu0 0.0
    %107 = vmatpush.msra.mxu0 0.0
    %108 = vmatpush.msra.mxu0 0.0
    %109 = vmatpush.msra.mxu0 0.0
    %110 = vmatpush.msra.mxu0 0.0
    %111 = vmatpush.msra.mxu0 0.0
    %112 = vmatpush.msra.mxu0 0.0
    %113 = vmatpush.msra.mxu0 0.0
    %114 = vmatpush.msra.mxu0 0.0
    %115 = vmatpush.msra.mxu0 0.0
    %116 = vmatpush.msra.mxu0 0.0
    %117 = vmatpush.msra.mxu0 %v102
    %118 = vmatpush.msra.mxu0 %v39
    %119 = vmatpush.msra.mxu0 %v38
    %120 = vmatmul.f32.gmra.mxu0 %v93
    %v121 = vpop.f32.mrf.mxu0
    %v122 = vadd.f32 0.0, %v121
    %123 = vmatmul.f32.gmra.mxu0 %v96
    %v124 = vpop.f32.mrf.mxu0
    %v125 = vadd.f32 0.0, %v124
    %126 = vmatmul.f32.gmra.mxu0 %v99
    %v127 = vpop.f32.mrf.mxu0
    %v128 = vadd.f32 0.0, %v127
    %129 = vdwg.mxu0
    %v130 = vmax.f32 %v122, 0.0
    %v131 = vmax.f32 %v125, 0.0
    %v132 = vmax.f32 %v128, 0.0
    %v134 = vsel %vm62, %v132, 0
    %136 = vmatpush.msra.mxu0 0.0
    %137 = vmatpush.msra.mxu0 0.0
    %138 = vmatpush.msra.mxu0 0.0
    %139 = vmatpush.msra.mxu0 0.0
    %140 = vmatpush.msra.mxu0 0.0
    %141 = vmatpush.msra.mxu0 0.0
    %142 = vmatpush.msra.mxu0 0.0
    %143 = vmatpush.msra.mxu0 0.0
    %144 = vmatpush.msra.mxu0 0.0
    %145 = vmatpush.msra.mxu0 0.0
    %146 = vmatpush.msra.mxu0 0.0
    %147 = vmatpush.msra.mxu0 0.0
    %148 = vmatpush.msra.mxu0 0.0
    %149 = vmatpush.msra.mxu0 %v134
    %150 = vmatpush.msra.mxu0 %v131
    %151 = vmatpush.msra.mxu0 %v130
    %152 = vmatmul.f32.gmra.mxu0 %v54
    %v153 = vpop.f32.mrf.mxu0
    %v154 = vadd.f32 0.0, %v153
    %155 = vmatmul.f32.gmra.mxu0 %v57
    %v156 = vpop.f32.mrf.mxu0
    %v157 = vadd.f32 0.0, %v156
    %158 = vmatmul.f32.gmra.mxu0 %v60
    %v159 = vpop.f32.mrf.mxu0
    %v160 = vadd.f32 0.0, %v159
    %161 = vdwg.mxu0
    %v163 = vsel %vm52, %v154, 0
    %v166 = vsel %vm52, %v157, 0
    %v169 = vsel %vm52, %v160, 0
    %v172 = vsel %vm62, %v43, 0
    %174 = vmatpush.msra.mxu0 0.0
    %175 = vmatpush.msra.mxu0 0.0
    %176 = vmatpush.msra.mxu0 0.0
    %177 = vmatpush.msra.mxu0 0.0
    %178 = vmatpush.msra.mxu0 0.0
    %179 = vmatpush.msra.mxu0 0.0
    %180 = vmatpush.msra.mxu0 0.0
    %181 = vmatpush.msra.mxu0 0.0
    %182 = vmatpush.msra.mxu0 0.0
    %183 = vmatpush.msra.mxu0 0.0
    %184 = vmatpush.msra.mxu0 0.0
    %185 = vmatpush.msra.mxu0 0.0
    %186 = vmatpush.msra.mxu0 0.0
    %187 = vmatpush.msra.mxu0 %v172
    %188 = vmatpush.msra.mxu0 %v42
    %189 = vmatpush.msra.mxu0 %v41
    %190 = vmatmul.f32.gmra.mxu0 %v163
    %v191 = vpop.f32.mrf.mxu0
    %v192 = vadd.f32 0.0, %v191
    %193 = vmatmul.f32.gmra.mxu0 %v166
    %v194 = vpop.f32.mrf.mxu0
    %v195 = vadd.f32 0.0, %v194
    %196 = vmatmul.f32.gmra.mxu0 %v169
    %v197 = vpop.f32.mrf.mxu0
    %v198 = vadd.f32 0.0, %v197
    %199 = vdwg.mxu0
    %v200 = vmax.f32 %v192, 0.0
    %v201 = vmax.f32 %v195, 0.0
    %v202 = vmax.f32 %v198, 0.0
    %v204 = vsel %vm62, %v202, 0
    %206 = vmatpush.msra.mxu0 0.0
    %207 = vmatpush.msra.mxu0 0.0
    %208 = vmatpush.msra.mxu0 0.0
    %209 = vmatpush.msra.mxu0 0.0
    %210 = vmatpush.msra.mxu0 0.0
    %211 = vmatpush.msra.mxu0 0.0
    %212 = vmatpush.msra.mxu0 0.0
    %213 = vmatpush.msra.mxu0 0.0
    %214 = vmatpush.msra.mxu0 0.0
    %215 = vmatpush.msra.mxu0 0.0
    %216 = vmatpush.msra.mxu0 0.0
    %217 = vmatpush.msra.mxu0 0.0
    %218 = vmatpush.msra.mxu0 0.0
    %219 = vmatpush.msra.mxu0 %v204
    %220 = vmatpush.msra.mxu0 %v201
    %221 = vmatpush.msra.mxu0 %v200
    %222 = vmatmul.f32.gmra.mxu0 %v54
    %v223 = vpop.f32.mrf.mxu0
    %v224 = vadd.f32 0.0, %v223
    %225 = vmatmul.f32.gmra.mxu0 %v57
    %v226 = vpop.f32.mrf.mxu0
    %v227 = vadd.f32 0.0, %v226
    %228 = vmatmul.f32.gmra.mxu0 %v60
    %v229 = vpop.f32.mrf.mxu0
    %v230 = vadd.f32 0.0, %v229
    %231 = vdwg.mxu0
    %vm232 = vcmask 80896
    %v234 = vsel %vm232, %v224, 0
    %v237 = vsel %vm232, %v227, 0
    %v240 = vsel %vm232, %v230, 0
    %vm242 = vcmask 1041408
    %v244 = vsel %vm242, %v45, 0
    %246 = vmatpush.msra.mxu0 0.0
    %247 = vmatpush.msra.mxu0 0.0
    %248 = vmatpush.msra.mxu0 0.0
    %249 = vmatpush.msra.mxu0 0.0
    %250 = vmatpush.msra.mxu0 0.0
    %251 = vmatpush.msra.mxu0 0.0
    %252 = vmatpush.msra.mxu0 0.0
    %253 = vmatpush.msra.mxu0 0.0
    %254 = vmatpush.msra.mxu0 0.0
    %255 = vmatpush.msra.mxu0 0.0
    %256 = vmatpush.msra.mxu0 0.0
    %257 = vmatpush.msra.mxu0 0.0
    %258 = vmatpush.msra.mxu0 0.0
    %259 = vmatpush.msra.mxu0 0.0
    %260 = vmatpush.msra.mxu0 %v244
    %261 = vmatpush.msra.mxu0 %v44
    %262 = vmatmul.f32.gmra.mxu0 %v234
    %v263 = vpop.f32.mrf.mxu0
    %v264 = vadd.f32 0.0, %v263
    %265 = vmatmul.f32.gmra.mxu0 %v237
    %v266 = vpop.f32.mrf.mxu0
    %v267 = vadd.f32 0.0, %v266
    %268 = vmatmul.f32.gmra.mxu0 %v240
    %v269 = vpop.f32.mrf.mxu0
    %v270 = vadd.f32 0.0, %v269
    %271 = vdwg.mxu0
    %v272 = vmax.f32 %v264, 0.0
    %v273 = vmax.f32 %v267, 0.0
    %v274 = vmax.f32 %v270, 0.0
    %s275 = scalar_lea.vmem %s0, 24
    %v276 = vld [vmem:[%s275] sm:$0xff]
    %v277 = vld [vmem:[%s275 + $0x8] sm:$0xff]
    %v278 = vld [vmem:[%s275 + $0x10] sm:$0xf]
    %s279 = scalar_lea.vmem %s1, 24
    %v280 = vld [vmem:[%s279] sm:$0xff]
    %v281 = vld [vmem:[%s279 + $0x8] sm:$0xff]
    %v282 = vld [vmem:[%s279 + $0x10] sm:$0xf]
    %v284 = vsel %vm52, %v276, 0
    %v287 = vsel %vm52, %v277, 0
    %v290 = vsel %vm52, %v278, 0
    %v293 = vsel %vm62, %v282, 0
    %295 = vmatpush.msra.mxu0 0.0
    %296 = vmatpush.msra.mxu0 0.0
    %297 = vmatpush.msra.mxu0 0.0
    %298 = vmatpush.msra.mxu0 0.0
    %299 = vmatpush.msra.mxu0 0.0
    %300 = vmatpush.msra.mxu0 0.0
    %301 = vmatpush.msra.mxu0 0.0
    %302 = vmatpush.msra.mxu0 0.0
    %303 = vmatpush.msra.mxu0 0.0
    %304 = vmatpush.msra.mxu0 0.0
    %305 = vmatpush.msra.mxu0 0.0
    %306 = vmatpush.msra.mxu0 0.0
    %307 = vmatpush.msra.mxu0 0.0
    %308 = vmatpush.msra.mxu0 %v293
    %309 = vmatpush.msra.mxu0 %v281
    %310 = vmatpush.msra.mxu0 %v280
    %311 = vmatmul.f32.gmra.mxu0 %v284
    %v312 = vpop.f32.mrf.mxu0
    %v313 = vadd.f32 0.0, %v312
    %314 = vmatmul.f32.gmra.mxu0 %v287
    %v315 = vpop.f32.mrf.mxu0
    %v316 = vadd.f32 0.0, %v315
    %317 = vmatmul.f32.gmra.mxu0 %v290
    %v318 = vpop.f32.mrf.mxu0
    %v319 = vadd.f32 0.0, %v318
    %320 = vdwg.mxu0
    %v322 = vsel %vm52, %v313, 0
    %v325 = vsel %vm52, %v316, 0
    %v328 = vsel %vm52, %v319, 0
    %330 = vmatpush.msra.mxu0 0.0
    %331 = vmatpush.msra.mxu0 0.0
    %332 = vmatpush.msra.mxu0 0.0
    %333 = vmatpush.msra.mxu0 0.0
    %334 = vmatpush.msra.mxu0 0.0
    %335 = vmatpush.msra.mxu0 0.0
    %336 = vmatpush.msra.mxu0 0.0
    %337 = vmatpush.msra.mxu0 0.0
    %338 = vmatpush.msra.mxu0 0.0
    %339 = vmatpush.msra.mxu0 0.0
    %340 = vmatpush.msra.mxu0 0.0
    %341 = vmatpush.msra.mxu0 0.0
    %342 = vmatpush.msra.mxu0 0.0
    %343 = vmatpush.msra.mxu0 %v102
    %344 = vmatpush.msra.mxu0 %v39
    %345 = vmatpush.msra.mxu0 %v38
    %346 = vmatmul.f32.gmra.mxu0 %v322
    %v347 = vpop.f32.mrf.mxu0
    %v348 = vadd.f32 0.0, %v347
    %349 = vmatmul.f32.gmra.mxu0 %v325
    %v350 = vpop.f32.mrf.mxu0
    %v351 = vadd.f32 0.0, %v350
    %352 = vmatmul.f32.gmra.mxu0 %v328
    %v353 = vpop.f32.mrf.mxu0
    %v354 = vadd.f32 0.0, %v353
    %355 = vdwg.mxu0
    %v356 = vmax.f32 %v348, 0.0
    %v357 = vmax.f32 %v351, 0.0
    %v358 = vmax.f32 %v354, 0.0
    %v360 = vsel %vm62, %v358, 0
    %362 = vmatpush.msra.mxu0 0.0
    %363 = vmatpush.msra.mxu0 0.0
    %364 = vmatpush.msra.mxu0 0.0
    %365 = vmatpush.msra.mxu0 0.0
    %366 = vmatpush.msra.mxu0 0.0
    %367 = vmatpush.msra.mxu0 0.0
    %368 = vmatpush.msra.mxu0 0.0
    %369 = vmatpush.msra.mxu0 0.0
    %370 = vmatpush.msra.mxu0 0.0
    %371 = vmatpush.msra.mxu0 0.0
    %372 = vmatpush.msra.mxu0 0.0
    %373 = vmatpush.msra.mxu0 0.0
    %374 = vmatpush.msra.mxu0 0.0
    %375 = vmatpush.msra.mxu0 %v360
    %376 = vmatpush.msra.mxu0 %v357
    %377 = vmatpush.msra.mxu0 %v356
    %378 = vmatmul.f32.gmra.mxu0 %v284
    %v379 = vpop.f32.mrf.mxu0
    %v380 = vadd.f32 0.0, %v379
    %381 = vmatmul.f32.gmra.mxu0 %v287
    %v382 = vpop.f32.mrf.mxu0
    %v383 = vadd.f32 0.0, %v382
    %384 = vmatmul.f32.gmra.mxu0 %v290
    %v385 = vpop.f32.mrf.mxu0
    %v386 = vadd.f32 0.0, %v385
    %387 = vdwg.mxu0
    %v389 = vsel %vm52, %v380, 0
    %v392 = vsel %vm52, %v383, 0
    %v395 = vsel %vm52, %v386, 0
    %397 = vmatpush.msra.mxu0 0.0
    %398 = vmatpush.msra.mxu0 0.0
    %399 = vmatpush.msra.mxu0 0.0
    %400 = vmatpush.msra.mxu0 0.0
    %401 = vmatpush.msra.mxu0 0.0
    %402 = vmatpush.msra.mxu0 0.0
    %403 = vmatpush.msra.mxu0 0.0
    %404 = vmatpush.msra.mxu0 0.0
    %405 = vmatpush.msra.mxu0 0.0
    %406 = vmatpush.msra.mxu0 0.0
    %407 = vmatpush.msra.mxu0 0.0
    %408 = vmatpush.msra.mxu0 0.0
    %409 = vmatpush.msra.mxu0 0.0
    %410 = vmatpush.msra.mxu0 %v172
    %411 = vmatpush.msra.mxu0 %v42
    %412 = vmatpush.msra.mxu0 %v41
    %413 = vmatmul.f32.gmra.mxu0 %v389
    %v414 = vpop.f32.mrf.mxu0
    %v415 = vadd.f32 0.0, %v414
    %416 = vmatmul.f32.gmra.mxu0 %v392
    %v417 = vpop.f32.mrf.mxu0
    %v418 = vadd.f32 0.0, %v417
    %419 = vmatmul.f32.gmra.mxu0 %v395
    %v420 = vpop.f32.mrf.mxu0
    %v421 = vadd.f32 0.0, %v420
    %422 = vdwg.mxu0
    %v423 = vmax.f32 %v415, 0.0
    %v424 = vmax.f32 %v418, 0.0
    %v425 = vmax.f32 %v421, 0.0
    %v427 = vsel %vm62, %v425, 0
    %429 = vmatpush.msra.mxu0 0.0
    %430 = vmatpush.msra.mxu0 0.0
    %431 = vmatpush.msra.mxu0 0.0
    %432 = vmatpush.msra.mxu0 0.0
    %433 = vmatpush.msra.mxu0 0.0
    %434 = vmatpush.msra.mxu0 0.0
    %435 = vmatpush.msra.mxu0 0.0
    %436 = vmatpush.msra.mxu0 0.0
    %437 = vmatpush.msra.mxu0 0.0
    %438 = vmatpush.msra.mxu0 0.0
    %439 = vmatpush.msra.mxu0 0.0
    %440 = vmatpush.msra.mxu0 0.0
    %441 = vmatpush.msra.mxu0 0.0
    %442 = vmatpush.msra.mxu0 %v427
    %443 = vmatpush.msra.mxu0 %v424
    %444 = vmatpush.msra.mxu0 %v423
    %445 = vmatmul.f32.gmra.mxu0 %v284
    %v446 = vpop.f32.mrf.mxu0
    %v447 = vadd.f32 0.0, %v446
    %448 = vmatmul.f32.gmra.mxu0 %v287
    %v449 = vpop.f32.mrf.mxu0
    %v450 = vadd.f32 0.0, %v449
    %451 = vmatmul.f32.gmra.mxu0 %v290
    %v452 = vpop.f32.mrf.mxu0
    %v453 = vadd.f32 0.0, %v452
    %454 = vdwg.mxu0
    %v456 = vsel %vm232, %v447, 0
    %v459 = vsel %vm232, %v450, 0
    %v462 = vsel %vm232, %v453, 0
    %464 = vmatpush.msra.mxu0 0.0
    %465 = vmatpush.msra.mxu0 0.0
    %466 = vmatpush.msra.mxu0 0.0
    %467 = vmatpush.msra.mxu0 0.0
    %468 = vmatpush.msra.mxu0 0.0
    %469 = vmatpush.msra.mxu0 0.0
    %470 = vmatpush.msra.mxu0 0.0
    %471 = vmatpush.msra.mxu0 0.0
    %472 = vmatpush.msra.mxu0 0.0
    %473 = vmatpush.msra.mxu0 0.0
    %474 = vmatpush.msra.mxu0 0.0
    %475 = vmatpush.msra.mxu0 0.0
    %476 = vmatpush.msra.mxu0 0.0
    %477 = vmatpush.msra.mxu0 0.0
    %478 = vmatpush.msra.mxu0 %v244
    %479 = vmatpush.msra.mxu0 %v44
    %480 = vmatmul.f32.gmra.mxu0 %v456
    %v481 = vpop.f32.mrf.mxu0
    %v482 = vadd.f32 0.0, %v481
    %483 = vmatmul.f32.gmra.mxu0 %v459
    %v484 = vpop.f32.mrf.mxu0
    %v485 = vadd.f32 0.0, %v484
    %486 = vmatmul.f32.gmra.mxu0 %v462
    %v487 = vpop.f32.mrf.mxu0
    %v488 = vadd.f32 0.0, %v487
    %489 = vdwg.mxu0
    %v490 = vmax.f32 %v482, 0.0
    %v491 = vmax.f32 %v485, 0.0
    %v492 = vmax.f32 %v488, 0.0
    %s493 = smul.u32 8, 20
    %s494 = smul.u32 %s493, 3
    %s495 = smul.u32 %s494, 4
    %s496 = sshll.u32 %s495, 4
    %497 = dma.done [#allocation3], %s496
    %v498 = vld [vmem:[%s6] sm:$0xf]
    %v499 = vld [vmem:[#allocation2] sm:$0xff]
    %v500 = vld [vmem:[#allocation2 + $0x8] sm:$0xff]
    %v501 = vld [vmem:[#allocation2 + $0x10] sm:$0xff]
    %v502 = vld [vmem:[#allocation2 + $0x18] sm:$0xff]
    %v503 = vld [vmem:[#allocation2 + $0x20] sm:$0xff]
    %v504 = vld [vmem:[#allocation2 + $0x28] sm:$0xff]
    %v505 = vld [vmem:[#allocation2 + $0x30] sm:$0xff]
    %v506 = vld [vmem:[#allocation2 + $0x38] sm:$0xff]
    %v507 = vld [vmem:[#allocation2 + $0x40] sm:$0xf]
    %v508 = vld [vmem:[#allocation2 + $0x48] sm:$0xf]
    %v509 = vld [vmem:[#allocation2 + $0x50] sm:$0xf]
    %v510 = vld [vmem:[#allocation2 + $0x58] sm:$0xf]
    %s511 = scalar_lea.vmem [#allocation2], 96
    %v512 = vld [vmem:[%s511] sm:$0xff]
    %v513 = vld [vmem:[%s511 + $0x8] sm:$0xff]
    %v514 = vld [vmem:[%s511 + $0x10] sm:$0xff]
    %v515 = vld [vmem:[%s511 + $0x18] sm:$0xff]
    %v516 = vld [vmem:[%s511 + $0x20] sm:$0xff]
    %v517 = vld [vmem:[%s511 + $0x28] sm:$0xff]
    %v518 = vld [vmem:[%s511 + $0x30] sm:$0xff]
    %v519 = vld [vmem:[%s511 + $0x38] sm:$0xff]
    %v520 = vld [vmem:[%s511 + $0x40] sm:$0xf]
    %v521 = vld [vmem:[%s511 + $0x48] sm:$0xf]
    %v522 = vld [vmem:[%s511 + $0x50] sm:$0xf]
    %v523 = vld [vmem:[%s511 + $0x58] sm:$0xf]
    %s524 = scalar_lea.vmem [#allocation2], 192
    %v525 = vld [vmem:[%s524] sm:$0xff]
    %v526 = vld [vmem:[%s524 + $0x8] sm:$0xff]
    %v527 = vld [vmem:[%s524 + $0x10] sm:$0xff]
    %v528 = vld [vmem:[%s524 + $0x18] sm:$0xff]
    %v529 = vld [vmem:[%s524 + $0x20] sm:$0xff]
    %v530 = vld [vmem:[%s524 + $0x28] sm:$0xff]
    %v531 = vld [vmem:[%s524 + $0x30] sm:$0xff]
    %v532 = vld [vmem:[%s524 + $0x38] sm:$0xff]
    %v533 = vld [vmem:[%s524 + $0x40] sm:$0xf]
    %v534 = vld [vmem:[%s524 + $0x48] sm:$0xf]
    %v535 = vld [vmem:[%s524 + $0x50] sm:$0xf]
    %v536 = vld [vmem:[%s524 + $0x58] sm:$0xf]
    %s537 = scalar_lea.vmem [#allocation2], 288
    %v538 = vld [vmem:[%s537] sm:$0xff]
    %v539 = vld [vmem:[%s537 + $0x8] sm:$0xff]
    %v540 = vld [vmem:[%s537 + $0x10] sm:$0xff]
    %v541 = vld [vmem:[%s537 + $0x18] sm:$0xff]
    %v542 = vld [vmem:[%s537 + $0x20] sm:$0xff]
    %v543 = vld [vmem:[%s537 + $0x28] sm:$0xff]
    %v544 = vld [vmem:[%s537 + $0x30] sm:$0xff]
    %v545 = vld [vmem:[%s537 + $0x38] sm:$0xff]
    %v546 = vld [vmem:[%s537 + $0x40] sm:$0xf]
    %v547 = vld [vmem:[%s537 + $0x48] sm:$0xf]
    %v548 = vld [vmem:[%s537 + $0x50] sm:$0xf]
    %v549 = vld [vmem:[%s537 + $0x58] sm:$0xf]
    %s550 = scalar_lea.vmem [#allocation2], 384
    %v551 = vld [vmem:[%s550] sm:$0xff]
    %v552 = vld [vmem:[%s550 + $0x8] sm:$0xff]
    %v553 = vld [vmem:[%s550 + $0x10] sm:$0xff]
    %v554 = vld [vmem:[%s550 + $0x18] sm:$0xff]
    %v555 = vld [vmem:[%s550 + $0x20] sm:$0xff]
    %v556 = vld [vmem:[%s550 + $0x28] sm:$0xff]
    %v557 = vld [vmem:[%s550 + $0x30] sm:$0xff]
    %v558 = vld [vmem:[%s550 + $0x38] sm:$0xff]
    %v559 = vld [vmem:[%s550 + $0x40] sm:$0xf]
    %v560 = vld [vmem:[%s550 + $0x48] sm:$0xf]
    %v561 = vld [vmem:[%s550 + $0x50] sm:$0xf]
    %v562 = vld [vmem:[%s550 + $0x58] sm:$0xf]
    %v564 = vrot.slane %v272, 4
    %v565 = vsel %vm52, %v564, 0
    %v568 = vsel %vm62, %v559, 0
    %v571 = vsel %vm62, %v560, 0
    %v574 = vsel %vm62, %v561, 0
    %v577 = vsel %vm62, %v562, 0
    %579 = vmatpush.msra.mxu0 0.0
    %580 = vmatpush.msra.mxu0 0.0
    %581 = vmatpush.msra.mxu0 0.0
    %582 = vmatpush.msra.mxu0 0.0
    %583 = vmatpush.msra.mxu0 0.0
    %584 = vmatpush.msra.mxu0 0.0
    %585 = vmatpush.msra.mxu0 0.0
    %586 = vmatpush.msra.mxu0 0.0
    %587 = vmatpush.msra.mxu0 0.0
    %588 = vmatpush.msra.mxu0 0.0
    %589 = vmatpush.msra.mxu0 0.0
    %590 = vmatpush.msra.mxu0 0.0
    %591 = vmatpush.msra.mxu0 0.0
    %592 = vmatpush.msra.mxu0 %v568
    %593 = vmatpush.msra.mxu0 %v555
    %594 = vmatpush.msra.mxu0 %v551
    %595 = vmatmul.f32.gmra.mxu0 %v565
    %v596 = vpop.f32.mrf.mxu0
    %v597 = vadd.f32 0.0, %v596
    %598 = vdwg.mxu0
    %599 = vmatpush.msra.mxu0 0.0
    %600 = vmatpush.msra.mxu0 0.0
    %601 = vmatpush.msra.mxu0 0.0
    %602 = vmatpush.msra.mxu0 0.0
    %603 = vmatpush.msra.mxu0 0.0
    %604 = vmatpush.msra.mxu0 0.0
    %605 = vmatpush.msra.mxu0 0.0
    %606 = vmatpush.msra.mxu0 0.0
    %607 = vmatpush.msra.mxu0 0.0
    %608 = vmatpush.msra.mxu0 0.0
    %609 = vmatpush.msra.mxu0 0.0
    %610 = vmatpush.msra.mxu0 0.0
    %611 = vmatpush.msra.mxu0 0.0
    %612 = vmatpush.msra.mxu0 %v571
    %613 = vmatpush.msra.mxu0 %v556
    %614 = vmatpush.msra.mxu0 %v552
    %615 = vmatmul.f32.gmra.mxu0 %v565
    %v616 = vpop.f32.mrf.mxu0
    %v617 = vadd.f32 0.0, %v616
    %618 = vdwg.mxu0
    %619 = vmatpush.msra.mxu0 0.0
    %620 = vmatpush.msra.mxu0 0.0
    %621 = vmatpush.msra.mxu0 0.0
    %622 = vmatpush.msra.mxu0 0.0
    %623 = vmatpush.msra.mxu0 0.0
    %624 = vmatpush.msra.mxu0 0.0
    %625 = vmatpush.msra.mxu0 0.0
    %626 = vmatpush.msra.mxu0 0.0
    %627 = vmatpush.msra.mxu0 0.0
    %628 = vmatpush.msra.mxu0 0.0
    %629 = vmatpush.msra.mxu0 0.0
    %630 = vmatpush.msra.mxu0 0.0
    %631 = vmatpush.msra.mxu0 0.0
    %632 = vmatpush.msra.mxu0 %v574
    %633 = vmatpush.msra.mxu0 %v557
    %634 = vmatpush.msra.mxu0 %v553
    %635 = vmatmul.f32.gmra.mxu0 %v565
    %v636 = vpop.f32.mrf.mxu0
    %v637 = vadd.f32 0.0, %v636
    %638 = vdwg.mxu0
    %639 = vmatpush.msra.mxu0 0.0
    %640 = vmatpush.msra.mxu0 0.0
    %641 = vmatpush.msra.mxu0 0.0
    %642 = vmatpush.msra.mxu0 0.0
    %643 = vmatpush.msra.mxu0 0.0
    %644 = vmatpush.msra.mxu0 0.0
    %645 = vmatpush.msra.mxu0 0.0
    %646 = vmatpush.msra.mxu0 0.0
    %647 = vmatpush.msra.mxu0 0.0
    %648 = vmatpush.msra.mxu0 0.0
    %649 = vmatpush.msra.mxu0 0.0
    %650 = vmatpush.msra.mxu0 0.0
    %651 = vmatpush.msra.mxu0 0.0
    %652 = vmatpush.msra.mxu0 %v577
    %653 = vmatpush.msra.mxu0 %v558
    %654 = vmatpush.msra.mxu0 %v554
    %655 = vmatmul.f32.gmra.mxu0 %v565
    %v656 = vpop.f32.mrf.mxu0
    %v657 = vadd.f32 0.0, %v656
    %658 = vdwg.mxu0
    %v659 = vsel %vm52, %v272, 0
    %v662 = vsel %vm62, %v507, 0
    %v665 = vsel %vm62, %v508, 0
    %v668 = vsel %vm62, %v509, 0
    %v671 = vsel %vm62, %v510, 0
    %673 = vmatpush.msra.mxu0 0.0
    %674 = vmatpush.msra.mxu0 0.0
    %675 = vmatpush.msra.mxu0 0.0
    %676 = vmatpush.msra.mxu0 0.0
    %677 = vmatpush.msra.mxu0 0.0
    %678 = vmatpush.msra.mxu0 0.0
    %679 = vmatpush.msra.mxu0 0.0
    %680 = vmatpush.msra.mxu0 0.0
    %681 = vmatpush.msra.mxu0 0.0
    %682 = vmatpush.msra.mxu0 0.0
    %683 = vmatpush.msra.mxu0 0.0
    %684 = vmatpush.msra.mxu0 0.0
    %685 = vmatpush.msra.mxu0 0.0
    %686 = vmatpush.msra.mxu0 %v662
    %687 = vmatpush.msra.mxu0 %v503
    %688 = vmatpush.msra.mxu0 %v499
    %689 = vmatmul.f32.gmra.mxu0 %v659
    %v690 = vpop.f32.mrf.mxu0
    %v691 = vadd.f32 %v597, %v690
    %692 = vdwg.mxu0
    %693 = vmatpush.msra.mxu0 0.0
    %694 = vmatpush.msra.mxu0 0.0
    %695 = vmatpush.msra.mxu0 0.0
    %696 = vmatpush.msra.mxu0 0.0
    %697 = vmatpush.msra.mxu0 0.0
    %698 = vmatpush.msra.mxu0 0.0
    %699 = vmatpush.msra.mxu0 0.0
    %700 = vmatpush.msra.mxu0 0.0
    %701 = vmatpush.msra.mxu0 0.0
    %702 = vmatpush.msra.mxu0 0.0
    %703 = vmatpush.msra.mxu0 0.0
    %704 = vmatpush.msra.mxu0 0.0
    %705 = vmatpush.msra.mxu0 0.0
    %706 = vmatpush.msra.mxu0 %v665
    %707 = vmatpush.msra.mxu0 %v504
    %708 = vmatpush.msra.mxu0 %v500
    %709 = vmatmul.f32.gmra.mxu0 %v659
    %v710 = vpop.f32.mrf.mxu0
    %v711 = vadd.f32 %v617, %v710
    %712 = vdwg.mxu0
    %713 = vmatpush.msra.mxu0 0.0
    %714 = vmatpush.msra.mxu0 0.0
    %715 = vmatpush.msra.mxu0 0.0
    %716 = vmatpush.msra.mxu0 0.0
    %717 = vmatpush.msra.mxu0 0.0
    %718 = vmatpush.msra.mxu0 0.0
    %719 = vmatpush.msra.mxu0 0.0
    %720 = vmatpush.msra.mxu0 0.0
    %721 = vmatpush.msra.mxu0 0.0
    %722 = vmatpush.msra.mxu0 0.0
    %723 = vmatpush.msra.mxu0 0.0
    %724 = vmatpush.msra.mxu0 0.0
    %725 = vmatpush.msra.mxu0 0.0
    %726 = vmatpush.msra.mxu0 %v668
    %727 = vmatpush.msra.mxu0 %v505
    %728 = vmatpush.msra.mxu0 %v501
    %729 = vmatmul.f32.gmra.mxu0 %v659
    %v730 = vpop.f32.mrf.mxu0
    %v731 = vadd.f32 %v637, %v730
    %732 = vdwg.mxu0
    %733 = vmatpush.msra.mxu0 0.0
    %734 = vmatpush.msra.mxu0 0.0
    %735 = vmatpush.msra.mxu0 0.0
    %736 = vmatpush.msra.mxu0 0.0
    %737 = vmatpush.msra.mxu0 0.0
    %738 = vmatpush.msra.mxu0 0.0
    %739 = vmatpush.msra.mxu0 0.0
    %740 = vmatpush.msra.mxu0 0.0
    %741 = vmatpush.msra.mxu0 0.0
    %742 = vmatpush.msra.mxu0 0.0
    %743 = vmatpush.msra.mxu0 0.0
    %744 = vmatpush.msra.mxu0 0.0
    %745 = vmatpush.msra.mxu0 0.0
    %746 = vmatpush.msra.mxu0 %v671
    %747 = vmatpush.msra.mxu0 %v506
    %748 = vmatpush.msra.mxu0 %v502
    %749 = vmatmul.f32.gmra.mxu0 %v659
    %v750 = vpop.f32.mrf.mxu0
    %v751 = vadd.f32 %v657, %v750
    %752 = vdwg.mxu0
    %s753 = scalar_lea.vmem [#allocation2], 480
    %v754 = vld [vmem:[%s753] sm:$0xff]
    %v755 = vld [vmem:[%s753 + $0x8] sm:$0xff]
    %v756 = vld [vmem:[%s753 + $0x10] sm:$0xff]
    %v757 = vld [vmem:[%s753 + $0x18] sm:$0xff]
    %v758 = vld [vmem:[%s753 + $0x20] sm:$0xff]
    %v759 = vld [vmem:[%s753 + $0x28] sm:$0xff]
    %v760 = vld [vmem:[%s753 + $0x30] sm:$0xff]
    %v761 = vld [vmem:[%s753 + $0x38] sm:$0xff]
    %v762 = vld [vmem:[%s753 + $0x40] sm:$0xf]
    %v763 = vld [vmem:[%s753 + $0x48] sm:$0xf]
    %v764 = vld [vmem:[%s753 + $0x50] sm:$0xf]
    %v765 = vld [vmem:[%s753 + $0x58] sm:$0xf]
    %v766 = vrot.slane %v272, 5
    %v767 = vsel %vm52, %v766, 0
    %v770 = vsel %vm62, %v762, 0
    %v773 = vsel %vm62, %v763, 0
    %v776 = vsel %vm62, %v764, 0
    %v779 = vsel %vm62, %v765, 0
    %781 = vmatpush.msra.mxu0 0.0
    %782 = vmatpush.msra.mxu0 0.0
    %783 = vmatpush.msra.mxu0 0.0
    %784 = vmatpush.msra.mxu0 0.0
    %785 = vmatpush.msra.mxu0 0.0
    %786 = vmatpush.msra.mxu0 0.0
    %787 = vmatpush.msra.mxu0 0.0
    %788 = vmatpush.msra.mxu0 0.0
    %789 = vmatpush.msra.mxu0 0.0
    %790 = vmatpush.msra.mxu0 0.0
    %791 = vmatpush.msra.mxu0 0.0
    %792 = vmatpush.msra.mxu0 0.0
    %793 = vmatpush.msra.mxu0 0.0
    %794 = vmatpush.msra.mxu0 %v770
    %795 = vmatpush.msra.mxu0 %v758
    %796 = vmatpush.msra.mxu0 %v754
    %797 = vmatmul.f32.gmra.mxu0 %v767
    %v798 = vpop.f32.mrf.mxu0
    %v799 = vadd.f32 0.0, %v798
    %800 = vdwg.mxu0
    %801 = vmatpush.msra.mxu0 0.0
    %802 = vmatpush.msra.mxu0 0.0
    %803 = vmatpush.msra.mxu0 0.0
    %804 = vmatpush.msra.mxu0 0.0
    %805 = vmatpush.msra.mxu0 0.0
    %806 = vmatpush.msra.mxu0 0.0
    %807 = vmatpush.msra.mxu0 0.0
    %808 = vmatpush.msra.mxu0 0.0
    %809 = vmatpush.msra.mxu0 0.0
    %810 = vmatpush.msra.mxu0 0.0
    %811 = vmatpush.msra.mxu0 0.0
    %812 = vmatpush.msra.mxu0 0.0
    %813 = vmatpush.msra.mxu0 0.0
    %814 = vmatpush.msra.mxu0 %v773
    %815 = vmatpush.msra.mxu0 %v759
    %816 = vmatpush.msra.mxu0 %v755
    %817 = vmatmul.f32.gmra.mxu0 %v767
    %v818 = vpop.f32.mrf.mxu0
    %v819 = vadd.f32 0.0, %v818
    %820 = vdwg.mxu0
    %821 = vmatpush.msra.mxu0 0.0
    %822 = vmatpush.msra.mxu0 0.0
    %823 = vmatpush.msra.mxu0 0.0
    %824 = vmatpush.msra.mxu0 0.0
    %825 = vmatpush.msra.mxu0 0.0
    %826 = vmatpush.msra.mxu0 0.0
    %827 = vmatpush.msra.mxu0 0.0
    %828 = vmatpush.msra.mxu0 0.0
    %829 = vmatpush.msra.mxu0 0.0
    %830 = vmatpush.msra.mxu0 0.0
    %831 = vmatpush.msra.mxu0 0.0
    %832 = vmatpush.msra.mxu0 0.0
    %833 = vmatpush.msra.mxu0 0.0
    %834 = vmatpush.msra.mxu0 %v776
    %835 = vmatpush.msra.mxu0 %v760
    %836 = vmatpush.msra.mxu0 %v756
    %837 = vmatmul.f32.gmra.mxu0 %v767
    %v838 = vpop.f32.mrf.mxu0
    %v839 = vadd.f32 0.0, %v838
    %840 = vdwg.mxu0
    %841 = vmatpush.msra.mxu0 0.0
    %842 = vmatpush.msra.mxu0 0.0
    %843 = vmatpush.msra.mxu0 0.0
    %844 = vmatpush.msra.mxu0 0.0
    %845 = vmatpush.msra.mxu0 0.0
    %846 = vmatpush.msra.mxu0 0.0
    %847 = vmatpush.msra.mxu0 0.0
    %848 = vmatpush.msra.mxu0 0.0
    %849 = vmatpush.msra.mxu0 0.0
    %850 = vmatpush.msra.mxu0 0.0
    %851 = vmatpush.msra.mxu0 0.0
    %852 = vmatpush.msra.mxu0 0.0
    %853 = vmatpush.msra.mxu0 0.0
    %854 = vmatpush.msra.mxu0 %v779
    %855 = vmatpush.msra.mxu0 %v761
    %856 = vmatpush.msra.mxu0 %v757
    %857 = vmatmul.f32.gmra.mxu0 %v767
    %v858 = vpop.f32.mrf.mxu0
    %v859 = vadd.f32 0.0, %v858
    %860 = vdwg.mxu0
    %v861 = vrot.slane %v272, 1
    %v862 = vsel %vm52, %v861, 0
    %v865 = vsel %vm62, %v520, 0
    %v868 = vsel %vm62, %v521, 0
    %v871 = vsel %vm62, %v522, 0
    %v874 = vsel %vm62, %v523, 0
    %876 = vmatpush.msra.mxu0 0.0
    %877 = vmatpush.msra.mxu0 0.0
    %878 = vmatpush.msra.mxu0 0.0
    %879 = vmatpush.msra.mxu0 0.0
    %880 = vmatpush.msra.mxu0 0.0
    %881 = vmatpush.msra.mxu0 0.0
    %882 = vmatpush.msra.mxu0 0.0
    %883 = vmatpush.msra.mxu0 0.0
    %884 = vmatpush.msra.mxu0 0.0
    %885 = vmatpush.msra.mxu0 0.0
    %886 = vmatpush.msra.mxu0 0.0
    %887 = vmatpush.msra.mxu0 0.0
    %888 = vmatpush.msra.mxu0 0.0
    %889 = vmatpush.msra.mxu0 %v865
    %890 = vmatpush.msra.mxu0 %v516
    %891 = vmatpush.msra.mxu0 %v512
    %892 = vmatmul.f32.gmra.mxu0 %v862
    %v893 = vpop.f32.mrf.mxu0
    %v894 = vadd.f32 %v799, %v893
    %895 = vdwg.mxu0
    %896 = vmatpush.msra.mxu0 0.0
    %897 = vmatpush.msra.mxu0 0.0
    %898 = vmatpush.msra.mxu0 0.0
    %899 = vmatpush.msra.mxu0 0.0
    %900 = vmatpush.msra.mxu0 0.0
    %901 = vmatpush.msra.mxu0 0.0
    %902 = vmatpush.msra.mxu0 0.0
    %903 = vmatpush.msra.mxu0 0.0
    %904 = vmatpush.msra.mxu0 0.0
    %905 = vmatpush.msra.mxu0 0.0
    %906 = vmatpush.msra.mxu0 0.0
    %907 = vmatpush.msra.mxu0 0.0
    %908 = vmatpush.msra.mxu0 0.0
    %909 = vmatpush.msra.mxu0 %v868
    %910 = vmatpush.msra.mxu0 %v517
    %911 = vmatpush.msra.mxu0 %v513
    %912 = vmatmul.f32.gmra.mxu0 %v862
    %v913 = vpop.f32.mrf.mxu0
    %v914 = vadd.f32 %v819, %v913
    %915 = vdwg.mxu0
    %916 = vmatpush.msra.mxu0 0.0
    %917 = vmatpush.msra.mxu0 0.0
    %918 = vmatpush.msra.mxu0 0.0
    %919 = vmatpush.msra.mxu0 0.0
    %920 = vmatpush.msra.mxu0 0.0
    %921 = vmatpush.msra.mxu0 0.0
    %922 = vmatpush.msra.mxu0 0.0
    %923 = vmatpush.msra.mxu0 0.0
    %924 = vmatpush.msra.mxu0 0.0
    %925 = vmatpush.msra.mxu0 0.0
    %926 = vmatpush.msra.mxu0 0.0
    %927 = vmatpush.msra.mxu0 0.0
    %928 = vmatpush.msra.mxu0 0.0
    %929 = vmatpush.msra.mxu0 %v871
    %930 = vmatpush.msra.mxu0 %v518
    %931 = vmatpush.msra.mxu0 %v514
    %932 = vmatmul.f32.gmra.mxu0 %v862
    %v933 = vpop.f32.mrf.mxu0
    %v934 = vadd.f32 %v839, %v933
    %935 = vdwg.mxu0
    %936 = vmatpush.msra.mxu0 0.0
    %937 = vmatpush.msra.mxu0 0.0
    %938 = vmatpush.msra.mxu0 0.0
    %939 = vmatpush.msra.mxu0 0.0
    %940 = vmatpush.msra.mxu0 0.0
    %941 = vmatpush.msra.mxu0 0.0
    %942 = vmatpush.msra.mxu0 0.0
    %943 = vmatpush.msra.mxu0 0.0
    %944 = vmatpush.msra.mxu0 0.0
    %945 = vmatpush.msra.mxu0 0.0
    %946 = vmatpush.msra.mxu0 0.0
    %947 = vmatpush.msra.mxu0 0.0
    %948 = vmatpush.msra.mxu0 0.0
    %949 = vmatpush.msra.mxu0 %v874
    %950 = vmatpush.msra.mxu0 %v519
    %951 = vmatpush.msra.mxu0 %v515
    %952 = vmatmul.f32.gmra.mxu0 %v862
    %v953 = vpop.f32.mrf.mxu0
    %v954 = vadd.f32 %v859, %v953
    %955 = vdwg.mxu0
    %s956 = scalar_lea.vmem [#allocation2], 576
    %v957 = vld [vmem:[%s956] sm:$0xff]
    %v958 = vld [vmem:[%s956 + $0x8] sm:$0xff]
    %v959 = vld [vmem:[%s956 + $0x10] sm:$0xff]
    %v960 = vld [vmem:[%s956 + $0x18] sm:$0xff]
    %v961 = vld [vmem:[%s956 + $0x20] sm:$0xff]
    %v962 = vld [vmem:[%s956 + $0x28] sm:$0xff]
    %v963 = vld [vmem:[%s956 + $0x30] sm:$0xff]
    %v964 = vld [vmem:[%s956 + $0x38] sm:$0xff]
    %v965 = vld [vmem:[%s956 + $0x40] sm:$0xf]
    %v966 = vld [vmem:[%s956 + $0x48] sm:$0xf]
    %v967 = vld [vmem:[%s956 + $0x50] sm:$0xf]
    %v968 = vld [vmem:[%s956 + $0x58] sm:$0xf]
    %v969 = vrot.slane %v272, 6
    %v970 = vsel %vm52, %v969, 0
    %v973 = vsel %vm62, %v965, 0
    %v976 = vsel %vm62, %v966, 0
    %v979 = vsel %vm62, %v967, 0
    %v982 = vsel %vm62, %v968, 0
    %984 = vmatpush.msra.mxu0 0.0
    %985 = vmatpush.msra.mxu0 0.0
    %986 = vmatpush.msra.mxu0 0.0
    %987 = vmatpush.msra.mxu0 0.0
    %988 = vmatpush.msra.mxu0 0.0
    %989 = vmatpush.msra.mxu0 0.0
    %990 = vmatpush.msra.mxu0 0.0
    %991 = vmatpush.msra.mxu0 0.0
    %992 = vmatpush.msra.mxu0 0.0
    %993 = vmatpush.msra.mxu0 0.0
    %994 = vmatpush.msra.mxu0 0.0
    %995 = vmatpush.msra.mxu0 0.0
    %996 = vmatpush.msra.mxu0 0.0
    %997 = vmatpush.msra.mxu0 %v973
    %998 = vmatpush.msra.mxu0 %v961
    %999 = vmatpush.msra.mxu0 %v957
    %1000 = vmatmul.f32.gmra.mxu0 %v970
    %v1001 = vpop.f32.mrf.mxu0
    %v1002 = vadd.f32 0.0, %v1001
    %1003 = vdwg.mxu0
    %1004 = vmatpush.msra.mxu0 0.0
    %1005 = vmatpush.msra.mxu0 0.0
    %1006 = vmatpush.msra.mxu0 0.0
    %1007 = vmatpush.msra.mxu0 0.0
    %1008 = vmatpush.msra.mxu0 0.0
    %1009 = vmatpush.msra.mxu0 0.0
    %1010 = vmatpush.msra.mxu0 0.0
    %1011 = vmatpush.msra.mxu0 0.0
    %1012 = vmatpush.msra.mxu0 0.0
    %1013 = vmatpush.msra.mxu0 0.0
    %1014 = vmatpush.msra.mxu0 0.0
    %1015 = vmatpush.msra.mxu0 0.0
    %1016 = vmatpush.msra.mxu0 0.0
    %1017 = vmatpush.msra.mxu0 %v976
    %1018 = vmatpush.msra.mxu0 %v962
    %1019 = vmatpush.msra.mxu0 %v958
    %1020 = vmatmul.f32.gmra.mxu0 %v970
    %v1021 = vpop.f32.mrf.mxu0
    %v1022 = vadd.f32 0.0, %v1021
    %1023 = vdwg.mxu0
    %1024 = vmatpush.msra.mxu0 0.0
    %1025 = vmatpush.msra.mxu0 0.0
    %1026 = vmatpush.msra.mxu0 0.0
    %1027 = vmatpush.msra.mxu0 0.0
    %1028 = vmatpush.msra.mxu0 0.0
    %1029 = vmatpush.msra.mxu0 0.0
    %1030 = vmatpush.msra.mxu0 0.0
    %1031 = vmatpush.msra.mxu0 0.0
    %1032 = vmatpush.msra.mxu0 0.0
    %1033 = vmatpush.msra.mxu0 0.0
    %1034 = vmatpush.msra.mxu0 0.0
    %1035 = vmatpush.msra.mxu0 0.0
    %1036 = vmatpush.msra.mxu0 0.0
    %1037 = vmatpush.msra.mxu0 %v979
    %1038 = vmatpush.msra.mxu0 %v963
    %1039 = vmatpush.msra.mxu0 %v959
    %1040 = vmatmul.f32.gmra.mxu0 %v970
    %v1041 = vpop.f32.mrf.mxu0
    %v1042 = vadd.f32 0.0, %v1041
    %1043 = vdwg.mxu0
    %1044 = vmatpush.msra.mxu0 0.0
    %1045 = vmatpush.msra.mxu0 0.0
    %1046 = vmatpush.msra.mxu0 0.0
    %1047 = vmatpush.msra.mxu0 0.0
    %1048 = vmatpush.msra.mxu0 0.0
    %1049 = vmatpush.msra.mxu0 0.0
    %1050 = vmatpush.msra.mxu0 0.0
    %1051 = vmatpush.msra.mxu0 0.0
    %1052 = vmatpush.msra.mxu0 0.0
    %1053 = vmatpush.msra.mxu0 0.0
    %1054 = vmatpush.msra.mxu0 0.0
    %1055 = vmatpush.msra.mxu0 0.0
    %1056 = vmatpush.msra.mxu0 0.0
    %1057 = vmatpush.msra.mxu0 %v982
    %1058 = vmatpush.msra.mxu0 %v964
    %1059 = vmatpush.msra.mxu0 %v960
    %1060 = vmatmul.f32.gmra.mxu0 %v970
    %v1061 = vpop.f32.mrf.mxu0
    %v1062 = vadd.f32 0.0, %v1061
    %1063 = vdwg.mxu0
    %v1064 = vrot.slane %v272, 2
    %v1065 = vsel %vm52, %v1064, 0
    %v1068 = vsel %vm62, %v533, 0
    %v1071 = vsel %vm62, %v534, 0
    %v1074 = vsel %vm62, %v535, 0
    %v1077 = vsel %vm62, %v536, 0
    %1079 = vmatpush.msra.mxu0 0.0
    %1080 = vmatpush.msra.mxu0 0.0
    %1081 = vmatpush.msra.mxu0 0.0
    %1082 = vmatpush.msra.mxu0 0.0
    %1083 = vmatpush.msra.mxu0 0.0
    %1084 = vmatpush.msra.mxu0 0.0
    %1085 = vmatpush.msra.mxu0 0.0
    %1086 = vmatpush.msra.mxu0 0.0
    %1087 = vmatpush.msra.mxu0 0.0
    %1088 = vmatpush.msra.mxu0 0.0
    %1089 = vmatpush.msra.mxu0 0.0
    %1090 = vmatpush.msra.mxu0 0.0
    %1091 = vmatpush.msra.mxu0 0.0
    %1092 = vmatpush.msra.mxu0 %v1068
    %1093 = vmatpush.msra.mxu0 %v529
    %1094 = vmatpush.msra.mxu0 %v525
    %1095 = vmatmul.f32.gmra.mxu0 %v1065
    %v1096 = vpop.f32.mrf.mxu0
    %v1097 = vadd.f32 %v1002, %v1096
    %1098 = vdwg.mxu0
    %1099 = vmatpush.msra.mxu0 0.0
    %1100 = vmatpush.msra.mxu0 0.0
    %1101 = vmatpush.msra.mxu0 0.0
    %1102 = vmatpush.msra.mxu0 0.0
    %1103 = vmatpush.msra.mxu0 0.0
    %1104 = vmatpush.msra.mxu0 0.0
    %1105 = vmatpush.msra.mxu0 0.0
    %1106 = vmatpush.msra.mxu0 0.0
    %1107 = vmatpush.msra.mxu0 0.0
    %1108 = vmatpush.msra.mxu0 0.0
    %1109 = vmatpush.msra.mxu0 0.0
    %1110 = vmatpush.msra.mxu0 0.0
    %1111 = vmatpush.msra.mxu0 0.0
    %1112 = vmatpush.msra.mxu0 %v1071
    %1113 = vmatpush.msra.mxu0 %v530
    %1114 = vmatpush.msra.mxu0 %v526
    %1115 = vmatmul.f32.gmra.mxu0 %v1065
    %v1116 = vpop.f32.mrf.mxu0
    %v1117 = vadd.f32 %v1022, %v1116
    %1118 = vdwg.mxu0
    %1119 = vmatpush.msra.mxu0 0.0
    %1120 = vmatpush.msra.mxu0 0.0
    %1121 = vmatpush.msra.mxu0 0.0
    %1122 = vmatpush.msra.mxu0 0.0
    %1123 = vmatpush.msra.mxu0 0.0
    %1124 = vmatpush.msra.mxu0 0.0
    %1125 = vmatpush.msra.mxu0 0.0
    %1126 = vmatpush.msra.mxu0 0.0
    %1127 = vmatpush.msra.mxu0 0.0
    %1128 = vmatpush.msra.mxu0 0.0
    %1129 = vmatpush.msra.mxu0 0.0
    %1130 = vmatpush.msra.mxu0 0.0
    %1131 = vmatpush.msra.mxu0 0.0
    %1132 = vmatpush.msra.mxu0 %v1074
    %1133 = vmatpush.msra.mxu0 %v531
    %1134 = vmatpush.msra.mxu0 %v527
    %1135 = vmatmul.f32.gmra.mxu0 %v1065
    %v1136 = vpop.f32.mrf.mxu0
    %v1137 = vadd.f32 %v1042, %v1136
    %1138 = vdwg.mxu0
    %1139 = vmatpush.msra.mxu0 0.0
    %1140 = vmatpush.msra.mxu0 0.0
    %1141 = vmatpush.msra.mxu0 0.0
    %1142 = vmatpush.msra.mxu0 0.0
    %1143 = vmatpush.msra.mxu0 0.0
    %1144 = vmatpush.msra.mxu0 0.0
    %1145 = vmatpush.msra.mxu0 0.0
    %1146 = vmatpush.msra.mxu0 0.0
    %1147 = vmatpush.msra.mxu0 0.0
    %1148 = vmatpush.msra.mxu0 0.0
    %1149 = vmatpush.msra.mxu0 0.0
    %1150 = vmatpush.msra.mxu0 0.0
    %1151 = vmatpush.msra.mxu0 0.0
    %1152 = vmatpush.msra.mxu0 %v1077
    %1153 = vmatpush.msra.mxu0 %v532
    %1154 = vmatpush.msra.mxu0 %v528
    %1155 = vmatmul.f32.gmra.mxu0 %v1065
    %v1156 = vpop.f32.mrf.mxu0
    %v1157 = vadd.f32 %v1062, %v1156
    %1158 = vdwg.mxu0
    %s1159 = scalar_lea.vmem [#allocation2], 672
    %v1160 = vld [vmem:[%s1159] sm:$0xff]
    %v1161 = vld [vmem:[%s1159 + $0x8] sm:$0xff]
    %v1162 = vld [vmem:[%s1159 + $0x10] sm:$0xff]
    %v1163 = vld [vmem:[%s1159 + $0x18] sm:$0xff]
    %v1164 = vld [vmem:[%s1159 + $0x20] sm:$0xff]
    %v1165 = vld [vmem:[%s1159 + $0x28] sm:$0xff]
    %v1166 = vld [vmem:[%s1159 + $0x30] sm:$0xff]
    %v1167 = vld [vmem:[%s1159 + $0x38] sm:$0xff]
    %v1168 = vld [vmem:[%s1159 + $0x40] sm:$0xf]
    %v1169 = vld [vmem:[%s1159 + $0x48] sm:$0xf]
    %v1170 = vld [vmem:[%s1159 + $0x50] sm:$0xf]
    %v1171 = vld [vmem:[%s1159 + $0x58] sm:$0xf]
    %v1172 = vrot.slane %v272, 7
    %v1173 = vsel %vm52, %v1172, 0
    %v1176 = vsel %vm62, %v1168, 0
    %v1179 = vsel %vm62, %v1169, 0
    %v1182 = vsel %vm62, %v1170, 0
    %v1185 = vsel %vm62, %v1171, 0
    %1187 = vmatpush.msra.mxu0 0.0
    %1188 = vmatpush.msra.mxu0 0.0
    %1189 = vmatpush.msra.mxu0 0.0
    %1190 = vmatpush.msra.mxu0 0.0
    %1191 = vmatpush.msra.mxu0 0.0
    %1192 = vmatpush.msra.mxu0 0.0
    %1193 = vmatpush.msra.mxu0 0.0
    %1194 = vmatpush.msra.mxu0 0.0
    %1195 = vmatpush.msra.mxu0 0.0
    %1196 = vmatpush.msra.mxu0 0.0
    %1197 = vmatpush.msra.mxu0 0.0
    %1198 = vmatpush.msra.mxu0 0.0
    %1199 = vmatpush.msra.mxu0 0.0
    %1200 = vmatpush.msra.mxu0 %v1176
    %1201 = vmatpush.msra.mxu0 %v1164
    %1202 = vmatpush.msra.mxu0 %v1160
    %1203 = vmatmul.f32.gmra.mxu0 %v1173
    %v1204 = vpop.f32.mrf.mxu0
    %v1205 = vadd.f32 0.0, %v1204
    %1206 = vdwg.mxu0
    %1207 = vmatpush.msra.mxu0 0.0
    %1208 = vmatpush.msra.mxu0 0.0
    %1209 = vmatpush.msra.mxu0 0.0
    %1210 = vmatpush.msra.mxu0 0.0
    %1211 = vmatpush.msra.mxu0 0.0
    %1212 = vmatpush.msra.mxu0 0.0
    %1213 = vmatpush.msra.mxu0 0.0
    %1214 = vmatpush.msra.mxu0 0.0
    %1215 = vmatpush.msra.mxu0 0.0
    %1216 = vmatpush.msra.mxu0 0.0
    %1217 = vmatpush.msra.mxu0 0.0
    %1218 = vmatpush.msra.mxu0 0.0
    %1219 = vmatpush.msra.mxu0 0.0
    %1220 = vmatpush.msra.mxu0 %v1179
    %1221 = vmatpush.msra.mxu0 %v1165
    %1222 = vmatpush.msra.mxu0 %v1161
    %1223 = vmatmul.f32.gmra.mxu0 %v1173
    %v1224 = vpop.f32.mrf.mxu0
    %v1225 = vadd.f32 0.0, %v1224
    %1226 = vdwg.mxu0
    %1227 = vmatpush.msra.mxu0 0.0
    %1228 = vmatpush.msra.mxu0 0.0
    %1229 = vmatpush.msra.mxu0 0.0
    %1230 = vmatpush.msra.mxu0 0.0
    %1231 = vmatpush.msra.mxu0 0.0
    %1232 = vmatpush.msra.mxu0 0.0
    %1233 = vmatpush.msra.mxu0 0.0
    %1234 = vmatpush.msra.mxu0 0.0
    %1235 = vmatpush.msra.mxu0 0.0
    %1236 = vmatpush.msra.mxu0 0.0
    %1237 = vmatpush.msra.mxu0 0.0
    %1238 = vmatpush.msra.mxu0 0.0
    %1239 = vmatpush.msra.mxu0 0.0
    %1240 = vmatpush.msra.mxu0 %v1182
    %1241 = vmatpush.msra.mxu0 %v1166
    %1242 = vmatpush.msra.mxu0 %v1162
    %1243 = vmatmul.f32.gmra.mxu0 %v1173
    %v1244 = vpop.f32.mrf.mxu0
    %v1245 = vadd.f32 0.0, %v1244
    %1246 = vdwg.mxu0
    %1247 = vmatpush.msra.mxu0 0.0
    %1248 = vmatpush.msra.mxu0 0.0
    %1249 = vmatpush.msra.mxu0 0.0
    %1250 = vmatpush.msra.mxu0 0.0
    %1251 = vmatpush.msra.mxu0 0.0
    %1252 = vmatpush.msra.mxu0 0.0
    %1253 = vmatpush.msra.mxu0 0.0
    %1254 = vmatpush.msra.mxu0 0.0
    %1255 = vmatpush.msra.mxu0 0.0
    %1256 = vmatpush.msra.mxu0 0.0
    %1257 = vmatpush.msra.mxu0 0.0
    %1258 = vmatpush.msra.mxu0 0.0
    %1259 = vmatpush.msra.mxu0 0.0
    %1260 = vmatpush.msra.mxu0 %v1185
    %1261 = vmatpush.msra.mxu0 %v1167
    %1262 = vmatpush.msra.mxu0 %v1163
    %1263 = vmatmul.f32.gmra.mxu0 %v1173
    %v1264 = vpop.f32.mrf.mxu0
    %v1265 = vadd.f32 0.0, %v1264
    %1266 = vdwg.mxu0
    %v1267 = vrot.slane %v272, 3
    %v1268 = vsel %vm52, %v1267, 0
    %v1271 = vsel %vm62, %v546, 0
    %v1274 = vsel %vm62, %v547, 0
    %v1277 = vsel %vm62, %v548, 0
    %v1280 = vsel %vm62, %v549, 0
    %1282 = vmatpush.msra.mxu0 0.0
    %1283 = vmatpush.msra.mxu0 0.0
    %1284 = vmatpush.msra.mxu0 0.0
    %1285 = vmatpush.msra.mxu0 0.0
    %1286 = vmatpush.msra.mxu0 0.0
    %1287 = vmatpush.msra.mxu0 0.0
    %1288 = vmatpush.msra.mxu0 0.0
    %1289 = vmatpush.msra.mxu0 0.0
    %1290 = vmatpush.msra.mxu0 0.0
    %1291 = vmatpush.msra.mxu0 0.0
    %1292 = vmatpush.msra.mxu0 0.0
    %1293 = vmatpush.msra.mxu0 0.0
    %1294 = vmatpush.msra.mxu0 0.0
    %1295 = vmatpush.msra.mxu0 %v1271
    %1296 = vmatpush.msra.mxu0 %v542
    %1297 = vmatpush.msra.mxu0 %v538
    %1298 = vmatmul.f32.gmra.mxu0 %v1268
    %v1299 = vpop.f32.mrf.mxu0
    %v1300 = vadd.f32 %v1205, %v1299
    %1301 = vdwg.mxu0
    %1302 = vmatpush.msra.mxu0 0.0
    %1303 = vmatpush.msra.mxu0 0.0
    %1304 = vmatpush.msra.mxu0 0.0
    %1305 = vmatpush.msra.mxu0 0.0
    %1306 = vmatpush.msra.mxu0 0.0
    %1307 = vmatpush.msra.mxu0 0.0
    %1308 = vmatpush.msra.mxu0 0.0
    %1309 = vmatpush.msra.mxu0 0.0
    %1310 = vmatpush.msra.mxu0 0.0
    %1311 = vmatpush.msra.mxu0 0.0
    %1312 = vmatpush.msra.mxu0 0.0
    %1313 = vmatpush.msra.mxu0 0.0
    %1314 = vmatpush.msra.mxu0 0.0
    %1315 = vmatpush.msra.mxu0 %v1274
    %1316 = vmatpush.msra.mxu0 %v543
    %1317 = vmatpush.msra.mxu0 %v539
    %1318 = vmatmul.f32.gmra.mxu0 %v1268
    %v1319 = vpop.f32.mrf.mxu0
    %v1320 = vadd.f32 %v1225, %v1319
    %1321 = vdwg.mxu0
    %1322 = vmatpush.msra.mxu0 0.0
    %1323 = vmatpush.msra.mxu0 0.0
    %1324 = vmatpush.msra.mxu0 0.0
    %1325 = vmatpush.msra.mxu0 0.0
    %1326 = vmatpush.msra.mxu0 0.0
    %1327 = vmatpush.msra.mxu0 0.0
    %1328 = vmatpush.msra.mxu0 0.0
    %1329 = vmatpush.msra.mxu0 0.0
    %1330 = vmatpush.msra.mxu0 0.0
    %1331 = vmatpush.msra.mxu0 0.0
    %1332 = vmatpush.msra.mxu0 0.0
    %1333 = vmatpush.msra.mxu0 0.0
    %1334 = vmatpush.msra.mxu0 0.0
    %1335 = vmatpush.msra.mxu0 %v1277
    %1336 = vmatpush.msra.mxu0 %v544
    %1337 = vmatpush.msra.mxu0 %v540
    %1338 = vmatmul.f32.gmra.mxu0 %v1268
    %v1339 = vpop.f32.mrf.mxu0
    %v1340 = vadd.f32 %v1245, %v1339
    %1341 = vdwg.mxu0
    %1342 = vmatpush.msra.mxu0 0.0
    %1343 = vmatpush.msra.mxu0 0.0
    %1344 = vmatpush.msra.mxu0 0.0
    %1345 = vmatpush.msra.mxu0 0.0
    %1346 = vmatpush.msra.mxu0 0.0
    %1347 = vmatpush.msra.mxu0 0.0
    %1348 = vmatpush.msra.mxu0 0.0
    %1349 = vmatpush.msra.mxu0 0.0
    %1350 = vmatpush.msra.mxu0 0.0
    %1351 = vmatpush.msra.mxu0 0.0
    %1352 = vmatpush.msra.mxu0 0.0
    %1353 = vmatpush.msra.mxu0 0.0
    %1354 = vmatpush.msra.mxu0 0.0
    %1355 = vmatpush.msra.mxu0 %v1280
    %1356 = vmatpush.msra.mxu0 %v545
    %1357 = vmatpush.msra.mxu0 %v541
    %1358 = vmatmul.f32.gmra.mxu0 %v1268
    %v1359 = vpop.f32.mrf.mxu0
    %v1360 = vadd.f32 %v1265, %v1359
    %1361 = vdwg.mxu0
    %s1362 = scalar_lea.vmem [#allocation2], 768
    %v1363 = vld [vmem:[%s1362] sm:$0xff]
    %v1364 = vld [vmem:[%s1362 + $0x8] sm:$0xff]
    %v1365 = vld [vmem:[%s1362 + $0x10] sm:$0xff]
    %v1366 = vld [vmem:[%s1362 + $0x18] sm:$0xff]
    %v1367 = vld [vmem:[%s1362 + $0x20] sm:$0xff]
    %v1368 = vld [vmem:[%s1362 + $0x28] sm:$0xff]
    %v1369 = vld [vmem:[%s1362 + $0x30] sm:$0xff]
    %v1370 = vld [vmem:[%s1362 + $0x38] sm:$0xff]
    %v1371 = vld [vmem:[%s1362 + $0x40] sm:$0xf]
    %v1372 = vld [vmem:[%s1362 + $0x48] sm:$0xf]
    %v1373 = vld [vmem:[%s1362 + $0x50] sm:$0xf]
    %v1374 = vld [vmem:[%s1362 + $0x58] sm:$0xf]
    %v1376 = vsel %vm52, %v273, 0
    %v1379 = vsel %vm62, %v1371, 0
    %v1382 = vsel %vm62, %v1372, 0
    %v1385 = vsel %vm62, %v1373, 0
    %v1388 = vsel %vm62, %v1374, 0
    %1390 = vmatpush.msra.mxu0 0.0
    %1391 = vmatpush.msra.mxu0 0.0
    %1392 = vmatpush.msra.mxu0 0.0
    %1393 = vmatpush.msra.mxu0 0.0
    %1394 = vmatpush.msra.mxu0 0.0
    %1395 = vmatpush.msra.mxu0 0.0
    %1396 = vmatpush.msra.mxu0 0.0
    %1397 = vmatpush.msra.mxu0 0.0
    %1398 = vmatpush.msra.mxu0 0.0
    %1399 = vmatpush.msra.mxu0 0.0
    %1400 = vmatpush.msra.mxu0 0.0
    %1401 = vmatpush.msra.mxu0 0.0
    %1402 = vmatpush.msra.mxu0 0.0
    %1403 = vmatpush.msra.mxu0 %v1379
    %1404 = vmatpush.msra.mxu0 %v1367
    %1405 = vmatpush.msra.mxu0 %v1363
    %1406 = vmatmul.f32.gmra.mxu0 %v1376
    %v1407 = vpop.f32.mrf.mxu0
    %v1408 = vadd.f32 0.0, %v1407
    %1409 = vdwg.mxu0
    %1410 = vmatpush.msra.mxu0 0.0
    %1411 = vmatpush.msra.mxu0 0.0
    %1412 = vmatpush.msra.mxu0 0.0
    %1413 = vmatpush.msra.mxu0 0.0
    %1414 = vmatpush.msra.mxu0 0.0
    %1415 = vmatpush.msra.mxu0 0.0
    %1416 = vmatpush.msra.mxu0 0.0
    %1417 = vmatpush.msra.mxu0 0.0
    %1418 = vmatpush.msra.mxu0 0.0
    %1419 = vmatpush.msra.mxu0 0.0
    %1420 = vmatpush.msra.mxu0 0.0
    %1421 = vmatpush.msra.mxu0 0.0
    %1422 = vmatpush.msra.mxu0 0.0
    %1423 = vmatpush.msra.mxu0 %v1382
    %1424 = vmatpush.msra.mxu0 %v1368
    %1425 = vmatpush.msra.mxu0 %v1364
    %1426 = vmatmul.f32.gmra.mxu0 %v1376
    %v1427 = vpop.f32.mrf.mxu0
    %v1428 = vadd.f32 0.0, %v1427
    %1429 = vdwg.mxu0
    %1430 = vmatpush.msra.mxu0 0.0
    %1431 = vmatpush.msra.mxu0 0.0
    %1432 = vmatpush.msra.mxu0 0.0
    %1433 = vmatpush.msra.mxu0 0.0
    %1434 = vmatpush.msra.mxu0 0.0
    %1435 = vmatpush.msra.mxu0 0.0
    %1436 = vmatpush.msra.mxu0 0.0
    %1437 = vmatpush.msra.mxu0 0.0
    %1438 = vmatpush.msra.mxu0 0.0
    %1439 = vmatpush.msra.mxu0 0.0
    %1440 = vmatpush.msra.mxu0 0.0
    %1441 = vmatpush.msra.mxu0 0.0
    %1442 = vmatpush.msra.mxu0 0.0
    %1443 = vmatpush.msra.mxu0 %v1385
    %1444 = vmatpush.msra.mxu0 %v1369
    %1445 = vmatpush.msra.mxu0 %v1365
    %1446 = vmatmul.f32.gmra.mxu0 %v1376
    %v1447 = vpop.f32.mrf.mxu0
    %v1448 = vadd.f32 0.0, %v1447
    %1449 = vdwg.mxu0
    %1450 = vmatpush.msra.mxu0 0.0
    %1451 = vmatpush.msra.mxu0 0.0
    %1452 = vmatpush.msra.mxu0 0.0
    %1453 = vmatpush.msra.mxu0 0.0
    %1454 = vmatpush.msra.mxu0 0.0
    %1455 = vmatpush.msra.mxu0 0.0
    %1456 = vmatpush.msra.mxu0 0.0
    %1457 = vmatpush.msra.mxu0 0.0
    %1458 = vmatpush.msra.mxu0 0.0
    %1459 = vmatpush.msra.mxu0 0.0
    %1460 = vmatpush.msra.mxu0 0.0
    %1461 = vmatpush.msra.mxu0 0.0
    %1462 = vmatpush.msra.mxu0 0.0
    %1463 = vmatpush.msra.mxu0 %v1388
    %1464 = vmatpush.msra.mxu0 %v1370
    %1465 = vmatpush.msra.mxu0 %v1366
    %1466 = vmatmul.f32.gmra.mxu0 %v1376
    %v1467 = vpop.f32.mrf.mxu0
    %v1468 = vadd.f32 0.0, %v1467
    %1469 = vdwg.mxu0
    %v1470 = vadd.f32 %v691, %v1408
    %v1471 = vadd.f32 %v711, %v1428
    %v1472 = vadd.f32 %v731, %v1448
    %v1473 = vadd.f32 %v751, %v1468
    %s1474 = scalar_lea.vmem [#allocation2], 864
    %v1475 = vld [vmem:[%s1474] sm:$0xff]
    %v1476 = vld [vmem:[%s1474 + $0x8] sm:$0xff]
    %v1477 = vld [vmem:[%s1474 + $0x10] sm:$0xff]
    %v1478 = vld [vmem:[%s1474 + $0x18] sm:$0xff]
    %v1479 = vld [vmem:[%s1474 + $0x20] sm:$0xff]
    %v1480 = vld [vmem:[%s1474 + $0x28] sm:$0xff]
    %v1481 = vld [vmem:[%s1474 + $0x30] sm:$0xff]
    %v1482 = vld [vmem:[%s1474 + $0x38] sm:$0xff]
    %v1483 = vld [vmem:[%s1474 + $0x40] sm:$0xf]
    %v1484 = vld [vmem:[%s1474 + $0x48] sm:$0xf]
    %v1485 = vld [vmem:[%s1474 + $0x50] sm:$0xf]
    %v1486 = vld [vmem:[%s1474 + $0x58] sm:$0xf]
    %v1487 = vrot.slane %v273, 1
    %v1488 = vsel %vm52, %v1487, 0
    %v1491 = vsel %vm62, %v1483, 0
    %v1494 = vsel %vm62, %v1484, 0
    %v1497 = vsel %vm62, %v1485, 0
    %v1500 = vsel %vm62, %v1486, 0
    %1502 = vmatpush.msra.mxu0 0.0
    %1503 = vmatpush.msra.mxu0 0.0
    %1504 = vmatpush.msra.mxu0 0.0
    %1505 = vmatpush.msra.mxu0 0.0
    %1506 = vmatpush.msra.mxu0 0.0
    %1507 = vmatpush.msra.mxu0 0.0
    %1508 = vmatpush.msra.mxu0 0.0
    %1509 = vmatpush.msra.mxu0 0.0
    %1510 = vmatpush.msra.mxu0 0.0
    %1511 = vmatpush.msra.mxu0 0.0
    %1512 = vmatpush.msra.mxu0 0.0
    %1513 = vmatpush.msra.mxu0 0.0
    %1514 = vmatpush.msra.mxu0 0.0
    %1515 = vmatpush.msra.mxu0 %v1491
    %1516 = vmatpush.msra.mxu0 %v1479
    %1517 = vmatpush.msra.mxu0 %v1475
    %1518 = vmatmul.f32.gmra.mxu0 %v1488
    %v1519 = vpop.f32.mrf.mxu0
    %v1520 = vadd.f32 0.0, %v1519
    %1521 = vdwg.mxu0
    %1522 = vmatpush.msra.mxu0 0.0
    %1523 = vmatpush.msra.mxu0 0.0
    %1524 = vmatpush.msra.mxu0 0.0
    %1525 = vmatpush.msra.mxu0 0.0
    %1526 = vmatpush.msra.mxu0 0.0
    %1527 = vmatpush.msra.mxu0 0.0
    %1528 = vmatpush.msra.mxu0 0.0
    %1529 = vmatpush.msra.mxu0 0.0
    %1530 = vmatpush.msra.mxu0 0.0
    %1531 = vmatpush.msra.mxu0 0.0
    %1532 = vmatpush.msra.mxu0 0.0
    %1533 = vmatpush.msra.mxu0 0.0
    %1534 = vmatpush.msra.mxu0 0.0
    %1535 = vmatpush.msra.mxu0 %v1494
    %1536 = vmatpush.msra.mxu0 %v1480
    %1537 = vmatpush.msra.mxu0 %v1476
    %1538 = vmatmul.f32.gmra.mxu0 %v1488
    %v1539 = vpop.f32.mrf.mxu0
    %v1540 = vadd.f32 0.0, %v1539
    %1541 = vdwg.mxu0
    %1542 = vmatpush.msra.mxu0 0.0
    %1543 = vmatpush.msra.mxu0 0.0
    %1544 = vmatpush.msra.mxu0 0.0
    %1545 = vmatpush.msra.mxu0 0.0
    %1546 = vmatpush.msra.mxu0 0.0
    %1547 = vmatpush.msra.mxu0 0.0
    %1548 = vmatpush.msra.mxu0 0.0
    %1549 = vmatpush.msra.mxu0 0.0
    %1550 = vmatpush.msra.mxu0 0.0
    %1551 = vmatpush.msra.mxu0 0.0
    %1552 = vmatpush.msra.mxu0 0.0
    %1553 = vmatpush.msra.mxu0 0.0
    %1554 = vmatpush.msra.mxu0 0.0
    %1555 = vmatpush.msra.mxu0 %v1497
    %1556 = vmatpush.msra.mxu0 %v1481
    %1557 = vmatpush.msra.mxu0 %v1477
    %1558 = vmatmul.f32.gmra.mxu0 %v1488
    %v1559 = vpop.f32.mrf.mxu0
    %v1560 = vadd.f32 0.0, %v1559
    %1561 = vdwg.mxu0
    %1562 = vmatpush.msra.mxu0 0.0
    %1563 = vmatpush.msra.mxu0 0.0
    %1564 = vmatpush.msra.mxu0 0.0
    %1565 = vmatpush.msra.mxu0 0.0
    %1566 = vmatpush.msra.mxu0 0.0
    %1567 = vmatpush.msra.mxu0 0.0
    %1568 = vmatpush.msra.mxu0 0.0
    %1569 = vmatpush.msra.mxu0 0.0
    %1570 = vmatpush.msra.mxu0 0.0
    %1571 = vmatpush.msra.mxu0 0.0
    %1572 = vmatpush.msra.mxu0 0.0
    %1573 = vmatpush.msra.mxu0 0.0
    %1574 = vmatpush.msra.mxu0 0.0
    %1575 = vmatpush.msra.mxu0 %v1500
    %1576 = vmatpush.msra.mxu0 %v1482
    %1577 = vmatpush.msra.mxu0 %v1478
    %1578 = vmatmul.f32.gmra.mxu0 %v1488
    %v1579 = vpop.f32.mrf.mxu0
    %v1580 = vadd.f32 0.0, %v1579
    %1581 = vdwg.mxu0
    %v1582 = vadd.f32 %v894, %v1520
    %v1583 = vadd.f32 %v914, %v1540
    %v1584 = vadd.f32 %v934, %v1560
    %v1585 = vadd.f32 %v954, %v1580
    %s1586 = scalar_lea.vmem [#allocation2], 960
    %v1587 = vld [vmem:[%s1586] sm:$0xff]
    %v1588 = vld [vmem:[%s1586 + $0x8] sm:$0xff]
    %v1589 = vld [vmem:[%s1586 + $0x10] sm:$0xff]
    %v1590 = vld [vmem:[%s1586 + $0x18] sm:$0xff]
    %v1591 = vld [vmem:[%s1586 + $0x20] sm:$0xff]
    %v1592 = vld [vmem:[%s1586 + $0x28] sm:$0xff]
    %v1593 = vld [vmem:[%s1586 + $0x30] sm:$0xff]
    %v1594 = vld [vmem:[%s1586 + $0x38] sm:$0xff]
    %v1595 = vld [vmem:[%s1586 + $0x40] sm:$0xf]
    %v1596 = vld [vmem:[%s1586 + $0x48] sm:$0xf]
    %v1597 = vld [vmem:[%s1586 + $0x50] sm:$0xf]
    %v1598 = vld [vmem:[%s1586 + $0x58] sm:$0xf]
    %v1599 = vrot.slane %v273, 2
    %v1600 = vsel %vm52, %v1599, 0
    %v1603 = vsel %vm62, %v1595, 0
    %v1606 = vsel %vm62, %v1596, 0
    %v1609 = vsel %vm62, %v1597, 0
    %v1612 = vsel %vm62, %v1598, 0
    %1614 = vmatpush.msra.mxu0 0.0
    %1615 = vmatpush.msra.mxu0 0.0
    %1616 = vmatpush.msra.mxu0 0.0
    %1617 = vmatpush.msra.mxu0 0.0
    %1618 = vmatpush.msra.mxu0 0.0
    %1619 = vmatpush.msra.mxu0 0.0
    %1620 = vmatpush.msra.mxu0 0.0
    %1621 = vmatpush.msra.mxu0 0.0
    %1622 = vmatpush.msra.mxu0 0.0
    %1623 = vmatpush.msra.mxu0 0.0
    %1624 = vmatpush.msra.mxu0 0.0
    %1625 = vmatpush.msra.mxu0 0.0
    %1626 = vmatpush.msra.mxu0 0.0
    %1627 = vmatpush.msra.mxu0 %v1603
    %1628 = vmatpush.msra.mxu0 %v1591
    %1629 = vmatpush.msra.mxu0 %v1587
    %1630 = vmatmul.f32.gmra.mxu0 %v1600
    %v1631 = vpop.f32.mrf.mxu0
    %v1632 = vadd.f32 0.0, %v1631
    %1633 = vdwg.mxu0
    %1634 = vmatpush.msra.mxu0 0.0
    %1635 = vmatpush.msra.mxu0 0.0
    %1636 = vmatpush.msra.mxu0 0.0
    %1637 = vmatpush.msra.mxu0 0.0
    %1638 = vmatpush.msra.mxu0 0.0
    %1639 = vmatpush.msra.mxu0 0.0
    %1640 = vmatpush.msra.mxu0 0.0
    %1641 = vmatpush.msra.mxu0 0.0
    %1642 = vmatpush.msra.mxu0 0.0
    %1643 = vmatpush.msra.mxu0 0.0
    %1644 = vmatpush.msra.mxu0 0.0
    %1645 = vmatpush.msra.mxu0 0.0
    %1646 = vmatpush.msra.mxu0 0.0
    %1647 = vmatpush.msra.mxu0 %v1606
    %1648 = vmatpush.msra.mxu0 %v1592
    %1649 = vmatpush.msra.mxu0 %v1588
    %1650 = vmatmul.f32.gmra.mxu0 %v1600
    %v1651 = vpop.f32.mrf.mxu0
    %v1652 = vadd.f32 0.0, %v1651
    %1653 = vdwg.mxu0
    %1654 = vmatpush.msra.mxu0 0.0
    %1655 = vmatpush.msra.mxu0 0.0
    %1656 = vmatpush.msra.mxu0 0.0
    %1657 = vmatpush.msra.mxu0 0.0
    %1658 = vmatpush.msra.mxu0 0.0
    %1659 = vmatpush.msra.mxu0 0.0
    %1660 = vmatpush.msra.mxu0 0.0
    %1661 = vmatpush.msra.mxu0 0.0
    %1662 = vmatpush.msra.mxu0 0.0
    %1663 = vmatpush.msra.mxu0 0.0
    %1664 = vmatpush.msra.mxu0 0.0
    %1665 = vmatpush.msra.mxu0 0.0
    %1666 = vmatpush.msra.mxu0 0.0
    %1667 = vmatpush.msra.mxu0 %v1609
    %1668 = vmatpush.msra.mxu0 %v1593
    %1669 = vmatpush.msra.mxu0 %v1589
    %1670 = vmatmul.f32.gmra.mxu0 %v1600
    %v1671 = vpop.f32.mrf.mxu0
    %v1672 = vadd.f32 0.0, %v1671
    %1673 = vdwg.mxu0
    %1674 = vmatpush.msra.mxu0 0.0
    %1675 = vmatpush.msra.mxu0 0.0
    %1676 = vmatpush.msra.mxu0 0.0
    %1677 = vmatpush.msra.mxu0 0.0
    %1678 = vmatpush.msra.mxu0 0.0
    %1679 = vmatpush.msra.mxu0 0.0
    %1680 = vmatpush.msra.mxu0 0.0
    %1681 = vmatpush.msra.mxu0 0.0
    %1682 = vmatpush.msra.mxu0 0.0
    %1683 = vmatpush.msra.mxu0 0.0
    %1684 = vmatpush.msra.mxu0 0.0
    %1685 = vmatpush.msra.mxu0 0.0
    %1686 = vmatpush.msra.mxu0 0.0
    %1687 = vmatpush.msra.mxu0 %v1612
    %1688 = vmatpush.msra.mxu0 %v1594
    %1689 = vmatpush.msra.mxu0 %v1590
    %1690 = vmatmul.f32.gmra.mxu0 %v1600
    %v1691 = vpop.f32.mrf.mxu0
    %v1692 = vadd.f32 0.0, %v1691
    %1693 = vdwg.mxu0
    %v1694 = vadd.f32 %v1097, %v1632
    %v1695 = vadd.f32 %v1117, %v1652
    %v1696 = vadd.f32 %v1137, %v1672
    %v1697 = vadd.f32 %v1157, %v1692
    %s1698 = scalar_lea.vmem [#allocation2], 1056
    %v1699 = vld [vmem:[%s1698] sm:$0xff]
    %v1700 = vld [vmem:[%s1698 + $0x8] sm:$0xff]
    %v1701 = vld [vmem:[%s1698 + $0x10] sm:$0xff]
    %v1702 = vld [vmem:[%s1698 + $0x18] sm:$0xff]
    %v1703 = vld [vmem:[%s1698 + $0x20] sm:$0xff]
    %v1704 = vld [vmem:[%s1698 + $0x28] sm:$0xff]
    %v1705 = vld [vmem:[%s1698 + $0x30] sm:$0xff]
    %v1706 = vld [vmem:[%s1698 + $0x38] sm:$0xff]
    %v1707 = vld [vmem:[%s1698 + $0x40] sm:$0xf]
    %v1708 = vld [vmem:[%s1698 + $0x48] sm:$0xf]
    %v1709 = vld [vmem:[%s1698 + $0x50] sm:$0xf]
    %v1710 = vld [vmem:[%s1698 + $0x58] sm:$0xf]
    %v1711 = vrot.slane %v273, 3
    %v1712 = vsel %vm52, %v1711, 0
    %v1715 = vsel %vm62, %v1707, 0
    %v1718 = vsel %vm62, %v1708, 0
    %v1721 = vsel %vm62, %v1709, 0
    %v1724 = vsel %vm62, %v1710, 0
    %1726 = vmatpush.msra.mxu0 0.0
    %1727 = vmatpush.msra.mxu0 0.0
    %1728 = vmatpush.msra.mxu0 0.0
    %1729 = vmatpush.msra.mxu0 0.0
    %1730 = vmatpush.msra.mxu0 0.0
    %1731 = vmatpush.msra.mxu0 0.0
    %1732 = vmatpush.msra.mxu0 0.0
    %1733 = vmatpush.msra.mxu0 0.0
    %1734 = vmatpush.msra.mxu0 0.0
    %1735 = vmatpush.msra.mxu0 0.0
    %1736 = vmatpush.msra.mxu0 0.0
    %1737 = vmatpush.msra.mxu0 0.0
    %1738 = vmatpush.msra.mxu0 0.0
    %1739 = vmatpush.msra.mxu0 %v1715
    %1740 = vmatpush.msra.mxu0 %v1703
    %1741 = vmatpush.msra.mxu0 %v1699
    %1742 = vmatmul.f32.gmra.mxu0 %v1712
    %v1743 = vpop.f32.mrf.mxu0
    %v1744 = vadd.f32 0.0, %v1743
    %1745 = vdwg.mxu0
    %1746 = vmatpush.msra.mxu0 0.0
    %1747 = vmatpush.msra.mxu0 0.0
    %1748 = vmatpush.msra.mxu0 0.0
    %1749 = vmatpush.msra.mxu0 0.0
    %1750 = vmatpush.msra.mxu0 0.0
    %1751 = vmatpush.msra.mxu0 0.0
    %1752 = vmatpush.msra.mxu0 0.0
    %1753 = vmatpush.msra.mxu0 0.0
    %1754 = vmatpush.msra.mxu0 0.0
    %1755 = vmatpush.msra.mxu0 0.0
    %1756 = vmatpush.msra.mxu0 0.0
    %1757 = vmatpush.msra.mxu0 0.0
    %1758 = vmatpush.msra.mxu0 0.0
    %1759 = vmatpush.msra.mxu0 %v1718
    %1760 = vmatpush.msra.mxu0 %v1704
    %1761 = vmatpush.msra.mxu0 %v1700
    %1762 = vmatmul.f32.gmra.mxu0 %v1712
    %v1763 = vpop.f32.mrf.mxu0
    %v1764 = vadd.f32 0.0, %v1763
    %1765 = vdwg.mxu0
    %1766 = vmatpush.msra.mxu0 0.0
    %1767 = vmatpush.msra.mxu0 0.0
    %1768 = vmatpush.msra.mxu0 0.0
    %1769 = vmatpush.msra.mxu0 0.0
    %1770 = vmatpush.msra.mxu0 0.0
    %1771 = vmatpush.msra.mxu0 0.0
    %1772 = vmatpush.msra.mxu0 0.0
    %1773 = vmatpush.msra.mxu0 0.0
    %1774 = vmatpush.msra.mxu0 0.0
    %1775 = vmatpush.msra.mxu0 0.0
    %1776 = vmatpush.msra.mxu0 0.0
    %1777 = vmatpush.msra.mxu0 0.0
    %1778 = vmatpush.msra.mxu0 0.0
    %1779 = vmatpush.msra.mxu0 %v1721
    %1780 = vmatpush.msra.mxu0 %v1705
    %1781 = vmatpush.msra.mxu0 %v1701
    %1782 = vmatmul.f32.gmra.mxu0 %v1712
    %v1783 = vpop.f32.mrf.mxu0
    %v1784 = vadd.f32 0.0, %v1783
    %1785 = vdwg.mxu0
    %1786 = vmatpush.msra.mxu0 0.0
    %1787 = vmatpush.msra.mxu0 0.0
    %1788 = vmatpush.msra.mxu0 0.0
    %1789 = vmatpush.msra.mxu0 0.0
    %1790 = vmatpush.msra.mxu0 0.0
    %1791 = vmatpush.msra.mxu0 0.0
    %1792 = vmatpush.msra.mxu0 0.0
    %1793 = vmatpush.msra.mxu0 0.0
    %1794 = vmatpush.msra.mxu0 0.0
    %1795 = vmatpush.msra.mxu0 0.0
    %1796 = vmatpush.msra.mxu0 0.0
    %1797 = vmatpush.msra.mxu0 0.0
    %1798 = vmatpush.msra.mxu0 0.0
    %1799 = vmatpush.msra.mxu0 %v1724
    %1800 = vmatpush.msra.mxu0 %v1706
    %1801 = vmatpush.msra.mxu0 %v1702
    %1802 = vmatmul.f32.gmra.mxu0 %v1712
    %v1803 = vpop.f32.mrf.mxu0
    %v1804 = vadd.f32 0.0, %v1803
    %1805 = vdwg.mxu0
    %v1806 = vadd.f32 %v1300, %v1744
    %v1807 = vadd.f32 %v1320, %v1764
    %v1808 = vadd.f32 %v1340, %v1784
    %v1809 = vadd.f32 %v1360, %v1804
    %s1810 = scalar_lea.vmem [#allocation2], 1152
    %v1811 = vld [vmem:[%s1810] sm:$0xff]
    %v1812 = vld [vmem:[%s1810 + $0x8] sm:$0xff]
    %v1813 = vld [vmem:[%s1810 + $0x10] sm:$0xff]
    %v1814 = vld [vmem:[%s1810 + $0x18] sm:$0xff]
    %v1815 = vld [vmem:[%s1810 + $0x20] sm:$0xff]
    %v1816 = vld [vmem:[%s1810 + $0x28] sm:$0xff]
    %v1817 = vld [vmem:[%s1810 + $0x30] sm:$0xff]
    %v1818 = vld [vmem:[%s1810 + $0x38] sm:$0xff]
    %v1819 = vld [vmem:[%s1810 + $0x40] sm:$0xf]
    %v1820 = vld [vmem:[%s1810 + $0x48] sm:$0xf]
    %v1821 = vld [vmem:[%s1810 + $0x50] sm:$0xf]
    %v1822 = vld [vmem:[%s1810 + $0x58] sm:$0xf]
    %v1823 = vrot.slane %v273, 4
    %v1824 = vsel %vm52, %v1823, 0
    %v1827 = vsel %vm62, %v1819, 0
    %v1830 = vsel %vm62, %v1820, 0
    %v1833 = vsel %vm62, %v1821, 0
    %v1836 = vsel %vm62, %v1822, 0
    %1838 = vmatpush.msra.mxu0 0.0
    %1839 = vmatpush.msra.mxu0 0.0
    %1840 = vmatpush.msra.mxu0 0.0
    %1841 = vmatpush.msra.mxu0 0.0
    %1842 = vmatpush.msra.mxu0 0.0
    %1843 = vmatpush.msra.mxu0 0.0
    %1844 = vmatpush.msra.mxu0 0.0
    %1845 = vmatpush.msra.mxu0 0.0
    %1846 = vmatpush.msra.mxu0 0.0
    %1847 = vmatpush.msra.mxu0 0.0
    %1848 = vmatpush.msra.mxu0 0.0
    %1849 = vmatpush.msra.mxu0 0.0
    %1850 = vmatpush.msra.mxu0 0.0
    %1851 = vmatpush.msra.mxu0 %v1827
    %1852 = vmatpush.msra.mxu0 %v1815
    %1853 = vmatpush.msra.mxu0 %v1811
    %1854 = vmatmul.f32.gmra.mxu0 %v1824
    %v1855 = vpop.f32.mrf.mxu0
    %v1856 = vadd.f32 0.0, %v1855
    %1857 = vdwg.mxu0
    %1858 = vmatpush.msra.mxu0 0.0
    %1859 = vmatpush.msra.mxu0 0.0
    %1860 = vmatpush.msra.mxu0 0.0
    %1861 = vmatpush.msra.mxu0 0.0
    %1862 = vmatpush.msra.mxu0 0.0
    %1863 = vmatpush.msra.mxu0 0.0
    %1864 = vmatpush.msra.mxu0 0.0
    %1865 = vmatpush.msra.mxu0 0.0
    %1866 = vmatpush.msra.mxu0 0.0
    %1867 = vmatpush.msra.mxu0 0.0
    %1868 = vmatpush.msra.mxu0 0.0
    %1869 = vmatpush.msra.mxu0 0.0
    %1870 = vmatpush.msra.mxu0 0.0
    %1871 = vmatpush.msra.mxu0 %v1830
    %1872 = vmatpush.msra.mxu0 %v1816
    %1873 = vmatpush.msra.mxu0 %v1812
    %1874 = vmatmul.f32.gmra.mxu0 %v1824
    %v1875 = vpop.f32.mrf.mxu0
    %v1876 = vadd.f32 0.0, %v1875
    %1877 = vdwg.mxu0
    %1878 = vmatpush.msra.mxu0 0.0
    %1879 = vmatpush.msra.mxu0 0.0
    %1880 = vmatpush.msra.mxu0 0.0
    %1881 = vmatpush.msra.mxu0 0.0
    %1882 = vmatpush.msra.mxu0 0.0
    %1883 = vmatpush.msra.mxu0 0.0
    %1884 = vmatpush.msra.mxu0 0.0
    %1885 = vmatpush.msra.mxu0 0.0
    %1886 = vmatpush.msra.mxu0 0.0
    %1887 = vmatpush.msra.mxu0 0.0
    %1888 = vmatpush.msra.mxu0 0.0
    %1889 = vmatpush.msra.mxu0 0.0
    %1890 = vmatpush.msra.mxu0 0.0
    %1891 = vmatpush.msra.mxu0 %v1833
    %1892 = vmatpush.msra.mxu0 %v1817
    %1893 = vmatpush.msra.mxu0 %v1813
    %1894 = vmatmul.f32.gmra.mxu0 %v1824
    %v1895 = vpop.f32.mrf.mxu0
    %v1896 = vadd.f32 0.0, %v1895
    %1897 = vdwg.mxu0
    %1898 = vmatpush.msra.mxu0 0.0
    %1899 = vmatpush.msra.mxu0 0.0
    %1900 = vmatpush.msra.mxu0 0.0
    %1901 = vmatpush.msra.mxu0 0.0
    %1902 = vmatpush.msra.mxu0 0.0
    %1903 = vmatpush.msra.mxu0 0.0
    %1904 = vmatpush.msra.mxu0 0.0
    %1905 = vmatpush.msra.mxu0 0.0
    %1906 = vmatpush.msra.mxu0 0.0
    %1907 = vmatpush.msra.mxu0 0.0
    %1908 = vmatpush.msra.mxu0 0.0
    %1909 = vmatpush.msra.mxu0 0.0
    %1910 = vmatpush.msra.mxu0 0.0
    %1911 = vmatpush.msra.mxu0 %v1836
    %1912 = vmatpush.msra.mxu0 %v1818
    %1913 = vmatpush.msra.mxu0 %v1814
    %1914 = vmatmul.f32.gmra.mxu0 %v1824
    %v1915 = vpop.f32.mrf.mxu0
    %v1916 = vadd.f32 0.0, %v1915
    %1917 = vdwg.mxu0
    %v1918 = vadd.f32 %v1470, %v1856
    %v1919 = vadd.f32 %v1471, %v1876
    %v1920 = vadd.f32 %v1472, %v1896
    %v1921 = vadd.f32 %v1473, %v1916
    %s1922 = scalar_lea.vmem [#allocation2], 1248
    %v1923 = vld [vmem:[%s1922] sm:$0xff]
    %v1924 = vld [vmem:[%s1922 + $0x8] sm:$0xff]
    %v1925 = vld [vmem:[%s1922 + $0x10] sm:$0xff]
    %v1926 = vld [vmem:[%s1922 + $0x18] sm:$0xff]
    %v1927 = vld [vmem:[%s1922 + $0x20] sm:$0xff]
    %v1928 = vld [vmem:[%s1922 + $0x28] sm:$0xff]
    %v1929 = vld [vmem:[%s1922 + $0x30] sm:$0xff]
    %v1930 = vld [vmem:[%s1922 + $0x38] sm:$0xff]
    %v1931 = vld [vmem:[%s1922 + $0x40] sm:$0xf]
    %v1932 = vld [vmem:[%s1922 + $0x48] sm:$0xf]
    %v1933 = vld [vmem:[%s1922 + $0x50] sm:$0xf]
    %v1934 = vld [vmem:[%s1922 + $0x58] sm:$0xf]
    %v1935 = vrot.slane %v273, 5
    %v1936 = vsel %vm52, %v1935, 0
    %v1939 = vsel %vm62, %v1931, 0
    %v1942 = vsel %vm62, %v1932, 0
    %v1945 = vsel %vm62, %v1933, 0
    %v1948 = vsel %vm62, %v1934, 0
    %1950 = vmatpush.msra.mxu0 0.0
    %1951 = vmatpush.msra.mxu0 0.0
    %1952 = vmatpush.msra.mxu0 0.0
    %1953 = vmatpush.msra.mxu0 0.0
    %1954 = vmatpush.msra.mxu0 0.0
    %1955 = vmatpush.msra.mxu0 0.0
    %1956 = vmatpush.msra.mxu0 0.0
    %1957 = vmatpush.msra.mxu0 0.0
    %1958 = vmatpush.msra.mxu0 0.0
    %1959 = vmatpush.msra.mxu0 0.0
    %1960 = vmatpush.msra.mxu0 0.0
    %1961 = vmatpush.msra.mxu0 0.0
    %1962 = vmatpush.msra.mxu0 0.0
    %1963 = vmatpush.msra.mxu0 %v1939
    %1964 = vmatpush.msra.mxu0 %v1927
    %1965 = vmatpush.msra.mxu0 %v1923
    %1966 = vmatmul.f32.gmra.mxu0 %v1936
    %v1967 = vpop.f32.mrf.mxu0
    %v1968 = vadd.f32 0.0, %v1967
    %1969 = vdwg.mxu0
    %1970 = vmatpush.msra.mxu0 0.0
    %1971 = vmatpush.msra.mxu0 0.0
    %1972 = vmatpush.msra.mxu0 0.0
    %1973 = vmatpush.msra.mxu0 0.0
    %1974 = vmatpush.msra.mxu0 0.0
    %1975 = vmatpush.msra.mxu0 0.0
    %1976 = vmatpush.msra.mxu0 0.0
    %1977 = vmatpush.msra.mxu0 0.0
    %1978 = vmatpush.msra.mxu0 0.0
    %1979 = vmatpush.msra.mxu0 0.0
    %1980 = vmatpush.msra.mxu0 0.0
    %1981 = vmatpush.msra.mxu0 0.0
    %1982 = vmatpush.msra.mxu0 0.0
    %1983 = vmatpush.msra.mxu0 %v1942
    %1984 = vmatpush.msra.mxu0 %v1928
    %1985 = vmatpush.msra.mxu0 %v1924
    %1986 = vmatmul.f32.gmra.mxu0 %v1936
    %v1987 = vpop.f32.mrf.mxu0
    %v1988 = vadd.f32 0.0, %v1987
    %1989 = vdwg.mxu0
    %1990 = vmatpush.msra.mxu0 0.0
    %1991 = vmatpush.msra.mxu0 0.0
    %1992 = vmatpush.msra.mxu0 0.0
    %1993 = vmatpush.msra.mxu0 0.0
    %1994 = vmatpush.msra.mxu0 0.0
    %1995 = vmatpush.msra.mxu0 0.0
    %1996 = vmatpush.msra.mxu0 0.0
    %1997 = vmatpush.msra.mxu0 0.0
    %1998 = vmatpush.msra.mxu0 0.0
    %1999 = vmatpush.msra.mxu0 0.0
    %2000 = vmatpush.msra.mxu0 0.0
    %2001 = vmatpush.msra.mxu0 0.0
    %2002 = vmatpush.msra.mxu0 0.0
    %2003 = vmatpush.msra.mxu0 %v1945
    %2004 = vmatpush.msra.mxu0 %v1929
    %2005 = vmatpush.msra.mxu0 %v1925
    %2006 = vmatmul.f32.gmra.mxu0 %v1936
    %v2007 = vpop.f32.mrf.mxu0
    %v2008 = vadd.f32 0.0, %v2007
    %2009 = vdwg.mxu0
    %2010 = vmatpush.msra.mxu0 0.0
    %2011 = vmatpush.msra.mxu0 0.0
    %2012 = vmatpush.msra.mxu0 0.0
    %2013 = vmatpush.msra.mxu0 0.0
    %2014 = vmatpush.msra.mxu0 0.0
    %2015 = vmatpush.msra.mxu0 0.0
    %2016 = vmatpush.msra.mxu0 0.0
    %2017 = vmatpush.msra.mxu0 0.0
    %2018 = vmatpush.msra.mxu0 0.0
    %2019 = vmatpush.msra.mxu0 0.0
    %2020 = vmatpush.msra.mxu0 0.0
    %2021 = vmatpush.msra.mxu0 0.0
    %2022 = vmatpush.msra.mxu0 0.0
    %2023 = vmatpush.msra.mxu0 %v1948
    %2024 = vmatpush.msra.mxu0 %v1930
    %2025 = vmatpush.msra.mxu0 %v1926
    %2026 = vmatmul.f32.gmra.mxu0 %v1936
    %v2027 = vpop.f32.mrf.mxu0
    %v2028 = vadd.f32 0.0, %v2027
    %2029 = vdwg.mxu0
    %v2030 = vadd.f32 %v1582, %v1968
    %v2031 = vadd.f32 %v1583, %v1988
    %v2032 = vadd.f32 %v1584, %v2008
    %v2033 = vadd.f32 %v1585, %v2028
    %s2034 = scalar_lea.vmem [#allocation2], 1344
    %v2035 = vld [vmem:[%s2034] sm:$0xff]
    %v2036 = vld [vmem:[%s2034 + $0x8] sm:$0xff]
    %v2037 = vld [vmem:[%s2034 + $0x10] sm:$0xff]
    %v2038 = vld [vmem:[%s2034 + $0x18] sm:$0xff]
    %v2039 = vld [vmem:[%s2034 + $0x20] sm:$0xff]
    %v2040 = vld [vmem:[%s2034 + $0x28] sm:$0xff]
    %v2041 = vld [vmem:[%s2034 + $0x30] sm:$0xff]
    %v2042 = vld [vmem:[%s2034 + $0x38] sm:$0xff]
    %v2043 = vld [vmem:[%s2034 + $0x40] sm:$0xf]
    %v2044 = vld [vmem:[%s2034 + $0x48] sm:$0xf]
    %v2045 = vld [vmem:[%s2034 + $0x50] sm:$0xf]
    %v2046 = vld [vmem:[%s2034 + $0x58] sm:$0xf]
    %v2047 = vrot.slane %v273, 6
    %v2048 = vsel %vm52, %v2047, 0
    %v2051 = vsel %vm62, %v2043, 0
    %v2054 = vsel %vm62, %v2044, 0
    %v2057 = vsel %vm62, %v2045, 0
    %v2060 = vsel %vm62, %v2046, 0
    %2062 = vmatpush.msra.mxu0 0.0
    %2063 = vmatpush.msra.mxu0 0.0
    %2064 = vmatpush.msra.mxu0 0.0
    %2065 = vmatpush.msra.mxu0 0.0
    %2066 = vmatpush.msra.mxu0 0.0
    %2067 = vmatpush.msra.mxu0 0.0
    %2068 = vmatpush.msra.mxu0 0.0
    %2069 = vmatpush.msra.mxu0 0.0
    %2070 = vmatpush.msra.mxu0 0.0
    %2071 = vmatpush.msra.mxu0 0.0
    %2072 = vmatpush.msra.mxu0 0.0
    %2073 = vmatpush.msra.mxu0 0.0
    %2074 = vmatpush.msra.mxu0 0.0
    %2075 = vmatpush.msra.mxu0 %v2051
    %2076 = vmatpush.msra.mxu0 %v2039
    %2077 = vmatpush.msra.mxu0 %v2035
    %2078 = vmatmul.f32.gmra.mxu0 %v2048
    %v2079 = vpop.f32.mrf.mxu0
    %v2080 = vadd.f32 0.0, %v2079
    %2081 = vdwg.mxu0
    %2082 = vmatpush.msra.mxu0 0.0
    %2083 = vmatpush.msra.mxu0 0.0
    %2084 = vmatpush.msra.mxu0 0.0
    %2085 = vmatpush.msra.mxu0 0.0
    %2086 = vmatpush.msra.mxu0 0.0
    %2087 = vmatpush.msra.mxu0 0.0
    %2088 = vmatpush.msra.mxu0 0.0
    %2089 = vmatpush.msra.mxu0 0.0
    %2090 = vmatpush.msra.mxu0 0.0
    %2091 = vmatpush.msra.mxu0 0.0
    %2092 = vmatpush.msra.mxu0 0.0
    %2093 = vmatpush.msra.mxu0 0.0
    %2094 = vmatpush.msra.mxu0 0.0
    %2095 = vmatpush.msra.mxu0 %v2054
    %2096 = vmatpush.msra.mxu0 %v2040
    %2097 = vmatpush.msra.mxu0 %v2036
    %2098 = vmatmul.f32.gmra.mxu0 %v2048
    %v2099 = vpop.f32.mrf.mxu0
    %v2100 = vadd.f32 0.0, %v2099
    %2101 = vdwg.mxu0
    %2102 = vmatpush.msra.mxu0 0.0
    %2103 = vmatpush.msra.mxu0 0.0
    %2104 = vmatpush.msra.mxu0 0.0
    %2105 = vmatpush.msra.mxu0 0.0
    %2106 = vmatpush.msra.mxu0 0.0
    %2107 = vmatpush.msra.mxu0 0.0
    %2108 = vmatpush.msra.mxu0 0.0
    %2109 = vmatpush.msra.mxu0 0.0
    %2110 = vmatpush.msra.mxu0 0.0
    %2111 = vmatpush.msra.mxu0 0.0
    %2112 = vmatpush.msra.mxu0 0.0
    %2113 = vmatpush.msra.mxu0 0.0
    %2114 = vmatpush.msra.mxu0 0.0
    %2115 = vmatpush.msra.mxu0 %v2057
    %2116 = vmatpush.msra.mxu0 %v2041
    %2117 = vmatpush.msra.mxu0 %v2037
    %2118 = vmatmul.f32.gmra.mxu0 %v2048
    %v2119 = vpop.f32.mrf.mxu0
    %v2120 = vadd.f32 0.0, %v2119
    %2121 = vdwg.mxu0
    %2122 = vmatpush.msra.mxu0 0.0
    %2123 = vmatpush.msra.mxu0 0.0
    %2124 = vmatpush.msra.mxu0 0.0
    %2125 = vmatpush.msra.mxu0 0.0
    %2126 = vmatpush.msra.mxu0 0.0
    %2127 = vmatpush.msra.mxu0 0.0
    %2128 = vmatpush.msra.mxu0 0.0
    %2129 = vmatpush.msra.mxu0 0.0
    %2130 = vmatpush.msra.mxu0 0.0
    %2131 = vmatpush.msra.mxu0 0.0
    %2132 = vmatpush.msra.mxu0 0.0
    %2133 = vmatpush.msra.mxu0 0.0
    %2134 = vmatpush.msra.mxu0 0.0
    %2135 = vmatpush.msra.mxu0 %v2060
    %2136 = vmatpush.msra.mxu0 %v2042
    %2137 = vmatpush.msra.mxu0 %v2038
    %2138 = vmatmul.f32.gmra.mxu0 %v2048
    %v2139 = vpop.f32.mrf.mxu0
    %v2140 = vadd.f32 0.0, %v2139
    %2141 = vdwg.mxu0
    %v2142 = vadd.f32 %v1694, %v2080
    %v2143 = vadd.f32 %v1695, %v2100
    %v2144 = vadd.f32 %v1696, %v2120
    %v2145 = vadd.f32 %v1697, %v2140
    %s2146 = scalar_lea.vmem [#allocation2], 1440
    %v2147 = vld [vmem:[%s2146] sm:$0xff]
    %v2148 = vld [vmem:[%s2146 + $0x8] sm:$0xff]
    %v2149 = vld [vmem:[%s2146 + $0x10] sm:$0xff]
    %v2150 = vld [vmem:[%s2146 + $0x18] sm:$0xff]
    %v2151 = vld [vmem:[%s2146 + $0x20] sm:$0xff]
    %v2152 = vld [vmem:[%s2146 + $0x28] sm:$0xff]
    %v2153 = vld [vmem:[%s2146 + $0x30] sm:$0xff]
    %v2154 = vld [vmem:[%s2146 + $0x38] sm:$0xff]
    %v2155 = vld [vmem:[%s2146 + $0x40] sm:$0xf]
    %v2156 = vld [vmem:[%s2146 + $0x48] sm:$0xf]
    %v2157 = vld [vmem:[%s2146 + $0x50] sm:$0xf]
    %v2158 = vld [vmem:[%s2146 + $0x58] sm:$0xf]
    %v2159 = vrot.slane %v273, 7
    %v2160 = vsel %vm52, %v2159, 0
    %v2163 = vsel %vm62, %v2155, 0
    %v2166 = vsel %vm62, %v2156, 0
    %v2169 = vsel %vm62, %v2157, 0
    %v2172 = vsel %vm62, %v2158, 0
    %2174 = vmatpush.msra.mxu0 0.0
    %2175 = vmatpush.msra.mxu0 0.0
    %2176 = vmatpush.msra.mxu0 0.0
    %2177 = vmatpush.msra.mxu0 0.0
    %2178 = vmatpush.msra.mxu0 0.0
    %2179 = vmatpush.msra.mxu0 0.0
    %2180 = vmatpush.msra.mxu0 0.0
    %2181 = vmatpush.msra.mxu0 0.0
    %2182 = vmatpush.msra.mxu0 0.0
    %2183 = vmatpush.msra.mxu0 0.0
    %2184 = vmatpush.msra.mxu0 0.0
    %2185 = vmatpush.msra.mxu0 0.0
    %2186 = vmatpush.msra.mxu0 0.0
    %2187 = vmatpush.msra.mxu0 %v2163
    %2188 = vmatpush.msra.mxu0 %v2151
    %2189 = vmatpush.msra.mxu0 %v2147
    %2190 = vmatmul.f32.gmra.mxu0 %v2160
    %v2191 = vpop.f32.mrf.mxu0
    %v2192 = vadd.f32 0.0, %v2191
    %2193 = vdwg.mxu0
    %2194 = vmatpush.msra.mxu0 0.0
    %2195 = vmatpush.msra.mxu0 0.0
    %2196 = vmatpush.msra.mxu0 0.0
    %2197 = vmatpush.msra.mxu0 0.0
    %2198 = vmatpush.msra.mxu0 0.0
    %2199 = vmatpush.msra.mxu0 0.0
    %2200 = vmatpush.msra.mxu0 0.0
    %2201 = vmatpush.msra.mxu0 0.0
    %2202 = vmatpush.msra.mxu0 0.0
    %2203 = vmatpush.msra.mxu0 0.0
    %2204 = vmatpush.msra.mxu0 0.0
    %2205 = vmatpush.msra.mxu0 0.0
    %2206 = vmatpush.msra.mxu0 0.0
    %2207 = vmatpush.msra.mxu0 %v2166
    %2208 = vmatpush.msra.mxu0 %v2152
    %2209 = vmatpush.msra.mxu0 %v2148
    %2210 = vmatmul.f32.gmra.mxu0 %v2160
    %v2211 = vpop.f32.mrf.mxu0
    %v2212 = vadd.f32 0.0, %v2211
    %2213 = vdwg.mxu0
    %2214 = vmatpush.msra.mxu0 0.0
    %2215 = vmatpush.msra.mxu0 0.0
    %2216 = vmatpush.msra.mxu0 0.0
    %2217 = vmatpush.msra.mxu0 0.0
    %2218 = vmatpush.msra.mxu0 0.0
    %2219 = vmatpush.msra.mxu0 0.0
    %2220 = vmatpush.msra.mxu0 0.0
    %2221 = vmatpush.msra.mxu0 0.0
    %2222 = vmatpush.msra.mxu0 0.0
    %2223 = vmatpush.msra.mxu0 0.0
    %2224 = vmatpush.msra.mxu0 0.0
    %2225 = vmatpush.msra.mxu0 0.0
    %2226 = vmatpush.msra.mxu0 0.0
    %2227 = vmatpush.msra.mxu0 %v2169
    %2228 = vmatpush.msra.mxu0 %v2153
    %2229 = vmatpush.msra.mxu0 %v2149
    %2230 = vmatmul.f32.gmra.mxu0 %v2160
    %v2231 = vpop.f32.mrf.mxu0
    %v2232 = vadd.f32 0.0, %v2231
    %2233 = vdwg.mxu0
    %2234 = vmatpush.msra.mxu0 0.0
    %2235 = vmatpush.msra.mxu0 0.0
    %2236 = vmatpush.msra.mxu0 0.0
    %2237 = vmatpush.msra.mxu0 0.0
    %2238 = vmatpush.msra.mxu0 0.0
    %2239 = vmatpush.msra.mxu0 0.0
    %2240 = vmatpush.msra.mxu0 0.0
    %2241 = vmatpush.msra.mxu0 0.0
    %2242 = vmatpush.msra.mxu0 0.0
    %2243 = vmatpush.msra.mxu0 0.0
    %2244 = vmatpush.msra.mxu0 0.0
    %2245 = vmatpush.msra.mxu0 0.0
    %2246 = vmatpush.msra.mxu0 0.0
    %2247 = vmatpush.msra.mxu0 %v2172
    %2248 = vmatpush.msra.mxu0 %v2154
    %2249 = vmatpush.msra.mxu0 %v2150
    %2250 = vmatmul.f32.gmra.mxu0 %v2160
    %v2251 = vpop.f32.mrf.mxu0
    %v2252 = vadd.f32 0.0, %v2251
    %2253 = vdwg.mxu0
    %v2254 = vadd.f32 %v1806, %v2192
    %v2255 = vadd.f32 %v1807, %v2212
    %v2256 = vadd.f32 %v1808, %v2232
    %v2257 = vadd.f32 %v1809, %v2252
    %s2258 = scalar_lea.vmem [#allocation2], 1536
    %v2259 = vld [vmem:[%s2258] sm:$0xff]
    %v2260 = vld [vmem:[%s2258 + $0x8] sm:$0xff]
    %v2261 = vld [vmem:[%s2258 + $0x10] sm:$0xff]
    %v2262 = vld [vmem:[%s2258 + $0x18] sm:$0xff]
    %v2263 = vld [vmem:[%s2258 + $0x20] sm:$0xff]
    %v2264 = vld [vmem:[%s2258 + $0x28] sm:$0xff]
    %v2265 = vld [vmem:[%s2258 + $0x30] sm:$0xff]
    %v2266 = vld [vmem:[%s2258 + $0x38] sm:$0xff]
    %v2267 = vld [vmem:[%s2258 + $0x40] sm:$0xf]
    %v2268 = vld [vmem:[%s2258 + $0x48] sm:$0xf]
    %v2269 = vld [vmem:[%s2258 + $0x50] sm:$0xf]
    %v2270 = vld [vmem:[%s2258 + $0x58] sm:$0xf]
    %v2272 = vsel %vm52, %v274, 0
    %v2275 = vsel %vm62, %v2267, 0
    %v2278 = vsel %vm62, %v2268, 0
    %v2281 = vsel %vm62, %v2269, 0
    %v2284 = vsel %vm62, %v2270, 0
    %2286 = vmatpush.msra.mxu0 0.0
    %2287 = vmatpush.msra.mxu0 0.0
    %2288 = vmatpush.msra.mxu0 0.0
    %2289 = vmatpush.msra.mxu0 0.0
    %2290 = vmatpush.msra.mxu0 0.0
    %2291 = vmatpush.msra.mxu0 0.0
    %2292 = vmatpush.msra.mxu0 0.0
    %2293 = vmatpush.msra.mxu0 0.0
    %2294 = vmatpush.msra.mxu0 0.0
    %2295 = vmatpush.msra.mxu0 0.0
    %2296 = vmatpush.msra.mxu0 0.0
    %2297 = vmatpush.msra.mxu0 0.0
    %2298 = vmatpush.msra.mxu0 0.0
    %2299 = vmatpush.msra.mxu0 %v2275
    %2300 = vmatpush.msra.mxu0 %v2263
    %2301 = vmatpush.msra.mxu0 %v2259
    %2302 = vmatmul.f32.gmra.mxu0 %v2272
    %v2303 = vpop.f32.mrf.mxu0
    %v2304 = vadd.f32 0.0, %v2303
    %2305 = vdwg.mxu0
    %2306 = vmatpush.msra.mxu0 0.0
    %2307 = vmatpush.msra.mxu0 0.0
    %2308 = vmatpush.msra.mxu0 0.0
    %2309 = vmatpush.msra.mxu0 0.0
    %2310 = vmatpush.msra.mxu0 0.0
    %2311 = vmatpush.msra.mxu0 0.0
    %2312 = vmatpush.msra.mxu0 0.0
    %2313 = vmatpush.msra.mxu0 0.0
    %2314 = vmatpush.msra.mxu0 0.0
    %2315 = vmatpush.msra.mxu0 0.0
    %2316 = vmatpush.msra.mxu0 0.0
    %2317 = vmatpush.msra.mxu0 0.0
    %2318 = vmatpush.msra.mxu0 0.0
    %2319 = vmatpush.msra.mxu0 %v2278
    %2320 = vmatpush.msra.mxu0 %v2264
    %2321 = vmatpush.msra.mxu0 %v2260
    %2322 = vmatmul.f32.gmra.mxu0 %v2272
    %v2323 = vpop.f32.mrf.mxu0
    %v2324 = vadd.f32 0.0, %v2323
    %2325 = vdwg.mxu0
    %2326 = vmatpush.msra.mxu0 0.0
    %2327 = vmatpush.msra.mxu0 0.0
    %2328 = vmatpush.msra.mxu0 0.0
    %2329 = vmatpush.msra.mxu0 0.0
    %2330 = vmatpush.msra.mxu0 0.0
    %2331 = vmatpush.msra.mxu0 0.0
    %2332 = vmatpush.msra.mxu0 0.0
    %2333 = vmatpush.msra.mxu0 0.0
    %2334 = vmatpush.msra.mxu0 0.0
    %2335 = vmatpush.msra.mxu0 0.0
    %2336 = vmatpush.msra.mxu0 0.0
    %2337 = vmatpush.msra.mxu0 0.0
    %2338 = vmatpush.msra.mxu0 0.0
    %2339 = vmatpush.msra.mxu0 %v2281
    %2340 = vmatpush.msra.mxu0 %v2265
    %2341 = vmatpush.msra.mxu0 %v2261
    %2342 = vmatmul.f32.gmra.mxu0 %v2272
    %v2343 = vpop.f32.mrf.mxu0
    %v2344 = vadd.f32 0.0, %v2343
    %2345 = vdwg.mxu0
    %2346 = vmatpush.msra.mxu0 0.0
    %2347 = vmatpush.msra.mxu0 0.0
    %2348 = vmatpush.msra.mxu0 0.0
    %2349 = vmatpush.msra.mxu0 0.0
    %2350 = vmatpush.msra.mxu0 0.0
    %2351 = vmatpush.msra.mxu0 0.0
    %2352 = vmatpush.msra.mxu0 0.0
    %2353 = vmatpush.msra.mxu0 0.0
    %2354 = vmatpush.msra.mxu0 0.0
    %2355 = vmatpush.msra.mxu0 0.0
    %2356 = vmatpush.msra.mxu0 0.0
    %2357 = vmatpush.msra.mxu0 0.0
    %2358 = vmatpush.msra.mxu0 0.0
    %2359 = vmatpush.msra.mxu0 %v2284
    %2360 = vmatpush.msra.mxu0 %v2266
    %2361 = vmatpush.msra.mxu0 %v2262
    %2362 = vmatmul.f32.gmra.mxu0 %v2272
    %v2363 = vpop.f32.mrf.mxu0
    %v2364 = vadd.f32 0.0, %v2363
    %2365 = vdwg.mxu0
    %v2366 = vadd.f32 %v1918, %v2304
    %v2367 = vadd.f32 %v1919, %v2324
    %v2368 = vadd.f32 %v1920, %v2344
    %v2369 = vadd.f32 %v1921, %v2364
    %s2370 = scalar_lea.vmem [#allocation2], 1632
    %v2371 = vld [vmem:[%s2370] sm:$0xff]
    %v2372 = vld [vmem:[%s2370 + $0x8] sm:$0xff]
    %v2373 = vld [vmem:[%s2370 + $0x10] sm:$0xff]
    %v2374 = vld [vmem:[%s2370 + $0x18] sm:$0xff]
    %v2375 = vld [vmem:[%s2370 + $0x20] sm:$0xff]
    %v2376 = vld [vmem:[%s2370 + $0x28] sm:$0xff]
    %v2377 = vld [vmem:[%s2370 + $0x30] sm:$0xff]
    %v2378 = vld [vmem:[%s2370 + $0x38] sm:$0xff]
    %v2379 = vld [vmem:[%s2370 + $0x40] sm:$0xf]
    %v2380 = vld [vmem:[%s2370 + $0x48] sm:$0xf]
    %v2381 = vld [vmem:[%s2370 + $0x50] sm:$0xf]
    %v2382 = vld [vmem:[%s2370 + $0x58] sm:$0xf]
    %v2383 = vrot.slane %v274, 1
    %v2384 = vsel %vm52, %v2383, 0
    %v2387 = vsel %vm62, %v2379, 0
    %v2390 = vsel %vm62, %v2380, 0
    %v2393 = vsel %vm62, %v2381, 0
    %v2396 = vsel %vm62, %v2382, 0
    %2398 = vmatpush.msra.mxu0 0.0
    %2399 = vmatpush.msra.mxu0 0.0
    %2400 = vmatpush.msra.mxu0 0.0
    %2401 = vmatpush.msra.mxu0 0.0
    %2402 = vmatpush.msra.mxu0 0.0
    %2403 = vmatpush.msra.mxu0 0.0
    %2404 = vmatpush.msra.mxu0 0.0
    %2405 = vmatpush.msra.mxu0 0.0
    %2406 = vmatpush.msra.mxu0 0.0
    %2407 = vmatpush.msra.mxu0 0.0
    %2408 = vmatpush.msra.mxu0 0.0
    %2409 = vmatpush.msra.mxu0 0.0
    %2410 = vmatpush.msra.mxu0 0.0
    %2411 = vmatpush.msra.mxu0 %v2387
    %2412 = vmatpush.msra.mxu0 %v2375
    %2413 = vmatpush.msra.mxu0 %v2371
    %2414 = vmatmul.f32.gmra.mxu0 %v2384
    %v2415 = vpop.f32.mrf.mxu0
    %v2416 = vadd.f32 0.0, %v2415
    %2417 = vdwg.mxu0
    %2418 = vmatpush.msra.mxu0 0.0
    %2419 = vmatpush.msra.mxu0 0.0
    %2420 = vmatpush.msra.mxu0 0.0
    %2421 = vmatpush.msra.mxu0 0.0
    %2422 = vmatpush.msra.mxu0 0.0
    %2423 = vmatpush.msra.mxu0 0.0
    %2424 = vmatpush.msra.mxu0 0.0
    %2425 = vmatpush.msra.mxu0 0.0
    %2426 = vmatpush.msra.mxu0 0.0
    %2427 = vmatpush.msra.mxu0 0.0
    %2428 = vmatpush.msra.mxu0 0.0
    %2429 = vmatpush.msra.mxu0 0.0
    %2430 = vmatpush.msra.mxu0 0.0
    %2431 = vmatpush.msra.mxu0 %v2390
    %2432 = vmatpush.msra.mxu0 %v2376
    %2433 = vmatpush.msra.mxu0 %v2372
    %2434 = vmatmul.f32.gmra.mxu0 %v2384
    %v2435 = vpop.f32.mrf.mxu0
    %v2436 = vadd.f32 0.0, %v2435
    %2437 = vdwg.mxu0
    %2438 = vmatpush.msra.mxu0 0.0
    %2439 = vmatpush.msra.mxu0 0.0
    %2440 = vmatpush.msra.mxu0 0.0
    %2441 = vmatpush.msra.mxu0 0.0
    %2442 = vmatpush.msra.mxu0 0.0
    %2443 = vmatpush.msra.mxu0 0.0
    %2444 = vmatpush.msra.mxu0 0.0
    %2445 = vmatpush.msra.mxu0 0.0
    %2446 = vmatpush.msra.mxu0 0.0
    %2447 = vmatpush.msra.mxu0 0.0
    %2448 = vmatpush.msra.mxu0 0.0
    %2449 = vmatpush.msra.mxu0 0.0
    %2450 = vmatpush.msra.mxu0 0.0
    %2451 = vmatpush.msra.mxu0 %v2393
    %2452 = vmatpush.msra.mxu0 %v2377
    %2453 = vmatpush.msra.mxu0 %v2373
    %2454 = vmatmul.f32.gmra.mxu0 %v2384
    %v2455 = vpop.f32.mrf.mxu0
    %v2456 = vadd.f32 0.0, %v2455
    %2457 = vdwg.mxu0
    %2458 = vmatpush.msra.mxu0 0.0
    %2459 = vmatpush.msra.mxu0 0.0
    %2460 = vmatpush.msra.mxu0 0.0
    %2461 = vmatpush.msra.mxu0 0.0
    %2462 = vmatpush.msra.mxu0 0.0
    %2463 = vmatpush.msra.mxu0 0.0
    %2464 = vmatpush.msra.mxu0 0.0
    %2465 = vmatpush.msra.mxu0 0.0
    %2466 = vmatpush.msra.mxu0 0.0
    %2467 = vmatpush.msra.mxu0 0.0
    %2468 = vmatpush.msra.mxu0 0.0
    %2469 = vmatpush.msra.mxu0 0.0
    %2470 = vmatpush.msra.mxu0 0.0
    %2471 = vmatpush.msra.mxu0 %v2396
    %2472 = vmatpush.msra.mxu0 %v2378
    %2473 = vmatpush.msra.mxu0 %v2374
    %2474 = vmatmul.f32.gmra.mxu0 %v2384
    %v2475 = vpop.f32.mrf.mxu0
    %v2476 = vadd.f32 0.0, %v2475
    %2477 = vdwg.mxu0
    %v2478 = vadd.f32 %v2030, %v2416
    %v2479 = vadd.f32 %v2031, %v2436
    %v2480 = vadd.f32 %v2032, %v2456
    %v2481 = vadd.f32 %v2033, %v2476
    %s2482 = scalar_lea.vmem [#allocation2], 1728
    %v2483 = vld [vmem:[%s2482] sm:$0xff]
    %v2484 = vld [vmem:[%s2482 + $0x8] sm:$0xff]
    %v2485 = vld [vmem:[%s2482 + $0x10] sm:$0xff]
    %v2486 = vld [vmem:[%s2482 + $0x18] sm:$0xff]
    %v2487 = vld [vmem:[%s2482 + $0x20] sm:$0xff]
    %v2488 = vld [vmem:[%s2482 + $0x28] sm:$0xff]
    %v2489 = vld [vmem:[%s2482 + $0x30] sm:$0xff]
    %v2490 = vld [vmem:[%s2482 + $0x38] sm:$0xff]
    %v2491 = vld [vmem:[%s2482 + $0x40] sm:$0xf]
    %v2492 = vld [vmem:[%s2482 + $0x48] sm:$0xf]
    %v2493 = vld [vmem:[%s2482 + $0x50] sm:$0xf]
    %v2494 = vld [vmem:[%s2482 + $0x58] sm:$0xf]
    %v2495 = vrot.slane %v274, 2
    %v2496 = vsel %vm52, %v2495, 0
    %v2499 = vsel %vm62, %v2491, 0
    %v2502 = vsel %vm62, %v2492, 0
    %v2505 = vsel %vm62, %v2493, 0
    %v2508 = vsel %vm62, %v2494, 0
    %2510 = vmatpush.msra.mxu0 0.0
    %2511 = vmatpush.msra.mxu0 0.0
    %2512 = vmatpush.msra.mxu0 0.0
    %2513 = vmatpush.msra.mxu0 0.0
    %2514 = vmatpush.msra.mxu0 0.0
    %2515 = vmatpush.msra.mxu0 0.0
    %2516 = vmatpush.msra.mxu0 0.0
    %2517 = vmatpush.msra.mxu0 0.0
    %2518 = vmatpush.msra.mxu0 0.0
    %2519 = vmatpush.msra.mxu0 0.0
    %2520 = vmatpush.msra.mxu0 0.0
    %2521 = vmatpush.msra.mxu0 0.0
    %2522 = vmatpush.msra.mxu0 0.0
    %2523 = vmatpush.msra.mxu0 %v2499
    %2524 = vmatpush.msra.mxu0 %v2487
    %2525 = vmatpush.msra.mxu0 %v2483
    %2526 = vmatmul.f32.gmra.mxu0 %v2496
    %v2527 = vpop.f32.mrf.mxu0
    %v2528 = vadd.f32 0.0, %v2527
    %2529 = vdwg.mxu0
    %2530 = vmatpush.msra.mxu0 0.0
    %2531 = vmatpush.msra.mxu0 0.0
    %2532 = vmatpush.msra.mxu0 0.0
    %2533 = vmatpush.msra.mxu0 0.0
    %2534 = vmatpush.msra.mxu0 0.0
    %2535 = vmatpush.msra.mxu0 0.0
    %2536 = vmatpush.msra.mxu0 0.0
    %2537 = vmatpush.msra.mxu0 0.0
    %2538 = vmatpush.msra.mxu0 0.0
    %2539 = vmatpush.msra.mxu0 0.0
    %2540 = vmatpush.msra.mxu0 0.0
    %2541 = vmatpush.msra.mxu0 0.0
    %2542 = vmatpush.msra.mxu0 0.0
    %2543 = vmatpush.msra.mxu0 %v2502
    %2544 = vmatpush.msra.mxu0 %v2488
    %2545 = vmatpush.msra.mxu0 %v2484
    %2546 = vmatmul.f32.gmra.mxu0 %v2496
    %v2547 = vpop.f32.mrf.mxu0
    %v2548 = vadd.f32 0.0, %v2547
    %2549 = vdwg.mxu0
    %2550 = vmatpush.msra.mxu0 0.0
    %2551 = vmatpush.msra.mxu0 0.0
    %2552 = vmatpush.msra.mxu0 0.0
    %2553 = vmatpush.msra.mxu0 0.0
    %2554 = vmatpush.msra.mxu0 0.0
    %2555 = vmatpush.msra.mxu0 0.0
    %2556 = vmatpush.msra.mxu0 0.0
    %2557 = vmatpush.msra.mxu0 0.0
    %2558 = vmatpush.msra.mxu0 0.0
    %2559 = vmatpush.msra.mxu0 0.0
    %2560 = vmatpush.msra.mxu0 0.0
    %2561 = vmatpush.msra.mxu0 0.0
    %2562 = vmatpush.msra.mxu0 0.0
    %2563 = vmatpush.msra.mxu0 %v2505
    %2564 = vmatpush.msra.mxu0 %v2489
    %2565 = vmatpush.msra.mxu0 %v2485
    %2566 = vmatmul.f32.gmra.mxu0 %v2496
    %v2567 = vpop.f32.mrf.mxu0
    %v2568 = vadd.f32 0.0, %v2567
    %2569 = vdwg.mxu0
    %2570 = vmatpush.msra.mxu0 0.0
    %2571 = vmatpush.msra.mxu0 0.0
    %2572 = vmatpush.msra.mxu0 0.0
    %2573 = vmatpush.msra.mxu0 0.0
    %2574 = vmatpush.msra.mxu0 0.0
    %2575 = vmatpush.msra.mxu0 0.0
    %2576 = vmatpush.msra.mxu0 0.0
    %2577 = vmatpush.msra.mxu0 0.0
    %2578 = vmatpush.msra.mxu0 0.0
    %2579 = vmatpush.msra.mxu0 0.0
    %2580 = vmatpush.msra.mxu0 0.0
    %2581 = vmatpush.msra.mxu0 0.0
    %2582 = vmatpush.msra.mxu0 0.0
    %2583 = vmatpush.msra.mxu0 %v2508
    %2584 = vmatpush.msra.mxu0 %v2490
    %2585 = vmatpush.msra.mxu0 %v2486
    %2586 = vmatmul.f32.gmra.mxu0 %v2496
    %v2587 = vpop.f32.mrf.mxu0
    %v2588 = vadd.f32 0.0, %v2587
    %2589 = vdwg.mxu0
    %v2590 = vadd.f32 %v2142, %v2528
    %v2591 = vadd.f32 %v2143, %v2548
    %v2592 = vadd.f32 %v2144, %v2568
    %v2593 = vadd.f32 %v2145, %v2588
    %s2594 = scalar_lea.vmem [#allocation2], 1824
    %v2595 = vld [vmem:[%s2594] sm:$0xff]
    %v2596 = vld [vmem:[%s2594 + $0x8] sm:$0xff]
    %v2597 = vld [vmem:[%s2594 + $0x10] sm:$0xff]
    %v2598 = vld [vmem:[%s2594 + $0x18] sm:$0xff]
    %v2599 = vld [vmem:[%s2594 + $0x20] sm:$0xff]
    %v2600 = vld [vmem:[%s2594 + $0x28] sm:$0xff]
    %v2601 = vld [vmem:[%s2594 + $0x30] sm:$0xff]
    %v2602 = vld [vmem:[%s2594 + $0x38] sm:$0xff]
    %v2603 = vld [vmem:[%s2594 + $0x40] sm:$0xf]
    %v2604 = vld [vmem:[%s2594 + $0x48] sm:$0xf]
    %v2605 = vld [vmem:[%s2594 + $0x50] sm:$0xf]
    %v2606 = vld [vmem:[%s2594 + $0x58] sm:$0xf]
    %v2607 = vrot.slane %v274, 3
    %v2608 = vsel %vm52, %v2607, 0
    %v2611 = vsel %vm62, %v2603, 0
    %v2614 = vsel %vm62, %v2604, 0
    %v2617 = vsel %vm62, %v2605, 0
    %v2620 = vsel %vm62, %v2606, 0
    %2622 = vmatpush.msra.mxu0 0.0
    %2623 = vmatpush.msra.mxu0 0.0
    %2624 = vmatpush.msra.mxu0 0.0
    %2625 = vmatpush.msra.mxu0 0.0
    %2626 = vmatpush.msra.mxu0 0.0
    %2627 = vmatpush.msra.mxu0 0.0
    %2628 = vmatpush.msra.mxu0 0.0
    %2629 = vmatpush.msra.mxu0 0.0
    %2630 = vmatpush.msra.mxu0 0.0
    %2631 = vmatpush.msra.mxu0 0.0
    %2632 = vmatpush.msra.mxu0 0.0
    %2633 = vmatpush.msra.mxu0 0.0
    %2634 = vmatpush.msra.mxu0 0.0
    %2635 = vmatpush.msra.mxu0 %v2611
    %2636 = vmatpush.msra.mxu0 %v2599
    %2637 = vmatpush.msra.mxu0 %v2595
    %2638 = vmatmul.f32.gmra.mxu0 %v2608
    %v2639 = vpop.f32.mrf.mxu0
    %v2640 = vadd.f32 0.0, %v2639
    %2641 = vdwg.mxu0
    %2642 = vmatpush.msra.mxu0 0.0
    %2643 = vmatpush.msra.mxu0 0.0
    %2644 = vmatpush.msra.mxu0 0.0
    %2645 = vmatpush.msra.mxu0 0.0
    %2646 = vmatpush.msra.mxu0 0.0
    %2647 = vmatpush.msra.mxu0 0.0
    %2648 = vmatpush.msra.mxu0 0.0
    %2649 = vmatpush.msra.mxu0 0.0
    %2650 = vmatpush.msra.mxu0 0.0
    %2651 = vmatpush.msra.mxu0 0.0
    %2652 = vmatpush.msra.mxu0 0.0
    %2653 = vmatpush.msra.mxu0 0.0
    %2654 = vmatpush.msra.mxu0 0.0
    %2655 = vmatpush.msra.mxu0 %v2614
    %2656 = vmatpush.msra.mxu0 %v2600
    %2657 = vmatpush.msra.mxu0 %v2596
    %2658 = vmatmul.f32.gmra.mxu0 %v2608
    %v2659 = vpop.f32.mrf.mxu0
    %v2660 = vadd.f32 0.0, %v2659
    %2661 = vdwg.mxu0
    %2662 = vmatpush.msra.mxu0 0.0
    %2663 = vmatpush.msra.mxu0 0.0
    %2664 = vmatpush.msra.mxu0 0.0
    %2665 = vmatpush.msra.mxu0 0.0
    %2666 = vmatpush.msra.mxu0 0.0
    %2667 = vmatpush.msra.mxu0 0.0
    %2668 = vmatpush.msra.mxu0 0.0
    %2669 = vmatpush.msra.mxu0 0.0
    %2670 = vmatpush.msra.mxu0 0.0
    %2671 = vmatpush.msra.mxu0 0.0
    %2672 = vmatpush.msra.mxu0 0.0
    %2673 = vmatpush.msra.mxu0 0.0
    %2674 = vmatpush.msra.mxu0 0.0
    %2675 = vmatpush.msra.mxu0 %v2617
    %2676 = vmatpush.msra.mxu0 %v2601
    %2677 = vmatpush.msra.mxu0 %v2597
    %2678 = vmatmul.f32.gmra.mxu0 %v2608
    %v2679 = vpop.f32.mrf.mxu0
    %v2680 = vadd.f32 0.0, %v2679
    %2681 = vdwg.mxu0
    %2682 = vmatpush.msra.mxu0 0.0
    %2683 = vmatpush.msra.mxu0 0.0
    %2684 = vmatpush.msra.mxu0 0.0
    %2685 = vmatpush.msra.mxu0 0.0
    %2686 = vmatpush.msra.mxu0 0.0
    %2687 = vmatpush.msra.mxu0 0.0
    %2688 = vmatpush.msra.mxu0 0.0
    %2689 = vmatpush.msra.mxu0 0.0
    %2690 = vmatpush.msra.mxu0 0.0
    %2691 = vmatpush.msra.mxu0 0.0
    %2692 = vmatpush.msra.mxu0 0.0
    %2693 = vmatpush.msra.mxu0 0.0
    %2694 = vmatpush.msra.mxu0 0.0
    %2695 = vmatpush.msra.mxu0 %v2620
    %2696 = vmatpush.msra.mxu0 %v2602
    %2697 = vmatpush.msra.mxu0 %v2598
    %2698 = vmatmul.f32.gmra.mxu0 %v2608
    %v2699 = vpop.f32.mrf.mxu0
    %v2700 = vadd.f32 0.0, %v2699
    %2701 = vdwg.mxu0
    %v2702 = vadd.f32 %v2254, %v2640
    %v2703 = vadd.f32 %v2255, %v2660
    %v2704 = vadd.f32 %v2256, %v2680
    %v2705 = vadd.f32 %v2257, %v2700
    %v2710 = vrot.slane %v2367, 7
    %v2711 = vrot.slane %v2368, 6
    %v2712 = vrot.slane %v2369, 5
    %vm2713 = vcmask 1040384
    %v2714 = vsel %vm2713, %v2366, %v2710
    %vm2715 = vcmask 1042434
    %v2716 = vsel %vm2715, %v2711, %v2712
    %v2717 = vsel %vm242, %v2714, %v2716
    %v2719 = vadd.f32 %v498, %v2717
    %v2724 = vrot.slane %v2479, 7
    %v2725 = vrot.slane %v2480, 6
    %v2726 = vrot.slane %v2481, 5
    %v2727 = vsel %vm2713, %v2478, %v2724
    %v2728 = vsel %vm2715, %v2725, %v2726
    %v2729 = vsel %vm242, %v2727, %v2728
    %v2731 = vadd.f32 %v2719, %v2729
    %v2736 = vrot.slane %v2591, 7
    %v2737 = vrot.slane %v2592, 6
    %v2738 = vrot.slane %v2593, 5
    %v2739 = vsel %vm2713, %v2590, %v2736
    %v2740 = vsel %vm2715, %v2737, %v2738
    %v2741 = vsel %vm242, %v2739, %v2740
    %v2743 = vadd.f32 %v2731, %v2741
    %v2748 = vrot.slane %v2703, 7
    %v2749 = vrot.slane %v2704, 6
    %v2750 = vrot.slane %v2705, 5
    %v2751 = vsel %vm2713, %v2702, %v2748
    %v2752 = vsel %vm2715, %v2749, %v2750
    %v2753 = vsel %vm242, %v2751, %v2752
    %v2755 = vadd.f32 %v2743, %v2753
    %v2756 = vmul.f32 %v2755, %v2755
    %v2758 = vperm.slane %v2756, 0
    %v2759 = vperm.slane %v2756, 1
    %v2760 = vperm.slane %v2756, 2
    %v2761 = vperm.slane %v2756, 3
    %v2766 = vsel %vm2713, %v2758, 0.0
    %v2767 = vsel %vm2713, %v2759, 0.0
    %v2768 = vadd.f32 %v2766, %v2767
    %v2769 = vsel %vm2713, %v2760, 0.0
    %v2770 = vadd.f32 %v2768, %v2769
    %v2771 = vsel %vm2713, %v2761, 0.0
    %v2772 = vadd.f32 %v2770, %v2771
    %2773 = vadd.xlane.f32.xlu0 %v2772
    %v2774 = vpop.xlane.xlu0 %2773
    %v2775 = vrsqrt.pop %v2774
    %v2776 = vmul.f32 %v2775, %v2774
    %v2777 = vmul.f32 %v2776, %v2775
    %v2778 = vmul.f32 0.5, %v2777
    %v2779 = vsub.f32 1.5, %v2778
    %v2780 = vmul.f32 %v2775, %v2779
    %v2781 = vmul.f32 %v2774, %v2780
    %vm2782 = vcmp.eq.f32.partialorder %v2774, inf
    %v2783 = vsel %vm2782, %v2774, %v2781
    %vm2784 = vcmp.eq.f32.partialorder %v2774, 0.0
    %v2785 = vand.u32 %v2774, 2147483648
    %v2786 = vsel %vm2784, %v2785, %v2783
    %v2787 = vadd.f32 %v2786, 1e-08
    %v2789 = vperm.slane %v2787, 0
    %v2791 = vrcp.pop %v2789
    %v2792 = vmul.f32 %v2789, %v2791
    %v2793 = vsub.f32 1.0, %v2792
    %v2794 = vmul.f32 %v2791, %v2793
    %v2795 = vadd.f32 %v2791, %v2794
    %vm2796 = vweird.f32 %v2789
    %vm2797 = vweird.f32 %v2791
    %vm2798 = vmor %vm2796, %vm2797
    %v2799 = vsel %vm2798, %v2791, %v2795
    %v2800 = vand.u32 2147483647, %v2789
    %vm2801 = vcmp.eq.f32.partialorder %v2800, 8.507059e+37
    %v2802 = vand.u32 %v2789, 2147483648
    %v2803 = vor.u32 1.1754944e-38, %v2802
    %v2804 = vsel %vm2801, %v2803, %v2799
    %v2805 = vmul.f32 %v2755, %v2804
    %v2806 = vlaneseq
    %vm2807 = vcmp.ge.s32.totalorder %v2806, 0
    %vm2808 = vcmp.lt.s32.totalorder %v2806, 512
    %vm2809 = vmand %vm2807, %vm2808
    %2810 = vst.msk [vmem:[#allocation4] ss:$2 sm:$0xf] %vm2809, %v2805
    %v2811 = vld [vmem:[#allocation2] sm:$0xff]
    %v2812 = vld [vmem:[#allocation2 + $0x8] sm:$0xff]
    %v2813 = vld [vmem:[#allocation2 + $0x10] sm:$0xff]
    %v2814 = vld [vmem:[#allocation2 + $0x18] sm:$0xff]
    %v2815 = vld [vmem:[#allocation2 + $0x20] sm:$0xff]
    %v2816 = vld [vmem:[#allocation2 + $0x28] sm:$0xff]
    %v2817 = vld [vmem:[#allocation2 + $0x30] sm:$0xff]
    %v2818 = vld [vmem:[#allocation2 + $0x38] sm:$0xff]
    %v2819 = vld [vmem:[#allocation2 + $0x40] sm:$0xf]
    %v2820 = vld [vmem:[#allocation2 + $0x48] sm:$0xf]
    %v2821 = vld [vmem:[#allocation2 + $0x50] sm:$0xf]
    %v2822 = vld [vmem:[#allocation2 + $0x58] sm:$0xf]
    %v2823 = vld [vmem:[%s511] sm:$0xff]
    %v2824 = vld [vmem:[%s511 + $0x8] sm:$0xff]
    %v2825 = vld [vmem:[%s511 + $0x10] sm:$0xff]
    %v2826 = vld [vmem:[%s511 + $0x18] sm:$0xff]
    %v2827 = vld [vmem:[%s511 + $0x20] sm:$0xff]
    %v2828 = vld [vmem:[%s511 + $0x28] sm:$0xff]
    %v2829 = vld [vmem:[%s511 + $0x30] sm:$0xff]
    %v2830 = vld [vmem:[%s511 + $0x38] sm:$0xff]
    %v2831 = vld [vmem:[%s511 + $0x40] sm:$0xf]
    %v2832 = vld [vmem:[%s511 + $0x48] sm:$0xf]
    %v2833 = vld [vmem:[%s511 + $0x50] sm:$0xf]
    %v2834 = vld [vmem:[%s511 + $0x58] sm:$0xf]
    %v2835 = vld [vmem:[%s524] sm:$0xff]
    %v2836 = vld [vmem:[%s524 + $0x8] sm:$0xff]
    %v2837 = vld [vmem:[%s524 + $0x10] sm:$0xff]
    %v2838 = vld [vmem:[%s524 + $0x18] sm:$0xff]
    %v2839 = vld [vmem:[%s524 + $0x20] sm:$0xff]
    %v2840 = vld [vmem:[%s524 + $0x28] sm:$0xff]
    %v2841 = vld [vmem:[%s524 + $0x30] sm:$0xff]
    %v2842 = vld [vmem:[%s524 + $0x38] sm:$0xff]
    %v2843 = vld [vmem:[%s524 + $0x40] sm:$0xf]
    %v2844 = vld [vmem:[%s524 + $0x48] sm:$0xf]
    %v2845 = vld [vmem:[%s524 + $0x50] sm:$0xf]
    %v2846 = vld [vmem:[%s524 + $0x58] sm:$0xf]
    %v2847 = vld [vmem:[%s537] sm:$0xff]
    %v2848 = vld [vmem:[%s537 + $0x8] sm:$0xff]
    %v2849 = vld [vmem:[%s537 + $0x10] sm:$0xff]
    %v2850 = vld [vmem:[%s537 + $0x18] sm:$0xff]
    %v2851 = vld [vmem:[%s537 + $0x20] sm:$0xff]
    %v2852 = vld [vmem:[%s537 + $0x28] sm:$0xff]
    %v2853 = vld [vmem:[%s537 + $0x30] sm:$0xff]
    %v2854 = vld [vmem:[%s537 + $0x38] sm:$0xff]
    %v2855 = vld [vmem:[%s537 + $0x40] sm:$0xf]
    %v2856 = vld [vmem:[%s537 + $0x48] sm:$0xf]
    %v2857 = vld [vmem:[%s537 + $0x50] sm:$0xf]
    %v2858 = vld [vmem:[%s537 + $0x58] sm:$0xf]
    %v2859 = vld [vmem:[%s550] sm:$0xff]
    %v2860 = vld [vmem:[%s550 + $0x8] sm:$0xff]
    %v2861 = vld [vmem:[%s550 + $0x10] sm:$0xff]
    %v2862 = vld [vmem:[%s550 + $0x18] sm:$0xff]
    %v2863 = vld [vmem:[%s550 + $0x20] sm:$0xff]
    %v2864 = vld [vmem:[%s550 + $0x28] sm:$0xff]
    %v2865 = vld [vmem:[%s550 + $0x30] sm:$0xff]
    %v2866 = vld [vmem:[%s550 + $0x38] sm:$0xff]
    %v2867 = vld [vmem:[%s550 + $0x40] sm:$0xf]
    %v2868 = vld [vmem:[%s550 + $0x48] sm:$0xf]
    %v2869 = vld [vmem:[%s550 + $0x50] sm:$0xf]
    %v2870 = vld [vmem:[%s550 + $0x58] sm:$0xf]
    %v2872 = vrot.slane %v490, 4
    %v2873 = vsel %vm52, %v2872, 0
    %v2876 = vsel %vm62, %v2867, 0
    %v2879 = vsel %vm62, %v2868, 0
    %v2882 = vsel %vm62, %v2869, 0
    %v2885 = vsel %vm62, %v2870, 0
    %2887 = vmatpush.msra.mxu0 0.0
    %2888 = vmatpush.msra.mxu0 0.0
    %2889 = vmatpush.msra.mxu0 0.0
    %2890 = vmatpush.msra.mxu0 0.0
    %2891 = vmatpush.msra.mxu0 0.0
    %2892 = vmatpush.msra.mxu0 0.0
    %2893 = vmatpush.msra.mxu0 0.0
    %2894 = vmatpush.msra.mxu0 0.0
    %2895 = vmatpush.msra.mxu0 0.0
    %2896 = vmatpush.msra.mxu0 0.0
    %2897 = vmatpush.msra.mxu0 0.0
    %2898 = vmatpush.msra.mxu0 0.0
    %2899 = vmatpush.msra.mxu0 0.0
    %2900 = vmatpush.msra.mxu0 %v2876
    %2901 = vmatpush.msra.mxu0 %v2863
    %2902 = vmatpush.msra.mxu0 %v2859
    %2903 = vmatmul.f32.gmra.mxu0 %v2873
    %v2904 = vpop.f32.mrf.mxu0
    %v2905 = vadd.f32 0.0, %v2904
    %2906 = vdwg.mxu0
    %2907 = vmatpush.msra.mxu0 0.0
    %2908 = vmatpush.msra.mxu0 0.0
    %2909 = vmatpush.msra.mxu0 0.0
    %2910 = vmatpush.msra.mxu0 0.0
    %2911 = vmatpush.msra.mxu0 0.0
    %2912 = vmatpush.msra.mxu0 0.0
    %2913 = vmatpush.msra.mxu0 0.0
    %2914 = vmatpush.msra.mxu0 0.0
    %2915 = vmatpush.msra.mxu0 0.0
    %2916 = vmatpush.msra.mxu0 0.0
    %2917 = vmatpush.msra.mxu0 0.0
    %2918 = vmatpush.msra.mxu0 0.0
    %2919 = vmatpush.msra.mxu0 0.0
    %2920 = vmatpush.msra.mxu0 %v2879
    %2921 = vmatpush.msra.mxu0 %v2864
    %2922 = vmatpush.msra.mxu0 %v2860
    %2923 = vmatmul.f32.gmra.mxu0 %v2873
    %v2924 = vpop.f32.mrf.mxu0
    %v2925 = vadd.f32 0.0, %v2924
    %2926 = vdwg.mxu0
    %2927 = vmatpush.msra.mxu0 0.0
    %2928 = vmatpush.msra.mxu0 0.0
    %2929 = vmatpush.msra.mxu0 0.0
    %2930 = vmatpush.msra.mxu0 0.0
    %2931 = vmatpush.msra.mxu0 0.0
    %2932 = vmatpush.msra.mxu0 0.0
    %2933 = vmatpush.msra.mxu0 0.0
    %2934 = vmatpush.msra.mxu0 0.0
    %2935 = vmatpush.msra.mxu0 0.0
    %2936 = vmatpush.msra.mxu0 0.0
    %2937 = vmatpush.msra.mxu0 0.0
    %2938 = vmatpush.msra.mxu0 0.0
    %2939 = vmatpush.msra.mxu0 0.0
    %2940 = vmatpush.msra.mxu0 %v2882
    %2941 = vmatpush.msra.mxu0 %v2865
    %2942 = vmatpush.msra.mxu0 %v2861
    %2943 = vmatmul.f32.gmra.mxu0 %v2873
    %v2944 = vpop.f32.mrf.mxu0
    %v2945 = vadd.f32 0.0, %v2944
    %2946 = vdwg.mxu0
    %2947 = vmatpush.msra.mxu0 0.0
    %2948 = vmatpush.msra.mxu0 0.0
    %2949 = vmatpush.msra.mxu0 0.0
    %2950 = vmatpush.msra.mxu0 0.0
    %2951 = vmatpush.msra.mxu0 0.0
    %2952 = vmatpush.msra.mxu0 0.0
    %2953 = vmatpush.msra.mxu0 0.0
    %2954 = vmatpush.msra.mxu0 0.0
    %2955 = vmatpush.msra.mxu0 0.0
    %2956 = vmatpush.msra.mxu0 0.0
    %2957 = vmatpush.msra.mxu0 0.0
    %2958 = vmatpush.msra.mxu0 0.0
    %2959 = vmatpush.msra.mxu0 0.0
    %2960 = vmatpush.msra.mxu0 %v2885
    %2961 = vmatpush.msra.mxu0 %v2866
    %2962 = vmatpush.msra.mxu0 %v2862
    %2963 = vmatmul.f32.gmra.mxu0 %v2873
    %v2964 = vpop.f32.mrf.mxu0
    %v2965 = vadd.f32 0.0, %v2964
    %2966 = vdwg.mxu0
    %v2967 = vsel %vm52, %v490, 0
    %v2970 = vsel %vm62, %v2819, 0
    %v2973 = vsel %vm62, %v2820, 0
    %v2976 = vsel %vm62, %v2821, 0
    %v2979 = vsel %vm62, %v2822, 0
    %2981 = vmatpush.msra.mxu0 0.0
    %2982 = vmatpush.msra.mxu0 0.0
    %2983 = vmatpush.msra.mxu0 0.0
    %2984 = vmatpush.msra.mxu0 0.0
    %2985 = vmatpush.msra.mxu0 0.0
    %2986 = vmatpush.msra.mxu0 0.0
    %2987 = vmatpush.msra.mxu0 0.0
    %2988 = vmatpush.msra.mxu0 0.0
    %2989 = vmatpush.msra.mxu0 0.0
    %2990 = vmatpush.msra.mxu0 0.0
    %2991 = vmatpush.msra.mxu0 0.0
    %2992 = vmatpush.msra.mxu0 0.0
    %2993 = vmatpush.msra.mxu0 0.0
    %2994 = vmatpush.msra.mxu0 %v2970
    %2995 = vmatpush.msra.mxu0 %v2815
    %2996 = vmatpush.msra.mxu0 %v2811
    %2997 = vmatmul.f32.gmra.mxu0 %v2967
    %v2998 = vpop.f32.mrf.mxu0
    %v2999 = vadd.f32 %v2905, %v2998
    %3000 = vdwg.mxu0
    %3001 = vmatpush.msra.mxu0 0.0
    %3002 = vmatpush.msra.mxu0 0.0
    %3003 = vmatpush.msra.mxu0 0.0
    %3004 = vmatpush.msra.mxu0 0.0
    %3005 = vmatpush.msra.mxu0 0.0
    %3006 = vmatpush.msra.mxu0 0.0
    %3007 = vmatpush.msra.mxu0 0.0
    %3008 = vmatpush.msra.mxu0 0.0
    %3009 = vmatpush.msra.mxu0 0.0
    %3010 = vmatpush.msra.mxu0 0.0
    %3011 = vmatpush.msra.mxu0 0.0
    %3012 = vmatpush.msra.mxu0 0.0
    %3013 = vmatpush.msra.mxu0 0.0
    %3014 = vmatpush.msra.mxu0 %v2973
    %3015 = vmatpush.msra.mxu0 %v2816
    %3016 = vmatpush.msra.mxu0 %v2812
    %3017 = vmatmul.f32.gmra.mxu0 %v2967
    %v3018 = vpop.f32.mrf.mxu0
    %v3019 = vadd.f32 %v2925, %v3018
    %3020 = vdwg.mxu0
    %3021 = vmatpush.msra.mxu0 0.0
    %3022 = vmatpush.msra.mxu0 0.0
    %3023 = vmatpush.msra.mxu0 0.0
    %3024 = vmatpush.msra.mxu0 0.0
    %3025 = vmatpush.msra.mxu0 0.0
    %3026 = vmatpush.msra.mxu0 0.0
    %3027 = vmatpush.msra.mxu0 0.0
    %3028 = vmatpush.msra.mxu0 0.0
    %3029 = vmatpush.msra.mxu0 0.0
    %3030 = vmatpush.msra.mxu0 0.0
    %3031 = vmatpush.msra.mxu0 0.0
    %3032 = vmatpush.msra.mxu0 0.0
    %3033 = vmatpush.msra.mxu0 0.0
    %3034 = vmatpush.msra.mxu0 %v2976
    %3035 = vmatpush.msra.mxu0 %v2817
    %3036 = vmatpush.msra.mxu0 %v2813
    %3037 = vmatmul.f32.gmra.mxu0 %v2967
    %v3038 = vpop.f32.mrf.mxu0
    %v3039 = vadd.f32 %v2945, %v3038
    %3040 = vdwg.mxu0
    %3041 = vmatpush.msra.mxu0 0.0
    %3042 = vmatpush.msra.mxu0 0.0
    %3043 = vmatpush.msra.mxu0 0.0
    %3044 = vmatpush.msra.mxu0 0.0
    %3045 = vmatpush.msra.mxu0 0.0
    %3046 = vmatpush.msra.mxu0 0.0
    %3047 = vmatpush.msra.mxu0 0.0
    %3048 = vmatpush.msra.mxu0 0.0
    %3049 = vmatpush.msra.mxu0 0.0
    %3050 = vmatpush.msra.mxu0 0.0
    %3051 = vmatpush.msra.mxu0 0.0
    %3052 = vmatpush.msra.mxu0 0.0
    %3053 = vmatpush.msra.mxu0 0.0
    %3054 = vmatpush.msra.mxu0 %v2979
    %3055 = vmatpush.msra.mxu0 %v2818
    %3056 = vmatpush.msra.mxu0 %v2814
    %3057 = vmatmul.f32.gmra.mxu0 %v2967
    %v3058 = vpop.f32.mrf.mxu0
    %v3059 = vadd.f32 %v2965, %v3058
    %3060 = vdwg.mxu0
    %v3061 = vld [vmem:[%s753] sm:$0xff]
    %v3062 = vld [vmem:[%s753 + $0x8] sm:$0xff]
    %v3063 = vld [vmem:[%s753 + $0x10] sm:$0xff]
    %v3064 = vld [vmem:[%s753 + $0x18] sm:$0xff]
    %v3065 = vld [vmem:[%s753 + $0x20] sm:$0xff]
    %v3066 = vld [vmem:[%s753 + $0x28] sm:$0xff]
    %v3067 = vld [vmem:[%s753 + $0x30] sm:$0xff]
    %v3068 = vld [vmem:[%s753 + $0x38] sm:$0xff]
    %v3069 = vld [vmem:[%s753 + $0x40] sm:$0xf]
    %v3070 = vld [vmem:[%s753 + $0x48] sm:$0xf]
    %v3071 = vld [vmem:[%s753 + $0x50] sm:$0xf]
    %v3072 = vld [vmem:[%s753 + $0x58] sm:$0xf]
    %v3073 = vrot.slane %v490, 5
    %v3074 = vsel %vm52, %v3073, 0
    %v3077 = vsel %vm62, %v3069, 0
    %v3080 = vsel %vm62, %v3070, 0
    %v3083 = vsel %vm62, %v3071, 0
    %v3086 = vsel %vm62, %v3072, 0
    %3088 = vmatpush.msra.mxu0 0.0
    %3089 = vmatpush.msra.mxu0 0.0
    %3090 = vmatpush.msra.mxu0 0.0
    %3091 = vmatpush.msra.mxu0 0.0
    %3092 = vmatpush.msra.mxu0 0.0
    %3093 = vmatpush.msra.mxu0 0.0
    %3094 = vmatpush.msra.mxu0 0.0
    %3095 = vmatpush.msra.mxu0 0.0
    %3096 = vmatpush.msra.mxu0 0.0
    %3097 = vmatpush.msra.mxu0 0.0
    %3098 = vmatpush.msra.mxu0 0.0
    %3099 = vmatpush.msra.mxu0 0.0
    %3100 = vmatpush.msra.mxu0 0.0
    %3101 = vmatpush.msra.mxu0 %v3077
    %3102 = vmatpush.msra.mxu0 %v3065
    %3103 = vmatpush.msra.mxu0 %v3061
    %3104 = vmatmul.f32.gmra.mxu0 %v3074
    %v3105 = vpop.f32.mrf.mxu0
    %v3106 = vadd.f32 0.0, %v3105
    %3107 = vdwg.mxu0
    %3108 = vmatpush.msra.mxu0 0.0
    %3109 = vmatpush.msra.mxu0 0.0
    %3110 = vmatpush.msra.mxu0 0.0
    %3111 = vmatpush.msra.mxu0 0.0
    %3112 = vmatpush.msra.mxu0 0.0
    %3113 = vmatpush.msra.mxu0 0.0
    %3114 = vmatpush.msra.mxu0 0.0
    %3115 = vmatpush.msra.mxu0 0.0
    %3116 = vmatpush.msra.mxu0 0.0
    %3117 = vmatpush.msra.mxu0 0.0
    %3118 = vmatpush.msra.mxu0 0.0
    %3119 = vmatpush.msra.mxu0 0.0
    %3120 = vmatpush.msra.mxu0 0.0
    %3121 = vmatpush.msra.mxu0 %v3080
    %3122 = vmatpush.msra.mxu0 %v3066
    %3123 = vmatpush.msra.mxu0 %v3062
    %3124 = vmatmul.f32.gmra.mxu0 %v3074
    %v3125 = vpop.f32.mrf.mxu0
    %v3126 = vadd.f32 0.0, %v3125
    %3127 = vdwg.mxu0
    %3128 = vmatpush.msra.mxu0 0.0
    %3129 = vmatpush.msra.mxu0 0.0
    %3130 = vmatpush.msra.mxu0 0.0
    %3131 = vmatpush.msra.mxu0 0.0
    %3132 = vmatpush.msra.mxu0 0.0
    %3133 = vmatpush.msra.mxu0 0.0
    %3134 = vmatpush.msra.mxu0 0.0
    %3135 = vmatpush.msra.mxu0 0.0
    %3136 = vmatpush.msra.mxu0 0.0
    %3137 = vmatpush.msra.mxu0 0.0
    %3138 = vmatpush.msra.mxu0 0.0
    %3139 = vmatpush.msra.mxu0 0.0
    %3140 = vmatpush.msra.mxu0 0.0
    %3141 = vmatpush.msra.mxu0 %v3083
    %3142 = vmatpush.msra.mxu0 %v3067
    %3143 = vmatpush.msra.mxu0 %v3063
    %3144 = vmatmul.f32.gmra.mxu0 %v3074
    %v3145 = vpop.f32.mrf.mxu0
    %v3146 = vadd.f32 0.0, %v3145
    %3147 = vdwg.mxu0
    %3148 = vmatpush.msra.mxu0 0.0
    %3149 = vmatpush.msra.mxu0 0.0
    %3150 = vmatpush.msra.mxu0 0.0
    %3151 = vmatpush.msra.mxu0 0.0
    %3152 = vmatpush.msra.mxu0 0.0
    %3153 = vmatpush.msra.mxu0 0.0
    %3154 = vmatpush.msra.mxu0 0.0
    %3155 = vmatpush.msra.mxu0 0.0
    %3156 = vmatpush.msra.mxu0 0.0
    %3157 = vmatpush.msra.mxu0 0.0
    %3158 = vmatpush.msra.mxu0 0.0
    %3159 = vmatpush.msra.mxu0 0.0
    %3160 = vmatpush.msra.mxu0 0.0
    %3161 = vmatpush.msra.mxu0 %v3086
    %3162 = vmatpush.msra.mxu0 %v3068
    %3163 = vmatpush.msra.mxu0 %v3064
    %3164 = vmatmul.f32.gmra.mxu0 %v3074
    %v3165 = vpop.f32.mrf.mxu0
    %v3166 = vadd.f32 0.0, %v3165
    %3167 = vdwg.mxu0
    %v3168 = vrot.slane %v490, 1
    %v3169 = vsel %vm52, %v3168, 0
    %v3172 = vsel %vm62, %v2831, 0
    %v3175 = vsel %vm62, %v2832, 0
    %v3178 = vsel %vm62, %v2833, 0
    %v3181 = vsel %vm62, %v2834, 0
    %3183 = vmatpush.msra.mxu0 0.0
    %3184 = vmatpush.msra.mxu0 0.0
    %3185 = vmatpush.msra.mxu0 0.0
    %3186 = vmatpush.msra.mxu0 0.0
    %3187 = vmatpush.msra.mxu0 0.0
    %3188 = vmatpush.msra.mxu0 0.0
    %3189 = vmatpush.msra.mxu0 0.0
    %3190 = vmatpush.msra.mxu0 0.0
    %3191 = vmatpush.msra.mxu0 0.0
    %3192 = vmatpush.msra.mxu0 0.0
    %3193 = vmatpush.msra.mxu0 0.0
    %3194 = vmatpush.msra.mxu0 0.0
    %3195 = vmatpush.msra.mxu0 0.0
    %3196 = vmatpush.msra.mxu0 %v3172
    %3197 = vmatpush.msra.mxu0 %v2827
    %3198 = vmatpush.msra.mxu0 %v2823
    %3199 = vmatmul.f32.gmra.mxu0 %v3169
    %v3200 = vpop.f32.mrf.mxu0
    %v3201 = vadd.f32 %v3106, %v3200
    %3202 = vdwg.mxu0
    %3203 = vmatpush.msra.mxu0 0.0
    %3204 = vmatpush.msra.mxu0 0.0
    %3205 = vmatpush.msra.mxu0 0.0
    %3206 = vmatpush.msra.mxu0 0.0
    %3207 = vmatpush.msra.mxu0 0.0
    %3208 = vmatpush.msra.mxu0 0.0
    %3209 = vmatpush.msra.mxu0 0.0
    %3210 = vmatpush.msra.mxu0 0.0
    %3211 = vmatpush.msra.mxu0 0.0
    %3212 = vmatpush.msra.mxu0 0.0
    %3213 = vmatpush.msra.mxu0 0.0
    %3214 = vmatpush.msra.mxu0 0.0
    %3215 = vmatpush.msra.mxu0 0.0
    %3216 = vmatpush.msra.mxu0 %v3175
    %3217 = vmatpush.msra.mxu0 %v2828
    %3218 = vmatpush.msra.mxu0 %v2824
    %3219 = vmatmul.f32.gmra.mxu0 %v3169
    %v3220 = vpop.f32.mrf.mxu0
    %v3221 = vadd.f32 %v3126, %v3220
    %3222 = vdwg.mxu0
    %3223 = vmatpush.msra.mxu0 0.0
    %3224 = vmatpush.msra.mxu0 0.0
    %3225 = vmatpush.msra.mxu0 0.0
    %3226 = vmatpush.msra.mxu0 0.0
    %3227 = vmatpush.msra.mxu0 0.0
    %3228 = vmatpush.msra.mxu0 0.0
    %3229 = vmatpush.msra.mxu0 0.0
    %3230 = vmatpush.msra.mxu0 0.0
    %3231 = vmatpush.msra.mxu0 0.0
    %3232 = vmatpush.msra.mxu0 0.0
    %3233 = vmatpush.msra.mxu0 0.0
    %3234 = vmatpush.msra.mxu0 0.0
    %3235 = vmatpush.msra.mxu0 0.0
    %3236 = vmatpush.msra.mxu0 %v3178
    %3237 = vmatpush.msra.mxu0 %v2829
    %3238 = vmatpush.msra.mxu0 %v2825
    %3239 = vmatmul.f32.gmra.mxu0 %v3169
    %v3240 = vpop.f32.mrf.mxu0
    %v3241 = vadd.f32 %v3146, %v3240
    %3242 = vdwg.mxu0
    %3243 = vmatpush.msra.mxu0 0.0
    %3244 = vmatpush.msra.mxu0 0.0
    %3245 = vmatpush.msra.mxu0 0.0
    %3246 = vmatpush.msra.mxu0 0.0
    %3247 = vmatpush.msra.mxu0 0.0
    %3248 = vmatpush.msra.mxu0 0.0
    %3249 = vmatpush.msra.mxu0 0.0
    %3250 = vmatpush.msra.mxu0 0.0
    %3251 = vmatpush.msra.mxu0 0.0
    %3252 = vmatpush.msra.mxu0 0.0
    %3253 = vmatpush.msra.mxu0 0.0
    %3254 = vmatpush.msra.mxu0 0.0
    %3255 = vmatpush.msra.mxu0 0.0
    %3256 = vmatpush.msra.mxu0 %v3181
    %3257 = vmatpush.msra.mxu0 %v2830
    %3258 = vmatpush.msra.mxu0 %v2826
    %3259 = vmatmul.f32.gmra.mxu0 %v3169
    %v3260 = vpop.f32.mrf.mxu0
    %v3261 = vadd.f32 %v3166, %v3260
    %3262 = vdwg.mxu0
    %v3263 = vld [vmem:[%s956] sm:$0xff]
    %v3264 = vld [vmem:[%s956 + $0x8] sm:$0xff]
    %v3265 = vld [vmem:[%s956 + $0x10] sm:$0xff]
    %v3266 = vld [vmem:[%s956 + $0x18] sm:$0xff]
    %v3267 = vld [vmem:[%s956 + $0x20] sm:$0xff]
    %v3268 = vld [vmem:[%s956 + $0x28] sm:$0xff]
    %v3269 = vld [vmem:[%s956 + $0x30] sm:$0xff]
    %v3270 = vld [vmem:[%s956 + $0x38] sm:$0xff]
    %v3271 = vld [vmem:[%s956 + $0x40] sm:$0xf]
    %v3272 = vld [vmem:[%s956 + $0x48] sm:$0xf]
    %v3273 = vld [vmem:[%s956 + $0x50] sm:$0xf]
    %v3274 = vld [vmem:[%s956 + $0x58] sm:$0xf]
    %v3275 = vrot.slane %v490, 6
    %v3276 = vsel %vm52, %v3275, 0
    %v3279 = vsel %vm62, %v3271, 0
    %v3282 = vsel %vm62, %v3272, 0
    %v3285 = vsel %vm62, %v3273, 0
    %v3288 = vsel %vm62, %v3274, 0
    %3290 = vmatpush.msra.mxu0 0.0
    %3291 = vmatpush.msra.mxu0 0.0
    %3292 = vmatpush.msra.mxu0 0.0
    %3293 = vmatpush.msra.mxu0 0.0
    %3294 = vmatpush.msra.mxu0 0.0
    %3295 = vmatpush.msra.mxu0 0.0
    %3296 = vmatpush.msra.mxu0 0.0
    %3297 = vmatpush.msra.mxu0 0.0
    %3298 = vmatpush.msra.mxu0 0.0
    %3299 = vmatpush.msra.mxu0 0.0
    %3300 = vmatpush.msra.mxu0 0.0
    %3301 = vmatpush.msra.mxu0 0.0
    %3302 = vmatpush.msra.mxu0 0.0
    %3303 = vmatpush.msra.mxu0 %v3279
    %3304 = vmatpush.msra.mxu0 %v3267
    %3305 = vmatpush.msra.mxu0 %v3263
    %3306 = vmatmul.f32.gmra.mxu0 %v3276
    %v3307 = vpop.f32.mrf.mxu0
    %v3308 = vadd.f32 0.0, %v3307
    %3309 = vdwg.mxu0
    %3310 = vmatpush.msra.mxu0 0.0
    %3311 = vmatpush.msra.mxu0 0.0
    %3312 = vmatpush.msra.mxu0 0.0
    %3313 = vmatpush.msra.mxu0 0.0
    %3314 = vmatpush.msra.mxu0 0.0
    %3315 = vmatpush.msra.mxu0 0.0
    %3316 = vmatpush.msra.mxu0 0.0
    %3317 = vmatpush.msra.mxu0 0.0
    %3318 = vmatpush.msra.mxu0 0.0
    %3319 = vmatpush.msra.mxu0 0.0
    %3320 = vmatpush.msra.mxu0 0.0
    %3321 = vmatpush.msra.mxu0 0.0
    %3322 = vmatpush.msra.mxu0 0.0
    %3323 = vmatpush.msra.mxu0 %v3282
    %3324 = vmatpush.msra.mxu0 %v3268
    %3325 = vmatpush.msra.mxu0 %v3264
    %3326 = vmatmul.f32.gmra.mxu0 %v3276
    %v3327 = vpop.f32.mrf.mxu0
    %v3328 = vadd.f32 0.0, %v3327
    %3329 = vdwg.mxu0
    %3330 = vmatpush.msra.mxu0 0.0
    %3331 = vmatpush.msra.mxu0 0.0
    %3332 = vmatpush.msra.mxu0 0.0
    %3333 = vmatpush.msra.mxu0 0.0
    %3334 = vmatpush.msra.mxu0 0.0
    %3335 = vmatpush.msra.mxu0 0.0
    %3336 = vmatpush.msra.mxu0 0.0
    %3337 = vmatpush.msra.mxu0 0.0
    %3338 = vmatpush.msra.mxu0 0.0
    %3339 = vmatpush.msra.mxu0 0.0
    %3340 = vmatpush.msra.mxu0 0.0
    %3341 = vmatpush.msra.mxu0 0.0
    %3342 = vmatpush.msra.mxu0 0.0
    %3343 = vmatpush.msra.mxu0 %v3285
    %3344 = vmatpush.msra.mxu0 %v3269
    %3345 = vmatpush.msra.mxu0 %v3265
    %3346 = vmatmul.f32.gmra.mxu0 %v3276
    %v3347 = vpop.f32.mrf.mxu0
    %v3348 = vadd.f32 0.0, %v3347
    %3349 = vdwg.mxu0
    %3350 = vmatpush.msra.mxu0 0.0
    %3351 = vmatpush.msra.mxu0 0.0
    %3352 = vmatpush.msra.mxu0 0.0
    %3353 = vmatpush.msra.mxu0 0.0
    %3354 = vmatpush.msra.mxu0 0.0
    %3355 = vmatpush.msra.mxu0 0.0
    %3356 = vmatpush.msra.mxu0 0.0
    %3357 = vmatpush.msra.mxu0 0.0
    %3358 = vmatpush.msra.mxu0 0.0
    %3359 = vmatpush.msra.mxu0 0.0
    %3360 = vmatpush.msra.mxu0 0.0
    %3361 = vmatpush.msra.mxu0 0.0
    %3362 = vmatpush.msra.mxu0 0.0
    %3363 = vmatpush.msra.mxu0 %v3288
    %3364 = vmatpush.msra.mxu0 %v3270
    %3365 = vmatpush.msra.mxu0 %v3266
    %3366 = vmatmul.f32.gmra.mxu0 %v3276
    %v3367 = vpop.f32.mrf.mxu0
    %v3368 = vadd.f32 0.0, %v3367
    %3369 = vdwg.mxu0
    %v3370 = vrot.slane %v490, 2
    %v3371 = vsel %vm52, %v3370, 0
    %v3374 = vsel %vm62, %v2843, 0
    %v3377 = vsel %vm62, %v2844, 0
    %v3380 = vsel %vm62, %v2845, 0
    %v3383 = vsel %vm62, %v2846, 0
    %3385 = vmatpush.msra.mxu0 0.0
    %3386 = vmatpush.msra.mxu0 0.0
    %3387 = vmatpush.msra.mxu0 0.0
    %3388 = vmatpush.msra.mxu0 0.0
    %3389 = vmatpush.msra.mxu0 0.0
    %3390 = vmatpush.msra.mxu0 0.0
    %3391 = vmatpush.msra.mxu0 0.0
    %3392 = vmatpush.msra.mxu0 0.0
    %3393 = vmatpush.msra.mxu0 0.0
    %3394 = vmatpush.msra.mxu0 0.0
    %3395 = vmatpush.msra.mxu0 0.0
    %3396 = vmatpush.msra.mxu0 0.0
    %3397 = vmatpush.msra.mxu0 0.0
    %3398 = vmatpush.msra.mxu0 %v3374
    %3399 = vmatpush.msra.mxu0 %v2839
    %3400 = vmatpush.msra.mxu0 %v2835
    %3401 = vmatmul.f32.gmra.mxu0 %v3371
    %v3402 = vpop.f32.mrf.mxu0
    %v3403 = vadd.f32 %v3308, %v3402
    %3404 = vdwg.mxu0
    %3405 = vmatpush.msra.mxu0 0.0
    %3406 = vmatpush.msra.mxu0 0.0
    %3407 = vmatpush.msra.mxu0 0.0
    %3408 = vmatpush.msra.mxu0 0.0
    %3409 = vmatpush.msra.mxu0 0.0
    %3410 = vmatpush.msra.mxu0 0.0
    %3411 = vmatpush.msra.mxu0 0.0
    %3412 = vmatpush.msra.mxu0 0.0
    %3413 = vmatpush.msra.mxu0 0.0
    %3414 = vmatpush.msra.mxu0 0.0
    %3415 = vmatpush.msra.mxu0 0.0
    %3416 = vmatpush.msra.mxu0 0.0
    %3417 = vmatpush.msra.mxu0 0.0
    %3418 = vmatpush.msra.mxu0 %v3377
    %3419 = vmatpush.msra.mxu0 %v2840
    %3420 = vmatpush.msra.mxu0 %v2836
    %3421 = vmatmul.f32.gmra.mxu0 %v3371
    %v3422 = vpop.f32.mrf.mxu0
    %v3423 = vadd.f32 %v3328, %v3422
    %3424 = vdwg.mxu0
    %3425 = vmatpush.msra.mxu0 0.0
    %3426 = vmatpush.msra.mxu0 0.0
    %3427 = vmatpush.msra.mxu0 0.0
    %3428 = vmatpush.msra.mxu0 0.0
    %3429 = vmatpush.msra.mxu0 0.0
    %3430 = vmatpush.msra.mxu0 0.0
    %3431 = vmatpush.msra.mxu0 0.0
    %3432 = vmatpush.msra.mxu0 0.0
    %3433 = vmatpush.msra.mxu0 0.0
    %3434 = vmatpush.msra.mxu0 0.0
    %3435 = vmatpush.msra.mxu0 0.0
    %3436 = vmatpush.msra.mxu0 0.0
    %3437 = vmatpush.msra.mxu0 0.0
    %3438 = vmatpush.msra.mxu0 %v3380
    %3439 = vmatpush.msra.mxu0 %v2841
    %3440 = vmatpush.msra.mxu0 %v2837
    %3441 = vmatmul.f32.gmra.mxu0 %v3371
    %v3442 = vpop.f32.mrf.mxu0
    %v3443 = vadd.f32 %v3348, %v3442
    %3444 = vdwg.mxu0
    %3445 = vmatpush.msra.mxu0 0.0
    %3446 = vmatpush.msra.mxu0 0.0
    %3447 = vmatpush.msra.mxu0 0.0
    %3448 = vmatpush.msra.mxu0 0.0
    %3449 = vmatpush.msra.mxu0 0.0
    %3450 = vmatpush.msra.mxu0 0.0
    %3451 = vmatpush.msra.mxu0 0.0
    %3452 = vmatpush.msra.mxu0 0.0
    %3453 = vmatpush.msra.mxu0 0.0
    %3454 = vmatpush.msra.mxu0 0.0
    %3455 = vmatpush.msra.mxu0 0.0
    %3456 = vmatpush.msra.mxu0 0.0
    %3457 = vmatpush.msra.mxu0 0.0
    %3458 = vmatpush.msra.mxu0 %v3383
    %3459 = vmatpush.msra.mxu0 %v2842
    %3460 = vmatpush.msra.mxu0 %v2838
    %3461 = vmatmul.f32.gmra.mxu0 %v3371
    %v3462 = vpop.f32.mrf.mxu0
    %v3463 = vadd.f32 %v3368, %v3462
    %3464 = vdwg.mxu0
    %v3465 = vld [vmem:[%s1159] sm:$0xff]
    %v3466 = vld [vmem:[%s1159 + $0x8] sm:$0xff]
    %v3467 = vld [vmem:[%s1159 + $0x10] sm:$0xff]
    %v3468 = vld [vmem:[%s1159 + $0x18] sm:$0xff]
    %v3469 = vld [vmem:[%s1159 + $0x20] sm:$0xff]
    %v3470 = vld [vmem:[%s1159 + $0x28] sm:$0xff]
    %v3471 = vld [vmem:[%s1159 + $0x30] sm:$0xff]
    %v3472 = vld [vmem:[%s1159 + $0x38] sm:$0xff]
    %v3473 = vld [vmem:[%s1159 + $0x40] sm:$0xf]
    %v3474 = vld [vmem:[%s1159 + $0x48] sm:$0xf]
    %v3475 = vld [vmem:[%s1159 + $0x50] sm:$0xf]
    %v3476 = vld [vmem:[%s1159 + $0x58] sm:$0xf]
    %v3477 = vrot.slane %v490, 7
    %v3478 = vsel %vm52, %v3477, 0
    %v3481 = vsel %vm62, %v3473, 0
    %v3484 = vsel %vm62, %v3474, 0
    %v3487 = vsel %vm62, %v3475, 0
    %v3490 = vsel %vm62, %v3476, 0
    %3492 = vmatpush.msra.mxu0 0.0
    %3493 = vmatpush.msra.mxu0 0.0
    %3494 = vmatpush.msra.mxu0 0.0
    %3495 = vmatpush.msra.mxu0 0.0
    %3496 = vmatpush.msra.mxu0 0.0
    %3497 = vmatpush.msra.mxu0 0.0
    %3498 = vmatpush.msra.mxu0 0.0
    %3499 = vmatpush.msra.mxu0 0.0
    %3500 = vmatpush.msra.mxu0 0.0
    %3501 = vmatpush.msra.mxu0 0.0
    %3502 = vmatpush.msra.mxu0 0.0
    %3503 = vmatpush.msra.mxu0 0.0
    %3504 = vmatpush.msra.mxu0 0.0
    %3505 = vmatpush.msra.mxu0 %v3481
    %3506 = vmatpush.msra.mxu0 %v3469
    %3507 = vmatpush.msra.mxu0 %v3465
    %3508 = vmatmul.f32.gmra.mxu0 %v3478
    %v3509 = vpop.f32.mrf.mxu0
    %v3510 = vadd.f32 0.0, %v3509
    %3511 = vdwg.mxu0
    %3512 = vmatpush.msra.mxu0 0.0
    %3513 = vmatpush.msra.mxu0 0.0
    %3514 = vmatpush.msra.mxu0 0.0
    %3515 = vmatpush.msra.mxu0 0.0
    %3516 = vmatpush.msra.mxu0 0.0
    %3517 = vmatpush.msra.mxu0 0.0
    %3518 = vmatpush.msra.mxu0 0.0
    %3519 = vmatpush.msra.mxu0 0.0
    %3520 = vmatpush.msra.mxu0 0.0
    %3521 = vmatpush.msra.mxu0 0.0
    %3522 = vmatpush.msra.mxu0 0.0
    %3523 = vmatpush.msra.mxu0 0.0
    %3524 = vmatpush.msra.mxu0 0.0
    %3525 = vmatpush.msra.mxu0 %v3484
    %3526 = vmatpush.msra.mxu0 %v3470
    %3527 = vmatpush.msra.mxu0 %v3466
    %3528 = vmatmul.f32.gmra.mxu0 %v3478
    %v3529 = vpop.f32.mrf.mxu0
    %v3530 = vadd.f32 0.0, %v3529
    %3531 = vdwg.mxu0
    %3532 = vmatpush.msra.mxu0 0.0
    %3533 = vmatpush.msra.mxu0 0.0
    %3534 = vmatpush.msra.mxu0 0.0
    %3535 = vmatpush.msra.mxu0 0.0
    %3536 = vmatpush.msra.mxu0 0.0
    %3537 = vmatpush.msra.mxu0 0.0
    %3538 = vmatpush.msra.mxu0 0.0
    %3539 = vmatpush.msra.mxu0 0.0
    %3540 = vmatpush.msra.mxu0 0.0
    %3541 = vmatpush.msra.mxu0 0.0
    %3542 = vmatpush.msra.mxu0 0.0
    %3543 = vmatpush.msra.mxu0 0.0
    %3544 = vmatpush.msra.mxu0 0.0
    %3545 = vmatpush.msra.mxu0 %v3487
    %3546 = vmatpush.msra.mxu0 %v3471
    %3547 = vmatpush.msra.mxu0 %v3467
    %3548 = vmatmul.f32.gmra.mxu0 %v3478
    %v3549 = vpop.f32.mrf.mxu0
    %v3550 = vadd.f32 0.0, %v3549
    %3551 = vdwg.mxu0
    %3552 = vmatpush.msra.mxu0 0.0
    %3553 = vmatpush.msra.mxu0 0.0
    %3554 = vmatpush.msra.mxu0 0.0
    %3555 = vmatpush.msra.mxu0 0.0
    %3556 = vmatpush.msra.mxu0 0.0
    %3557 = vmatpush.msra.mxu0 0.0
    %3558 = vmatpush.msra.mxu0 0.0
    %3559 = vmatpush.msra.mxu0 0.0
    %3560 = vmatpush.msra.mxu0 0.0
    %3561 = vmatpush.msra.mxu0 0.0
    %3562 = vmatpush.msra.mxu0 0.0
    %3563 = vmatpush.msra.mxu0 0.0
    %3564 = vmatpush.msra.mxu0 0.0
    %3565 = vmatpush.msra.mxu0 %v3490
    %3566 = vmatpush.msra.mxu0 %v3472
    %3567 = vmatpush.msra.mxu0 %v3468
    %3568 = vmatmul.f32.gmra.mxu0 %v3478
    %v3569 = vpop.f32.mrf.mxu0
    %v3570 = vadd.f32 0.0, %v3569
    %3571 = vdwg.mxu0
    %v3572 = vrot.slane %v490, 3
    %v3573 = vsel %vm52, %v3572, 0
    %v3576 = vsel %vm62, %v2855, 0
    %v3579 = vsel %vm62, %v2856, 0
    %v3582 = vsel %vm62, %v2857, 0
    %v3585 = vsel %vm62, %v2858, 0
    %3587 = vmatpush.msra.mxu0 0.0
    %3588 = vmatpush.msra.mxu0 0.0
    %3589 = vmatpush.msra.mxu0 0.0
    %3590 = vmatpush.msra.mxu0 0.0
    %3591 = vmatpush.msra.mxu0 0.0
    %3592 = vmatpush.msra.mxu0 0.0
    %3593 = vmatpush.msra.mxu0 0.0
    %3594 = vmatpush.msra.mxu0 0.0
    %3595 = vmatpush.msra.mxu0 0.0
    %3596 = vmatpush.msra.mxu0 0.0
    %3597 = vmatpush.msra.mxu0 0.0
    %3598 = vmatpush.msra.mxu0 0.0
    %3599 = vmatpush.msra.mxu0 0.0
    %3600 = vmatpush.msra.mxu0 %v3576
    %3601 = vmatpush.msra.mxu0 %v2851
    %3602 = vmatpush.msra.mxu0 %v2847
    %3603 = vmatmul.f32.gmra.mxu0 %v3573
    %v3604 = vpop.f32.mrf.mxu0
    %v3605 = vadd.f32 %v3510, %v3604
    %3606 = vdwg.mxu0
    %3607 = vmatpush.msra.mxu0 0.0
    %3608 = vmatpush.msra.mxu0 0.0
    %3609 = vmatpush.msra.mxu0 0.0
    %3610 = vmatpush.msra.mxu0 0.0
    %3611 = vmatpush.msra.mxu0 0.0
    %3612 = vmatpush.msra.mxu0 0.0
    %3613 = vmatpush.msra.mxu0 0.0
    %3614 = vmatpush.msra.mxu0 0.0
    %3615 = vmatpush.msra.mxu0 0.0
    %3616 = vmatpush.msra.mxu0 0.0
    %3617 = vmatpush.msra.mxu0 0.0
    %3618 = vmatpush.msra.mxu0 0.0
    %3619 = vmatpush.msra.mxu0 0.0
    %3620 = vmatpush.msra.mxu0 %v3579
    %3621 = vmatpush.msra.mxu0 %v2852
    %3622 = vmatpush.msra.mxu0 %v2848
    %3623 = vmatmul.f32.gmra.mxu0 %v3573
    %v3624 = vpop.f32.mrf.mxu0
    %v3625 = vadd.f32 %v3530, %v3624
    %3626 = vdwg.mxu0
    %3627 = vmatpush.msra.mxu0 0.0
    %3628 = vmatpush.msra.mxu0 0.0
    %3629 = vmatpush.msra.mxu0 0.0
    %3630 = vmatpush.msra.mxu0 0.0
    %3631 = vmatpush.msra.mxu0 0.0
    %3632 = vmatpush.msra.mxu0 0.0
    %3633 = vmatpush.msra.mxu0 0.0
    %3634 = vmatpush.msra.mxu0 0.0
    %3635 = vmatpush.msra.mxu0 0.0
    %3636 = vmatpush.msra.mxu0 0.0
    %3637 = vmatpush.msra.mxu0 0.0
    %3638 = vmatpush.msra.mxu0 0.0
    %3639 = vmatpush.msra.mxu0 0.0
    %3640 = vmatpush.msra.mxu0 %v3582
    %3641 = vmatpush.msra.mxu0 %v2853
    %3642 = vmatpush.msra.mxu0 %v2849
    %3643 = vmatmul.f32.gmra.mxu0 %v3573
    %v3644 = vpop.f32.mrf.mxu0
    %v3645 = vadd.f32 %v3550, %v3644
    %3646 = vdwg.mxu0
    %3647 = vmatpush.msra.mxu0 0.0
    %3648 = vmatpush.msra.mxu0 0.0
    %3649 = vmatpush.msra.mxu0 0.0
    %3650 = vmatpush.msra.mxu0 0.0
    %3651 = vmatpush.msra.mxu0 0.0
    %3652 = vmatpush.msra.mxu0 0.0
    %3653 = vmatpush.msra.mxu0 0.0
    %3654 = vmatpush.msra.mxu0 0.0
    %3655 = vmatpush.msra.mxu0 0.0
    %3656 = vmatpush.msra.mxu0 0.0
    %3657 = vmatpush.msra.mxu0 0.0
    %3658 = vmatpush.msra.mxu0 0.0
    %3659 = vmatpush.msra.mxu0 0.0
    %3660 = vmatpush.msra.mxu0 %v3585
    %3661 = vmatpush.msra.mxu0 %v2854
    %3662 = vmatpush.msra.mxu0 %v2850
    %3663 = vmatmul.f32.gmra.mxu0 %v3573
    %v3664 = vpop.f32.mrf.mxu0
    %v3665 = vadd.f32 %v3570, %v3664
    %3666 = vdwg.mxu0
    %v3667 = vld [vmem:[%s1362] sm:$0xff]
    %v3668 = vld [vmem:[%s1362 + $0x8] sm:$0xff]
    %v3669 = vld [vmem:[%s1362 + $0x10] sm:$0xff]
    %v3670 = vld [vmem:[%s1362 + $0x18] sm:$0xff]
    %v3671 = vld [vmem:[%s1362 + $0x20] sm:$0xff]
    %v3672 = vld [vmem:[%s1362 + $0x28] sm:$0xff]
    %v3673 = vld [vmem:[%s1362 + $0x30] sm:$0xff]
    %v3674 = vld [vmem:[%s1362 + $0x38] sm:$0xff]
    %v3675 = vld [vmem:[%s1362 + $0x40] sm:$0xf]
    %v3676 = vld [vmem:[%s1362 + $0x48] sm:$0xf]
    %v3677 = vld [vmem:[%s1362 + $0x50] sm:$0xf]
    %v3678 = vld [vmem:[%s1362 + $0x58] sm:$0xf]
    %v3680 = vsel %vm52, %v491, 0
    %v3683 = vsel %vm62, %v3675, 0
    %v3686 = vsel %vm62, %v3676, 0
    %v3689 = vsel %vm62, %v3677, 0
    %v3692 = vsel %vm62, %v3678, 0
    %3694 = vmatpush.msra.mxu0 0.0
    %3695 = vmatpush.msra.mxu0 0.0
    %3696 = vmatpush.msra.mxu0 0.0
    %3697 = vmatpush.msra.mxu0 0.0
    %3698 = vmatpush.msra.mxu0 0.0
    %3699 = vmatpush.msra.mxu0 0.0
    %3700 = vmatpush.msra.mxu0 0.0
    %3701 = vmatpush.msra.mxu0 0.0
    %3702 = vmatpush.msra.mxu0 0.0
    %3703 = vmatpush.msra.mxu0 0.0
    %3704 = vmatpush.msra.mxu0 0.0
    %3705 = vmatpush.msra.mxu0 0.0
    %3706 = vmatpush.msra.mxu0 0.0
    %3707 = vmatpush.msra.mxu0 %v3683
    %3708 = vmatpush.msra.mxu0 %v3671
    %3709 = vmatpush.msra.mxu0 %v3667
    %3710 = vmatmul.f32.gmra.mxu0 %v3680
    %v3711 = vpop.f32.mrf.mxu0
    %v3712 = vadd.f32 0.0, %v3711
    %3713 = vdwg.mxu0
    %3714 = vmatpush.msra.mxu0 0.0
    %3715 = vmatpush.msra.mxu0 0.0
    %3716 = vmatpush.msra.mxu0 0.0
    %3717 = vmatpush.msra.mxu0 0.0
    %3718 = vmatpush.msra.mxu0 0.0
    %3719 = vmatpush.msra.mxu0 0.0
    %3720 = vmatpush.msra.mxu0 0.0
    %3721 = vmatpush.msra.mxu0 0.0
    %3722 = vmatpush.msra.mxu0 0.0
    %3723 = vmatpush.msra.mxu0 0.0
    %3724 = vmatpush.msra.mxu0 0.0
    %3725 = vmatpush.msra.mxu0 0.0
    %3726 = vmatpush.msra.mxu0 0.0
    %3727 = vmatpush.msra.mxu0 %v3686
    %3728 = vmatpush.msra.mxu0 %v3672
    %3729 = vmatpush.msra.mxu0 %v3668
    %3730 = vmatmul.f32.gmra.mxu0 %v3680
    %v3731 = vpop.f32.mrf.mxu0
    %v3732 = vadd.f32 0.0, %v3731
    %3733 = vdwg.mxu0
    %3734 = vmatpush.msra.mxu0 0.0
    %3735 = vmatpush.msra.mxu0 0.0
    %3736 = vmatpush.msra.mxu0 0.0
    %3737 = vmatpush.msra.mxu0 0.0
    %3738 = vmatpush.msra.mxu0 0.0
    %3739 = vmatpush.msra.mxu0 0.0
    %3740 = vmatpush.msra.mxu0 0.0
    %3741 = vmatpush.msra.mxu0 0.0
    %3742 = vmatpush.msra.mxu0 0.0
    %3743 = vmatpush.msra.mxu0 0.0
    %3744 = vmatpush.msra.mxu0 0.0
    %3745 = vmatpush.msra.mxu0 0.0
    %3746 = vmatpush.msra.mxu0 0.0
    %3747 = vmatpush.msra.mxu0 %v3689
    %3748 = vmatpush.msra.mxu0 %v3673
    %3749 = vmatpush.msra.mxu0 %v3669
    %3750 = vmatmul.f32.gmra.mxu0 %v3680
    %v3751 = vpop.f32.mrf.mxu0
    %v3752 = vadd.f32 0.0, %v3751
    %3753 = vdwg.mxu0
    %3754 = vmatpush.msra.mxu0 0.0
    %3755 = vmatpush.msra.mxu0 0.0
    %3756 = vmatpush.msra.mxu0 0.0
    %3757 = vmatpush.msra.mxu0 0.0
    %3758 = vmatpush.msra.mxu0 0.0
    %3759 = vmatpush.msra.mxu0 0.0
    %3760 = vmatpush.msra.mxu0 0.0
    %3761 = vmatpush.msra.mxu0 0.0
    %3762 = vmatpush.msra.mxu0 0.0
    %3763 = vmatpush.msra.mxu0 0.0
    %3764 = vmatpush.msra.mxu0 0.0
    %3765 = vmatpush.msra.mxu0 0.0
    %3766 = vmatpush.msra.mxu0 0.0
    %3767 = vmatpush.msra.mxu0 %v3692
    %3768 = vmatpush.msra.mxu0 %v3674
    %3769 = vmatpush.msra.mxu0 %v3670
    %3770 = vmatmul.f32.gmra.mxu0 %v3680
    %v3771 = vpop.f32.mrf.mxu0
    %v3772 = vadd.f32 0.0, %v3771
    %3773 = vdwg.mxu0
    %v3774 = vadd.f32 %v2999, %v3712
    %v3775 = vadd.f32 %v3019, %v3732
    %v3776 = vadd.f32 %v3039, %v3752
    %v3777 = vadd.f32 %v3059, %v3772
    %v3778 = vld [vmem:[%s1474] sm:$0xff]
    %v3779 = vld [vmem:[%s1474 + $0x8] sm:$0xff]
    %v3780 = vld [vmem:[%s1474 + $0x10] sm:$0xff]
    %v3781 = vld [vmem:[%s1474 + $0x18] sm:$0xff]
    %v3782 = vld [vmem:[%s1474 + $0x20] sm:$0xff]
    %v3783 = vld [vmem:[%s1474 + $0x28] sm:$0xff]
    %v3784 = vld [vmem:[%s1474 + $0x30] sm:$0xff]
    %v3785 = vld [vmem:[%s1474 + $0x38] sm:$0xff]
    %v3786 = vld [vmem:[%s1474 + $0x40] sm:$0xf]
    %v3787 = vld [vmem:[%s1474 + $0x48] sm:$0xf]
    %v3788 = vld [vmem:[%s1474 + $0x50] sm:$0xf]
    %v3789 = vld [vmem:[%s1474 + $0x58] sm:$0xf]
    %v3790 = vrot.slane %v491, 1
    %v3791 = vsel %vm52, %v3790, 0
    %v3794 = vsel %vm62, %v3786, 0
    %v3797 = vsel %vm62, %v3787, 0
    %v3800 = vsel %vm62, %v3788, 0
    %v3803 = vsel %vm62, %v3789, 0
    %3805 = vmatpush.msra.mxu0 0.0
    %3806 = vmatpush.msra.mxu0 0.0
    %3807 = vmatpush.msra.mxu0 0.0
    %3808 = vmatpush.msra.mxu0 0.0
    %3809 = vmatpush.msra.mxu0 0.0
    %3810 = vmatpush.msra.mxu0 0.0
    %3811 = vmatpush.msra.mxu0 0.0
    %3812 = vmatpush.msra.mxu0 0.0
    %3813 = vmatpush.msra.mxu0 0.0
    %3814 = vmatpush.msra.mxu0 0.0
    %3815 = vmatpush.msra.mxu0 0.0
    %3816 = vmatpush.msra.mxu0 0.0
    %3817 = vmatpush.msra.mxu0 0.0
    %3818 = vmatpush.msra.mxu0 %v3794
    %3819 = vmatpush.msra.mxu0 %v3782
    %3820 = vmatpush.msra.mxu0 %v3778
    %3821 = vmatmul.f32.gmra.mxu0 %v3791
    %v3822 = vpop.f32.mrf.mxu0
    %v3823 = vadd.f32 0.0, %v3822
    %3824 = vdwg.mxu0
    %3825 = vmatpush.msra.mxu0 0.0
    %3826 = vmatpush.msra.mxu0 0.0
    %3827 = vmatpush.msra.mxu0 0.0
    %3828 = vmatpush.msra.mxu0 0.0
    %3829 = vmatpush.msra.mxu0 0.0
    %3830 = vmatpush.msra.mxu0 0.0
    %3831 = vmatpush.msra.mxu0 0.0
    %3832 = vmatpush.msra.mxu0 0.0
    %3833 = vmatpush.msra.mxu0 0.0
    %3834 = vmatpush.msra.mxu0 0.0
    %3835 = vmatpush.msra.mxu0 0.0
    %3836 = vmatpush.msra.mxu0 0.0
    %3837 = vmatpush.msra.mxu0 0.0
    %3838 = vmatpush.msra.mxu0 %v3797
    %3839 = vmatpush.msra.mxu0 %v3783
    %3840 = vmatpush.msra.mxu0 %v3779
    %3841 = vmatmul.f32.gmra.mxu0 %v3791
    %v3842 = vpop.f32.mrf.mxu0
    %v3843 = vadd.f32 0.0, %v3842
    %3844 = vdwg.mxu0
    %3845 = vmatpush.msra.mxu0 0.0
    %3846 = vmatpush.msra.mxu0 0.0
    %3847 = vmatpush.msra.mxu0 0.0
    %3848 = vmatpush.msra.mxu0 0.0
    %3849 = vmatpush.msra.mxu0 0.0
    %3850 = vmatpush.msra.mxu0 0.0
    %3851 = vmatpush.msra.mxu0 0.0
    %3852 = vmatpush.msra.mxu0 0.0
    %3853 = vmatpush.msra.mxu0 0.0
    %3854 = vmatpush.msra.mxu0 0.0
    %3855 = vmatpush.msra.mxu0 0.0
    %3856 = vmatpush.msra.mxu0 0.0
    %3857 = vmatpush.msra.mxu0 0.0
    %3858 = vmatpush.msra.mxu0 %v3800
    %3859 = vmatpush.msra.mxu0 %v3784
    %3860 = vmatpush.msra.mxu0 %v3780
    %3861 = vmatmul.f32.gmra.mxu0 %v3791
    %v3862 = vpop.f32.mrf.mxu0
    %v3863 = vadd.f32 0.0, %v3862
    %3864 = vdwg.mxu0
    %3865 = vmatpush.msra.mxu0 0.0
    %3866 = vmatpush.msra.mxu0 0.0
    %3867 = vmatpush.msra.mxu0 0.0
    %3868 = vmatpush.msra.mxu0 0.0
    %3869 = vmatpush.msra.mxu0 0.0
    %3870 = vmatpush.msra.mxu0 0.0
    %3871 = vmatpush.msra.mxu0 0.0
    %3872 = vmatpush.msra.mxu0 0.0
    %3873 = vmatpush.msra.mxu0 0.0
    %3874 = vmatpush.msra.mxu0 0.0
    %3875 = vmatpush.msra.mxu0 0.0
    %3876 = vmatpush.msra.mxu0 0.0
    %3877 = vmatpush.msra.mxu0 0.0
    %3878 = vmatpush.msra.mxu0 %v3803
    %3879 = vmatpush.msra.mxu0 %v3785
    %3880 = vmatpush.msra.mxu0 %v3781
    %3881 = vmatmul.f32.gmra.mxu0 %v3791
    %v3882 = vpop.f32.mrf.mxu0
    %v3883 = vadd.f32 0.0, %v3882
    %3884 = vdwg.mxu0
    %v3885 = vadd.f32 %v3201, %v3823
    %v3886 = vadd.f32 %v3221, %v3843
    %v3887 = vadd.f32 %v3241, %v3863
    %v3888 = vadd.f32 %v3261, %v3883
    %v3889 = vld [vmem:[%s1586] sm:$0xff]
    %v3890 = vld [vmem:[%s1586 + $0x8] sm:$0xff]
    %v3891 = vld [vmem:[%s1586 + $0x10] sm:$0xff]
    %v3892 = vld [vmem:[%s1586 + $0x18] sm:$0xff]
    %v3893 = vld [vmem:[%s1586 + $0x20] sm:$0xff]
    %v3894 = vld [vmem:[%s1586 + $0x28] sm:$0xff]
    %v3895 = vld [vmem:[%s1586 + $0x30] sm:$0xff]
    %v3896 = vld [vmem:[%s1586 + $0x38] sm:$0xff]
    %v3897 = vld [vmem:[%s1586 + $0x40] sm:$0xf]
    %v3898 = vld [vmem:[%s1586 + $0x48] sm:$0xf]
    %v3899 = vld [vmem:[%s1586 + $0x50] sm:$0xf]
    %v3900 = vld [vmem:[%s1586 + $0x58] sm:$0xf]
    %v3901 = vrot.slane %v491, 2
    %v3902 = vsel %vm52, %v3901, 0
    %v3905 = vsel %vm62, %v3897, 0
    %v3908 = vsel %vm62, %v3898, 0
    %v3911 = vsel %vm62, %v3899, 0
    %v3914 = vsel %vm62, %v3900, 0
    %3916 = vmatpush.msra.mxu0 0.0
    %3917 = vmatpush.msra.mxu0 0.0
    %3918 = vmatpush.msra.mxu0 0.0
    %3919 = vmatpush.msra.mxu0 0.0
    %3920 = vmatpush.msra.mxu0 0.0
    %3921 = vmatpush.msra.mxu0 0.0
    %3922 = vmatpush.msra.mxu0 0.0
    %3923 = vmatpush.msra.mxu0 0.0
    %3924 = vmatpush.msra.mxu0 0.0
    %3925 = vmatpush.msra.mxu0 0.0
    %3926 = vmatpush.msra.mxu0 0.0
    %3927 = vmatpush.msra.mxu0 0.0
    %3928 = vmatpush.msra.mxu0 0.0
    %3929 = vmatpush.msra.mxu0 %v3905
    %3930 = vmatpush.msra.mxu0 %v3893
    %3931 = vmatpush.msra.mxu0 %v3889
    %3932 = vmatmul.f32.gmra.mxu0 %v3902
    %v3933 = vpop.f32.mrf.mxu0
    %v3934 = vadd.f32 0.0, %v3933
    %3935 = vdwg.mxu0
    %3936 = vmatpush.msra.mxu0 0.0
    %3937 = vmatpush.msra.mxu0 0.0
    %3938 = vmatpush.msra.mxu0 0.0
    %3939 = vmatpush.msra.mxu0 0.0
    %3940 = vmatpush.msra.mxu0 0.0
    %3941 = vmatpush.msra.mxu0 0.0
    %3942 = vmatpush.msra.mxu0 0.0
    %3943 = vmatpush.msra.mxu0 0.0
    %3944 = vmatpush.msra.mxu0 0.0
    %3945 = vmatpush.msra.mxu0 0.0
    %3946 = vmatpush.msra.mxu0 0.0
    %3947 = vmatpush.msra.mxu0 0.0
    %3948 = vmatpush.msra.mxu0 0.0
    %3949 = vmatpush.msra.mxu0 %v3908
    %3950 = vmatpush.msra.mxu0 %v3894
    %3951 = vmatpush.msra.mxu0 %v3890
    %3952 = vmatmul.f32.gmra.mxu0 %v3902
    %v3953 = vpop.f32.mrf.mxu0
    %v3954 = vadd.f32 0.0, %v3953
    %3955 = vdwg.mxu0
    %3956 = vmatpush.msra.mxu0 0.0
    %3957 = vmatpush.msra.mxu0 0.0
    %3958 = vmatpush.msra.mxu0 0.0
    %3959 = vmatpush.msra.mxu0 0.0
    %3960 = vmatpush.msra.mxu0 0.0
    %3961 = vmatpush.msra.mxu0 0.0
    %3962 = vmatpush.msra.mxu0 0.0
    %3963 = vmatpush.msra.mxu0 0.0
    %3964 = vmatpush.msra.mxu0 0.0
    %3965 = vmatpush.msra.mxu0 0.0
    %3966 = vmatpush.msra.mxu0 0.0
    %3967 = vmatpush.msra.mxu0 0.0
    %3968 = vmatpush.msra.mxu0 0.0
    %3969 = vmatpush.msra.mxu0 %v3911
    %3970 = vmatpush.msra.mxu0 %v3895
    %3971 = vmatpush.msra.mxu0 %v3891
    %3972 = vmatmul.f32.gmra.mxu0 %v3902
    %v3973 = vpop.f32.mrf.mxu0
    %v3974 = vadd.f32 0.0, %v3973
    %3975 = vdwg.mxu0
    %3976 = vmatpush.msra.mxu0 0.0
    %3977 = vmatpush.msra.mxu0 0.0
    %3978 = vmatpush.msra.mxu0 0.0
    %3979 = vmatpush.msra.mxu0 0.0
    %3980 = vmatpush.msra.mxu0 0.0
    %3981 = vmatpush.msra.mxu0 0.0
    %3982 = vmatpush.msra.mxu0 0.0
    %3983 = vmatpush.msra.mxu0 0.0
    %3984 = vmatpush.msra.mxu0 0.0
    %3985 = vmatpush.msra.mxu0 0.0
    %3986 = vmatpush.msra.mxu0 0.0
    %3987 = vmatpush.msra.mxu0 0.0
    %3988 = vmatpush.msra.mxu0 0.0
    %3989 = vmatpush.msra.mxu0 %v3914
    %3990 = vmatpush.msra.mxu0 %v3896
    %3991 = vmatpush.msra.mxu0 %v3892
    %3992 = vmatmul.f32.gmra.mxu0 %v3902
    %v3993 = vpop.f32.mrf.mxu0
    %v3994 = vadd.f32 0.0, %v3993
    %3995 = vdwg.mxu0
    %v3996 = vadd.f32 %v3403, %v3934
    %v3997 = vadd.f32 %v3423, %v3954
    %v3998 = vadd.f32 %v3443, %v3974
    %v3999 = vadd.f32 %v3463, %v3994
    %v4000 = vld [vmem:[%s1698] sm:$0xff]
    %v4001 = vld [vmem:[%s1698 + $0x8] sm:$0xff]
    %v4002 = vld [vmem:[%s1698 + $0x10] sm:$0xff]
    %v4003 = vld [vmem:[%s1698 + $0x18] sm:$0xff]
    %v4004 = vld [vmem:[%s1698 + $0x20] sm:$0xff]
    %v4005 = vld [vmem:[%s1698 + $0x28] sm:$0xff]
    %v4006 = vld [vmem:[%s1698 + $0x30] sm:$0xff]
    %v4007 = vld [vmem:[%s1698 + $0x38] sm:$0xff]
    %v4008 = vld [vmem:[%s1698 + $0x40] sm:$0xf]
    %v4009 = vld [vmem:[%s1698 + $0x48] sm:$0xf]
    %v4010 = vld [vmem:[%s1698 + $0x50] sm:$0xf]
    %v4011 = vld [vmem:[%s1698 + $0x58] sm:$0xf]
    %v4012 = vrot.slane %v491, 3
    %v4013 = vsel %vm52, %v4012, 0
    %v4016 = vsel %vm62, %v4008, 0
    %v4019 = vsel %vm62, %v4009, 0
    %v4022 = vsel %vm62, %v4010, 0
    %v4025 = vsel %vm62, %v4011, 0
    %4027 = vmatpush.msra.mxu0 0.0
    %4028 = vmatpush.msra.mxu0 0.0
    %4029 = vmatpush.msra.mxu0 0.0
    %4030 = vmatpush.msra.mxu0 0.0
    %4031 = vmatpush.msra.mxu0 0.0
    %4032 = vmatpush.msra.mxu0 0.0
    %4033 = vmatpush.msra.mxu0 0.0
    %4034 = vmatpush.msra.mxu0 0.0
    %4035 = vmatpush.msra.mxu0 0.0
    %4036 = vmatpush.msra.mxu0 0.0
    %4037 = vmatpush.msra.mxu0 0.0
    %4038 = vmatpush.msra.mxu0 0.0
    %4039 = vmatpush.msra.mxu0 0.0
    %4040 = vmatpush.msra.mxu0 %v4016
    %4041 = vmatpush.msra.mxu0 %v4004
    %4042 = vmatpush.msra.mxu0 %v4000
    %4043 = vmatmul.f32.gmra.mxu0 %v4013
    %v4044 = vpop.f32.mrf.mxu0
    %v4045 = vadd.f32 0.0, %v4044
    %4046 = vdwg.mxu0
    %4047 = vmatpush.msra.mxu0 0.0
    %4048 = vmatpush.msra.mxu0 0.0
    %4049 = vmatpush.msra.mxu0 0.0
    %4050 = vmatpush.msra.mxu0 0.0
    %4051 = vmatpush.msra.mxu0 0.0
    %4052 = vmatpush.msra.mxu0 0.0
    %4053 = vmatpush.msra.mxu0 0.0
    %4054 = vmatpush.msra.mxu0 0.0
    %4055 = vmatpush.msra.mxu0 0.0
    %4056 = vmatpush.msra.mxu0 0.0
    %4057 = vmatpush.msra.mxu0 0.0
    %4058 = vmatpush.msra.mxu0 0.0
    %4059 = vmatpush.msra.mxu0 0.0
    %4060 = vmatpush.msra.mxu0 %v4019
    %4061 = vmatpush.msra.mxu0 %v4005
    %4062 = vmatpush.msra.mxu0 %v4001
    %4063 = vmatmul.f32.gmra.mxu0 %v4013
    %v4064 = vpop.f32.mrf.mxu0
    %v4065 = vadd.f32 0.0, %v4064
    %4066 = vdwg.mxu0
    %4067 = vmatpush.msra.mxu0 0.0
    %4068 = vmatpush.msra.mxu0 0.0
    %4069 = vmatpush.msra.mxu0 0.0
    %4070 = vmatpush.msra.mxu0 0.0
    %4071 = vmatpush.msra.mxu0 0.0
    %4072 = vmatpush.msra.mxu0 0.0
    %4073 = vmatpush.msra.mxu0 0.0
    %4074 = vmatpush.msra.mxu0 0.0
    %4075 = vmatpush.msra.mxu0 0.0
    %4076 = vmatpush.msra.mxu0 0.0
    %4077 = vmatpush.msra.mxu0 0.0
    %4078 = vmatpush.msra.mxu0 0.0
    %4079 = vmatpush.msra.mxu0 0.0
    %4080 = vmatpush.msra.mxu0 %v4022
    %4081 = vmatpush.msra.mxu0 %v4006
    %4082 = vmatpush.msra.mxu0 %v4002
    %4083 = vmatmul.f32.gmra.mxu0 %v4013
    %v4084 = vpop.f32.mrf.mxu0
    %v4085 = vadd.f32 0.0, %v4084
    %4086 = vdwg.mxu0
    %4087 = vmatpush.msra.mxu0 0.0
    %4088 = vmatpush.msra.mxu0 0.0
    %4089 = vmatpush.msra.mxu0 0.0
    %4090 = vmatpush.msra.mxu0 0.0
    %4091 = vmatpush.msra.mxu0 0.0
    %4092 = vmatpush.msra.mxu0 0.0
    %4093 = vmatpush.msra.mxu0 0.0
    %4094 = vmatpush.msra.mxu0 0.0
    %4095 = vmatpush.msra.mxu0 0.0
    %4096 = vmatpush.msra.mxu0 0.0
    %4097 = vmatpush.msra.mxu0 0.0
    %4098 = vmatpush.msra.mxu0 0.0
    %4099 = vmatpush.msra.mxu0 0.0
    %4100 = vmatpush.msra.mxu0 %v4025
    %4101 = vmatpush.msra.mxu0 %v4007
    %4102 = vmatpush.msra.mxu0 %v4003
    %4103 = vmatmul.f32.gmra.mxu0 %v4013
    %v4104 = vpop.f32.mrf.mxu0
    %v4105 = vadd.f32 0.0, %v4104
    %4106 = vdwg.mxu0
    %v4107 = vadd.f32 %v3605, %v4045
    %v4108 = vadd.f32 %v3625, %v4065
    %v4109 = vadd.f32 %v3645, %v4085
    %v4110 = vadd.f32 %v3665, %v4105
    %v4111 = vld [vmem:[%s1810] sm:$0xff]
    %v4112 = vld [vmem:[%s1810 + $0x8] sm:$0xff]
    %v4113 = vld [vmem:[%s1810 + $0x10] sm:$0xff]
    %v4114 = vld [vmem:[%s1810 + $0x18] sm:$0xff]
    %v4115 = vld [vmem:[%s1810 + $0x20] sm:$0xff]
    %v4116 = vld [vmem:[%s1810 + $0x28] sm:$0xff]
    %v4117 = vld [vmem:[%s1810 + $0x30] sm:$0xff]
    %v4118 = vld [vmem:[%s1810 + $0x38] sm:$0xff]
    %v4119 = vld [vmem:[%s1810 + $0x40] sm:$0xf]
    %v4120 = vld [vmem:[%s1810 + $0x48] sm:$0xf]
    %v4121 = vld [vmem:[%s1810 + $0x50] sm:$0xf]
    %v4122 = vld [vmem:[%s1810 + $0x58] sm:$0xf]
    %v4123 = vrot.slane %v491, 4
    %v4124 = vsel %vm52, %v4123, 0
    %v4127 = vsel %vm62, %v4119, 0
    %v4130 = vsel %vm62, %v4120, 0
    %v4133 = vsel %vm62, %v4121, 0
    %v4136 = vsel %vm62, %v4122, 0
    %4138 = vmatpush.msra.mxu0 0.0
    %4139 = vmatpush.msra.mxu0 0.0
    %4140 = vmatpush.msra.mxu0 0.0
    %4141 = vmatpush.msra.mxu0 0.0
    %4142 = vmatpush.msra.mxu0 0.0
    %4143 = vmatpush.msra.mxu0 0.0
    %4144 = vmatpush.msra.mxu0 0.0
    %4145 = vmatpush.msra.mxu0 0.0
    %4146 = vmatpush.msra.mxu0 0.0
    %4147 = vmatpush.msra.mxu0 0.0
    %4148 = vmatpush.msra.mxu0 0.0
    %4149 = vmatpush.msra.mxu0 0.0
    %4150 = vmatpush.msra.mxu0 0.0
    %4151 = vmatpush.msra.mxu0 %v4127
    %4152 = vmatpush.msra.mxu0 %v4115
    %4153 = vmatpush.msra.mxu0 %v4111
    %4154 = vmatmul.f32.gmra.mxu0 %v4124
    %v4155 = vpop.f32.mrf.mxu0
    %v4156 = vadd.f32 0.0, %v4155
    %4157 = vdwg.mxu0
    %4158 = vmatpush.msra.mxu0 0.0
    %4159 = vmatpush.msra.mxu0 0.0
    %4160 = vmatpush.msra.mxu0 0.0
    %4161 = vmatpush.msra.mxu0 0.0
    %4162 = vmatpush.msra.mxu0 0.0
    %4163 = vmatpush.msra.mxu0 0.0
    %4164 = vmatpush.msra.mxu0 0.0
    %4165 = vmatpush.msra.mxu0 0.0
    %4166 = vmatpush.msra.mxu0 0.0
    %4167 = vmatpush.msra.mxu0 0.0
    %4168 = vmatpush.msra.mxu0 0.0
    %4169 = vmatpush.msra.mxu0 0.0
    %4170 = vmatpush.msra.mxu0 0.0
    %4171 = vmatpush.msra.mxu0 %v4130
    %4172 = vmatpush.msra.mxu0 %v4116
    %4173 = vmatpush.msra.mxu0 %v4112
    %4174 = vmatmul.f32.gmra.mxu0 %v4124
    %v4175 = vpop.f32.mrf.mxu0
    %v4176 = vadd.f32 0.0, %v4175
    %4177 = vdwg.mxu0
    %4178 = vmatpush.msra.mxu0 0.0
    %4179 = vmatpush.msra.mxu0 0.0
    %4180 = vmatpush.msra.mxu0 0.0
    %4181 = vmatpush.msra.mxu0 0.0
    %4182 = vmatpush.msra.mxu0 0.0
    %4183 = vmatpush.msra.mxu0 0.0
    %4184 = vmatpush.msra.mxu0 0.0
    %4185 = vmatpush.msra.mxu0 0.0
    %4186 = vmatpush.msra.mxu0 0.0
    %4187 = vmatpush.msra.mxu0 0.0
    %4188 = vmatpush.msra.mxu0 0.0
    %4189 = vmatpush.msra.mxu0 0.0
    %4190 = vmatpush.msra.mxu0 0.0
    %4191 = vmatpush.msra.mxu0 %v4133
    %4192 = vmatpush.msra.mxu0 %v4117
    %4193 = vmatpush.msra.mxu0 %v4113
    %4194 = vmatmul.f32.gmra.mxu0 %v4124
    %v4195 = vpop.f32.mrf.mxu0
    %v4196 = vadd.f32 0.0, %v4195
    %4197 = vdwg.mxu0
    %4198 = vmatpush.msra.mxu0 0.0
    %4199 = vmatpush.msra.mxu0 0.0
    %4200 = vmatpush.msra.mxu0 0.0
    %4201 = vmatpush.msra.mxu0 0.0
    %4202 = vmatpush.msra.mxu0 0.0
    %4203 = vmatpush.msra.mxu0 0.0
    %4204 = vmatpush.msra.mxu0 0.0
    %4205 = vmatpush.msra.mxu0 0.0
    %4206 = vmatpush.msra.mxu0 0.0
    %4207 = vmatpush.msra.mxu0 0.0
    %4208 = vmatpush.msra.mxu0 0.0
    %4209 = vmatpush.msra.mxu0 0.0
    %4210 = vmatpush.msra.mxu0 0.0
    %4211 = vmatpush.msra.mxu0 %v4136
    %4212 = vmatpush.msra.mxu0 %v4118
    %4213 = vmatpush.msra.mxu0 %v4114
    %4214 = vmatmul.f32.gmra.mxu0 %v4124
    %v4215 = vpop.f32.mrf.mxu0
    %v4216 = vadd.f32 0.0, %v4215
    %4217 = vdwg.mxu0
    %v4218 = vadd.f32 %v3774, %v4156
    %v4219 = vadd.f32 %v3775, %v4176
    %v4220 = vadd.f32 %v3776, %v4196
    %v4221 = vadd.f32 %v3777, %v4216
    %v4222 = vld [vmem:[%s1922] sm:$0xff]
    %v4223 = vld [vmem:[%s1922 + $0x8] sm:$0xff]
    %v4224 = vld [vmem:[%s1922 + $0x10] sm:$0xff]
    %v4225 = vld [vmem:[%s1922 + $0x18] sm:$0xff]
    %v4226 = vld [vmem:[%s1922 + $0x20] sm:$0xff]
    %v4227 = vld [vmem:[%s1922 + $0x28] sm:$0xff]
    %v4228 = vld [vmem:[%s1922 + $0x30] sm:$0xff]
    %v4229 = vld [vmem:[%s1922 + $0x38] sm:$0xff]
    %v4230 = vld [vmem:[%s1922 + $0x40] sm:$0xf]
    %v4231 = vld [vmem:[%s1922 + $0x48] sm:$0xf]
    %v4232 = vld [vmem:[%s1922 + $0x50] sm:$0xf]
    %v4233 = vld [vmem:[%s1922 + $0x58] sm:$0xf]
    %v4234 = vrot.slane %v491, 5
    %v4235 = vsel %vm52, %v4234, 0
    %v4238 = vsel %vm62, %v4230, 0
    %v4241 = vsel %vm62, %v4231, 0
    %v4244 = vsel %vm62, %v4232, 0
    %v4247 = vsel %vm62, %v4233, 0
    %4249 = vmatpush.msra.mxu0 0.0
    %4250 = vmatpush.msra.mxu0 0.0
    %4251 = vmatpush.msra.mxu0 0.0
    %4252 = vmatpush.msra.mxu0 0.0
    %4253 = vmatpush.msra.mxu0 0.0
    %4254 = vmatpush.msra.mxu0 0.0
    %4255 = vmatpush.msra.mxu0 0.0
    %4256 = vmatpush.msra.mxu0 0.0
    %4257 = vmatpush.msra.mxu0 0.0
    %4258 = vmatpush.msra.mxu0 0.0
    %4259 = vmatpush.msra.mxu0 0.0
    %4260 = vmatpush.msra.mxu0 0.0
    %4261 = vmatpush.msra.mxu0 0.0
    %4262 = vmatpush.msra.mxu0 %v4238
    %4263 = vmatpush.msra.mxu0 %v4226
    %4264 = vmatpush.msra.mxu0 %v4222
    %4265 = vmatmul.f32.gmra.mxu0 %v4235
    %v4266 = vpop.f32.mrf.mxu0
    %v4267 = vadd.f32 0.0, %v4266
    %4268 = vdwg.mxu0
    %4269 = vmatpush.msra.mxu0 0.0
    %4270 = vmatpush.msra.mxu0 0.0
    %4271 = vmatpush.msra.mxu0 0.0
    %4272 = vmatpush.msra.mxu0 0.0
    %4273 = vmatpush.msra.mxu0 0.0
    %4274 = vmatpush.msra.mxu0 0.0
    %4275 = vmatpush.msra.mxu0 0.0
    %4276 = vmatpush.msra.mxu0 0.0
    %4277 = vmatpush.msra.mxu0 0.0
    %4278 = vmatpush.msra.mxu0 0.0
    %4279 = vmatpush.msra.mxu0 0.0
    %4280 = vmatpush.msra.mxu0 0.0
    %4281 = vmatpush.msra.mxu0 0.0
    %4282 = vmatpush.msra.mxu0 %v4241
    %4283 = vmatpush.msra.mxu0 %v4227
    %4284 = vmatpush.msra.mxu0 %v4223
    %4285 = vmatmul.f32.gmra.mxu0 %v4235
    %v4286 = vpop.f32.mrf.mxu0
    %v4287 = vadd.f32 0.0, %v4286
    %4288 = vdwg.mxu0
    %4289 = vmatpush.msra.mxu0 0.0
    %4290 = vmatpush.msra.mxu0 0.0
    %4291 = vmatpush.msra.mxu0 0.0
    %4292 = vmatpush.msra.mxu0 0.0
    %4293 = vmatpush.msra.mxu0 0.0
    %4294 = vmatpush.msra.mxu0 0.0
    %4295 = vmatpush.msra.mxu0 0.0
    %4296 = vmatpush.msra.mxu0 0.0
    %4297 = vmatpush.msra.mxu0 0.0
    %4298 = vmatpush.msra.mxu0 0.0
    %4299 = vmatpush.msra.mxu0 0.0
    %4300 = vmatpush.msra.mxu0 0.0
    %4301 = vmatpush.msra.mxu0 0.0
    %4302 = vmatpush.msra.mxu0 %v4244
    %4303 = vmatpush.msra.mxu0 %v4228
    %4304 = vmatpush.msra.mxu0 %v4224
    %4305 = vmatmul.f32.gmra.mxu0 %v4235
    %v4306 = vpop.f32.mrf.mxu0
    %v4307 = vadd.f32 0.0, %v4306
    %4308 = vdwg.mxu0
    %4309 = vmatpush.msra.mxu0 0.0
    %4310 = vmatpush.msra.mxu0 0.0
    %4311 = vmatpush.msra.mxu0 0.0
    %4312 = vmatpush.msra.mxu0 0.0
    %4313 = vmatpush.msra.mxu0 0.0
    %4314 = vmatpush.msra.mxu0 0.0
    %4315 = vmatpush.msra.mxu0 0.0
    %4316 = vmatpush.msra.mxu0 0.0
    %4317 = vmatpush.msra.mxu0 0.0
    %4318 = vmatpush.msra.mxu0 0.0
    %4319 = vmatpush.msra.mxu0 0.0
    %4320 = vmatpush.msra.mxu0 0.0
    %4321 = vmatpush.msra.mxu0 0.0
    %4322 = vmatpush.msra.mxu0 %v4247
    %4323 = vmatpush.msra.mxu0 %v4229
    %4324 = vmatpush.msra.mxu0 %v4225
    %4325 = vmatmul.f32.gmra.mxu0 %v4235
    %v4326 = vpop.f32.mrf.mxu0
    %v4327 = vadd.f32 0.0, %v4326
    %4328 = vdwg.mxu0
    %v4329 = vadd.f32 %v3885, %v4267
    %v4330 = vadd.f32 %v3886, %v4287
    %v4331 = vadd.f32 %v3887, %v4307
    %v4332 = vadd.f32 %v3888, %v4327
    %v4333 = vld [vmem:[%s2034] sm:$0xff]
    %v4334 = vld [vmem:[%s2034 + $0x8] sm:$0xff]
    %v4335 = vld [vmem:[%s2034 + $0x10] sm:$0xff]
    %v4336 = vld [vmem:[%s2034 + $0x18] sm:$0xff]
    %v4337 = vld [vmem:[%s2034 + $0x20] sm:$0xff]
    %v4338 = vld [vmem:[%s2034 + $0x28] sm:$0xff]
    %v4339 = vld [vmem:[%s2034 + $0x30] sm:$0xff]
    %v4340 = vld [vmem:[%s2034 + $0x38] sm:$0xff]
    %v4341 = vld [vmem:[%s2034 + $0x40] sm:$0xf]
    %v4342 = vld [vmem:[%s2034 + $0x48] sm:$0xf]
    %v4343 = vld [vmem:[%s2034 + $0x50] sm:$0xf]
    %v4344 = vld [vmem:[%s2034 + $0x58] sm:$0xf]
    %v4345 = vrot.slane %v491, 6
    %v4346 = vsel %vm52, %v4345, 0
    %v4349 = vsel %vm62, %v4341, 0
    %v4352 = vsel %vm62, %v4342, 0
    %v4355 = vsel %vm62, %v4343, 0
    %v4358 = vsel %vm62, %v4344, 0
    %4360 = vmatpush.msra.mxu0 0.0
    %4361 = vmatpush.msra.mxu0 0.0
    %4362 = vmatpush.msra.mxu0 0.0
    %4363 = vmatpush.msra.mxu0 0.0
    %4364 = vmatpush.msra.mxu0 0.0
    %4365 = vmatpush.msra.mxu0 0.0
    %4366 = vmatpush.msra.mxu0 0.0
    %4367 = vmatpush.msra.mxu0 0.0
    %4368 = vmatpush.msra.mxu0 0.0
    %4369 = vmatpush.msra.mxu0 0.0
    %4370 = vmatpush.msra.mxu0 0.0
    %4371 = vmatpush.msra.mxu0 0.0
    %4372 = vmatpush.msra.mxu0 0.0
    %4373 = vmatpush.msra.mxu0 %v4349
    %4374 = vmatpush.msra.mxu0 %v4337
    %4375 = vmatpush.msra.mxu0 %v4333
    %4376 = vmatmul.f32.gmra.mxu0 %v4346
    %v4377 = vpop.f32.mrf.mxu0
    %v4378 = vadd.f32 0.0, %v4377
    %4379 = vdwg.mxu0
    %4380 = vmatpush.msra.mxu0 0.0
    %4381 = vmatpush.msra.mxu0 0.0
    %4382 = vmatpush.msra.mxu0 0.0
    %4383 = vmatpush.msra.mxu0 0.0
    %4384 = vmatpush.msra.mxu0 0.0
    %4385 = vmatpush.msra.mxu0 0.0
    %4386 = vmatpush.msra.mxu0 0.0
    %4387 = vmatpush.msra.mxu0 0.0
    %4388 = vmatpush.msra.mxu0 0.0
    %4389 = vmatpush.msra.mxu0 0.0
    %4390 = vmatpush.msra.mxu0 0.0
    %4391 = vmatpush.msra.mxu0 0.0
    %4392 = vmatpush.msra.mxu0 0.0
    %4393 = vmatpush.msra.mxu0 %v4352
    %4394 = vmatpush.msra.mxu0 %v4338
    %4395 = vmatpush.msra.mxu0 %v4334
    %4396 = vmatmul.f32.gmra.mxu0 %v4346
    %v4397 = vpop.f32.mrf.mxu0
    %v4398 = vadd.f32 0.0, %v4397
    %4399 = vdwg.mxu0
    %4400 = vmatpush.msra.mxu0 0.0
    %4401 = vmatpush.msra.mxu0 0.0
    %4402 = vmatpush.msra.mxu0 0.0
    %4403 = vmatpush.msra.mxu0 0.0
    %4404 = vmatpush.msra.mxu0 0.0
    %4405 = vmatpush.msra.mxu0 0.0
    %4406 = vmatpush.msra.mxu0 0.0
    %4407 = vmatpush.msra.mxu0 0.0
    %4408 = vmatpush.msra.mxu0 0.0
    %4409 = vmatpush.msra.mxu0 0.0
    %4410 = vmatpush.msra.mxu0 0.0
    %4411 = vmatpush.msra.mxu0 0.0
    %4412 = vmatpush.msra.mxu0 0.0
    %4413 = vmatpush.msra.mxu0 %v4355
    %4414 = vmatpush.msra.mxu0 %v4339
    %4415 = vmatpush.msra.mxu0 %v4335
    %4416 = vmatmul.f32.gmra.mxu0 %v4346
    %v4417 = vpop.f32.mrf.mxu0
    %v4418 = vadd.f32 0.0, %v4417
    %4419 = vdwg.mxu0
    %4420 = vmatpush.msra.mxu0 0.0
    %4421 = vmatpush.msra.mxu0 0.0
    %4422 = vmatpush.msra.mxu0 0.0
    %4423 = vmatpush.msra.mxu0 0.0
    %4424 = vmatpush.msra.mxu0 0.0
    %4425 = vmatpush.msra.mxu0 0.0
    %4426 = vmatpush.msra.mxu0 0.0
    %4427 = vmatpush.msra.mxu0 0.0
    %4428 = vmatpush.msra.mxu0 0.0
    %4429 = vmatpush.msra.mxu0 0.0
    %4430 = vmatpush.msra.mxu0 0.0
    %4431 = vmatpush.msra.mxu0 0.0
    %4432 = vmatpush.msra.mxu0 0.0
    %4433 = vmatpush.msra.mxu0 %v4358
    %4434 = vmatpush.msra.mxu0 %v4340
    %4435 = vmatpush.msra.mxu0 %v4336
    %4436 = vmatmul.f32.gmra.mxu0 %v4346
    %v4437 = vpop.f32.mrf.mxu0
    %v4438 = vadd.f32 0.0, %v4437
    %4439 = vdwg.mxu0
    %v4440 = vadd.f32 %v3996, %v4378
    %v4441 = vadd.f32 %v3997, %v4398
    %v4442 = vadd.f32 %v3998, %v4418
    %v4443 = vadd.f32 %v3999, %v4438
    %v4444 = vld [vmem:[%s2146] sm:$0xff]
    %v4445 = vld [vmem:[%s2146 + $0x8] sm:$0xff]
    %v4446 = vld [vmem:[%s2146 + $0x10] sm:$0xff]
    %v4447 = vld [vmem:[%s2146 + $0x18] sm:$0xff]
    %v4448 = vld [vmem:[%s2146 + $0x20] sm:$0xff]
    %v4449 = vld [vmem:[%s2146 + $0x28] sm:$0xff]
    %v4450 = vld [vmem:[%s2146 + $0x30] sm:$0xff]
    %v4451 = vld [vmem:[%s2146 + $0x38] sm:$0xff]
    %v4452 = vld [vmem:[%s2146 + $0x40] sm:$0xf]
    %v4453 = vld [vmem:[%s2146 + $0x48] sm:$0xf]
    %v4454 = vld [vmem:[%s2146 + $0x50] sm:$0xf]
    %v4455 = vld [vmem:[%s2146 + $0x58] sm:$0xf]
    %v4456 = vrot.slane %v491, 7
    %v4457 = vsel %vm52, %v4456, 0
    %v4460 = vsel %vm62, %v4452, 0
    %v4463 = vsel %vm62, %v4453, 0
    %v4466 = vsel %vm62, %v4454, 0
    %v4469 = vsel %vm62, %v4455, 0
    %4471 = vmatpush.msra.mxu0 0.0
    %4472 = vmatpush.msra.mxu0 0.0
    %4473 = vmatpush.msra.mxu0 0.0
    %4474 = vmatpush.msra.mxu0 0.0
    %4475 = vmatpush.msra.mxu0 0.0
    %4476 = vmatpush.msra.mxu0 0.0
    %4477 = vmatpush.msra.mxu0 0.0
    %4478 = vmatpush.msra.mxu0 0.0
    %4479 = vmatpush.msra.mxu0 0.0
    %4480 = vmatpush.msra.mxu0 0.0
    %4481 = vmatpush.msra.mxu0 0.0
    %4482 = vmatpush.msra.mxu0 0.0
    %4483 = vmatpush.msra.mxu0 0.0
    %4484 = vmatpush.msra.mxu0 %v4460
    %4485 = vmatpush.msra.mxu0 %v4448
    %4486 = vmatpush.msra.mxu0 %v4444
    %4487 = vmatmul.f32.gmra.mxu0 %v4457
    %v4488 = vpop.f32.mrf.mxu0
    %v4489 = vadd.f32 0.0, %v4488
    %4490 = vdwg.mxu0
    %4491 = vmatpush.msra.mxu0 0.0
    %4492 = vmatpush.msra.mxu0 0.0
    %4493 = vmatpush.msra.mxu0 0.0
    %4494 = vmatpush.msra.mxu0 0.0
    %4495 = vmatpush.msra.mxu0 0.0
    %4496 = vmatpush.msra.mxu0 0.0
    %4497 = vmatpush.msra.mxu0 0.0
    %4498 = vmatpush.msra.mxu0 0.0
    %4499 = vmatpush.msra.mxu0 0.0
    %4500 = vmatpush.msra.mxu0 0.0
    %4501 = vmatpush.msra.mxu0 0.0
    %4502 = vmatpush.msra.mxu0 0.0
    %4503 = vmatpush.msra.mxu0 0.0
    %4504 = vmatpush.msra.mxu0 %v4463
    %4505 = vmatpush.msra.mxu0 %v4449
    %4506 = vmatpush.msra.mxu0 %v4445
    %4507 = vmatmul.f32.gmra.mxu0 %v4457
    %v4508 = vpop.f32.mrf.mxu0
    %v4509 = vadd.f32 0.0, %v4508
    %4510 = vdwg.mxu0
    %4511 = vmatpush.msra.mxu0 0.0
    %4512 = vmatpush.msra.mxu0 0.0
    %4513 = vmatpush.msra.mxu0 0.0
    %4514 = vmatpush.msra.mxu0 0.0
    %4515 = vmatpush.msra.mxu0 0.0
    %4516 = vmatpush.msra.mxu0 0.0
    %4517 = vmatpush.msra.mxu0 0.0
    %4518 = vmatpush.msra.mxu0 0.0
    %4519 = vmatpush.msra.mxu0 0.0
    %4520 = vmatpush.msra.mxu0 0.0
    %4521 = vmatpush.msra.mxu0 0.0
    %4522 = vmatpush.msra.mxu0 0.0
    %4523 = vmatpush.msra.mxu0 0.0
    %4524 = vmatpush.msra.mxu0 %v4466
    %4525 = vmatpush.msra.mxu0 %v4450
    %4526 = vmatpush.msra.mxu0 %v4446
    %4527 = vmatmul.f32.gmra.mxu0 %v4457
    %v4528 = vpop.f32.mrf.mxu0
    %v4529 = vadd.f32 0.0, %v4528
    %4530 = vdwg.mxu0
    %4531 = vmatpush.msra.mxu0 0.0
    %4532 = vmatpush.msra.mxu0 0.0
    %4533 = vmatpush.msra.mxu0 0.0
    %4534 = vmatpush.msra.mxu0 0.0
    %4535 = vmatpush.msra.mxu0 0.0
    %4536 = vmatpush.msra.mxu0 0.0
    %4537 = vmatpush.msra.mxu0 0.0
    %4538 = vmatpush.msra.mxu0 0.0
    %4539 = vmatpush.msra.mxu0 0.0
    %4540 = vmatpush.msra.mxu0 0.0
    %4541 = vmatpush.msra.mxu0 0.0
    %4542 = vmatpush.msra.mxu0 0.0
    %4543 = vmatpush.msra.mxu0 0.0
    %4544 = vmatpush.msra.mxu0 %v4469
    %4545 = vmatpush.msra.mxu0 %v4451
    %4546 = vmatpush.msra.mxu0 %v4447
    %4547 = vmatmul.f32.gmra.mxu0 %v4457
    %v4548 = vpop.f32.mrf.mxu0
    %v4549 = vadd.f32 0.0, %v4548
    %4550 = vdwg.mxu0
    %v4551 = vadd.f32 %v4107, %v4489
    %v4552 = vadd.f32 %v4108, %v4509
    %v4553 = vadd.f32 %v4109, %v4529
    %v4554 = vadd.f32 %v4110, %v4549
    %v4555 = vld [vmem:[%s2258] sm:$0xff]
    %v4556 = vld [vmem:[%s2258 + $0x8] sm:$0xff]
    %v4557 = vld [vmem:[%s2258 + $0x10] sm:$0xff]
    %v4558 = vld [vmem:[%s2258 + $0x18] sm:$0xff]
    %v4559 = vld [vmem:[%s2258 + $0x20] sm:$0xff]
    %v4560 = vld [vmem:[%s2258 + $0x28] sm:$0xff]
    %v4561 = vld [vmem:[%s2258 + $0x30] sm:$0xff]
    %v4562 = vld [vmem:[%s2258 + $0x38] sm:$0xff]
    %v4563 = vld [vmem:[%s2258 + $0x40] sm:$0xf]
    %v4564 = vld [vmem:[%s2258 + $0x48] sm:$0xf]
    %v4565 = vld [vmem:[%s2258 + $0x50] sm:$0xf]
    %v4566 = vld [vmem:[%s2258 + $0x58] sm:$0xf]
    %v4568 = vsel %vm52, %v492, 0
    %v4571 = vsel %vm62, %v4563, 0
    %v4574 = vsel %vm62, %v4564, 0
    %v4577 = vsel %vm62, %v4565, 0
    %v4580 = vsel %vm62, %v4566, 0
    %4582 = vmatpush.msra.mxu0 0.0
    %4583 = vmatpush.msra.mxu0 0.0
    %4584 = vmatpush.msra.mxu0 0.0
    %4585 = vmatpush.msra.mxu0 0.0
    %4586 = vmatpush.msra.mxu0 0.0
    %4587 = vmatpush.msra.mxu0 0.0
    %4588 = vmatpush.msra.mxu0 0.0
    %4589 = vmatpush.msra.mxu0 0.0
    %4590 = vmatpush.msra.mxu0 0.0
    %4591 = vmatpush.msra.mxu0 0.0
    %4592 = vmatpush.msra.mxu0 0.0
    %4593 = vmatpush.msra.mxu0 0.0
    %4594 = vmatpush.msra.mxu0 0.0
    %4595 = vmatpush.msra.mxu0 %v4571
    %4596 = vmatpush.msra.mxu0 %v4559
    %4597 = vmatpush.msra.mxu0 %v4555
    %4598 = vmatmul.f32.gmra.mxu0 %v4568
    %v4599 = vpop.f32.mrf.mxu0
    %v4600 = vadd.f32 0.0, %v4599
    %4601 = vdwg.mxu0
    %4602 = vmatpush.msra.mxu0 0.0
    %4603 = vmatpush.msra.mxu0 0.0
    %4604 = vmatpush.msra.mxu0 0.0
    %4605 = vmatpush.msra.mxu0 0.0
    %4606 = vmatpush.msra.mxu0 0.0
    %4607 = vmatpush.msra.mxu0 0.0
    %4608 = vmatpush.msra.mxu0 0.0
    %4609 = vmatpush.msra.mxu0 0.0
    %4610 = vmatpush.msra.mxu0 0.0
    %4611 = vmatpush.msra.mxu0 0.0
    %4612 = vmatpush.msra.mxu0 0.0
    %4613 = vmatpush.msra.mxu0 0.0
    %4614 = vmatpush.msra.mxu0 0.0
    %4615 = vmatpush.msra.mxu0 %v4574
    %4616 = vmatpush.msra.mxu0 %v4560
    %4617 = vmatpush.msra.mxu0 %v4556
    %4618 = vmatmul.f32.gmra.mxu0 %v4568
    %v4619 = vpop.f32.mrf.mxu0
    %v4620 = vadd.f32 0.0, %v4619
    %4621 = vdwg.mxu0
    %4622 = vmatpush.msra.mxu0 0.0
    %4623 = vmatpush.msra.mxu0 0.0
    %4624 = vmatpush.msra.mxu0 0.0
    %4625 = vmatpush.msra.mxu0 0.0
    %4626 = vmatpush.msra.mxu0 0.0
    %4627 = vmatpush.msra.mxu0 0.0
    %4628 = vmatpush.msra.mxu0 0.0
    %4629 = vmatpush.msra.mxu0 0.0
    %4630 = vmatpush.msra.mxu0 0.0
    %4631 = vmatpush.msra.mxu0 0.0
    %4632 = vmatpush.msra.mxu0 0.0
    %4633 = vmatpush.msra.mxu0 0.0
    %4634 = vmatpush.msra.mxu0 0.0
    %4635 = vmatpush.msra.mxu0 %v4577
    %4636 = vmatpush.msra.mxu0 %v4561
    %4637 = vmatpush.msra.mxu0 %v4557
    %4638 = vmatmul.f32.gmra.mxu0 %v4568
    %v4639 = vpop.f32.mrf.mxu0
    %v4640 = vadd.f32 0.0, %v4639
    %4641 = vdwg.mxu0
    %4642 = vmatpush.msra.mxu0 0.0
    %4643 = vmatpush.msra.mxu0 0.0
    %4644 = vmatpush.msra.mxu0 0.0
    %4645 = vmatpush.msra.mxu0 0.0
    %4646 = vmatpush.msra.mxu0 0.0
    %4647 = vmatpush.msra.mxu0 0.0
    %4648 = vmatpush.msra.mxu0 0.0
    %4649 = vmatpush.msra.mxu0 0.0
    %4650 = vmatpush.msra.mxu0 0.0
    %4651 = vmatpush.msra.mxu0 0.0
    %4652 = vmatpush.msra.mxu0 0.0
    %4653 = vmatpush.msra.mxu0 0.0
    %4654 = vmatpush.msra.mxu0 0.0
    %4655 = vmatpush.msra.mxu0 %v4580
    %4656 = vmatpush.msra.mxu0 %v4562
    %4657 = vmatpush.msra.mxu0 %v4558
    %4658 = vmatmul.f32.gmra.mxu0 %v4568
    %v4659 = vpop.f32.mrf.mxu0
    %v4660 = vadd.f32 0.0, %v4659
    %4661 = vdwg.mxu0
    %v4662 = vadd.f32 %v4218, %v4600
    %v4663 = vadd.f32 %v4219, %v4620
    %v4664 = vadd.f32 %v4220, %v4640
    %v4665 = vadd.f32 %v4221, %v4660
    %v4666 = vld [vmem:[%s2370] sm:$0xff]
    %v4667 = vld [vmem:[%s2370 + $0x8] sm:$0xff]
    %v4668 = vld [vmem:[%s2370 + $0x10] sm:$0xff]
    %v4669 = vld [vmem:[%s2370 + $0x18] sm:$0xff]
    %v4670 = vld [vmem:[%s2370 + $0x20] sm:$0xff]
    %v4671 = vld [vmem:[%s2370 + $0x28] sm:$0xff]
    %v4672 = vld [vmem:[%s2370 + $0x30] sm:$0xff]
    %v4673 = vld [vmem:[%s2370 + $0x38] sm:$0xff]
    %v4674 = vld [vmem:[%s2370 + $0x40] sm:$0xf]
    %v4675 = vld [vmem:[%s2370 + $0x48] sm:$0xf]
    %v4676 = vld [vmem:[%s2370 + $0x50] sm:$0xf]
    %v4677 = vld [vmem:[%s2370 + $0x58] sm:$0xf]
    %v4678 = vrot.slane %v492, 1
    %v4679 = vsel %vm52, %v4678, 0
    %v4682 = vsel %vm62, %v4674, 0
    %v4685 = vsel %vm62, %v4675, 0
    %v4688 = vsel %vm62, %v4676, 0
    %v4691 = vsel %vm62, %v4677, 0
    %4693 = vmatpush.msra.mxu0 0.0
    %4694 = vmatpush.msra.mxu0 0.0
    %4695 = vmatpush.msra.mxu0 0.0
    %4696 = vmatpush.msra.mxu0 0.0
    %4697 = vmatpush.msra.mxu0 0.0
    %4698 = vmatpush.msra.mxu0 0.0
    %4699 = vmatpush.msra.mxu0 0.0
    %4700 = vmatpush.msra.mxu0 0.0
    %4701 = vmatpush.msra.mxu0 0.0
    %4702 = vmatpush.msra.mxu0 0.0
    %4703 = vmatpush.msra.mxu0 0.0
    %4704 = vmatpush.msra.mxu0 0.0
    %4705 = vmatpush.msra.mxu0 0.0
    %4706 = vmatpush.msra.mxu0 %v4682
    %4707 = vmatpush.msra.mxu0 %v4670
    %4708 = vmatpush.msra.mxu0 %v4666
    %4709 = vmatmul.f32.gmra.mxu0 %v4679
    %v4710 = vpop.f32.mrf.mxu0
    %v4711 = vadd.f32 0.0, %v4710
    %4712 = vdwg.mxu0
    %4713 = vmatpush.msra.mxu0 0.0
    %4714 = vmatpush.msra.mxu0 0.0
    %4715 = vmatpush.msra.mxu0 0.0
    %4716 = vmatpush.msra.mxu0 0.0
    %4717 = vmatpush.msra.mxu0 0.0
    %4718 = vmatpush.msra.mxu0 0.0
    %4719 = vmatpush.msra.mxu0 0.0
    %4720 = vmatpush.msra.mxu0 0.0
    %4721 = vmatpush.msra.mxu0 0.0
    %4722 = vmatpush.msra.mxu0 0.0
    %4723 = vmatpush.msra.mxu0 0.0
    %4724 = vmatpush.msra.mxu0 0.0
    %4725 = vmatpush.msra.mxu0 0.0
    %4726 = vmatpush.msra.mxu0 %v4685
    %4727 = vmatpush.msra.mxu0 %v4671
    %4728 = vmatpush.msra.mxu0 %v4667
    %4729 = vmatmul.f32.gmra.mxu0 %v4679
    %v4730 = vpop.f32.mrf.mxu0
    %v4731 = vadd.f32 0.0, %v4730
    %4732 = vdwg.mxu0
    %4733 = vmatpush.msra.mxu0 0.0
    %4734 = vmatpush.msra.mxu0 0.0
    %4735 = vmatpush.msra.mxu0 0.0
    %4736 = vmatpush.msra.mxu0 0.0
    %4737 = vmatpush.msra.mxu0 0.0
    %4738 = vmatpush.msra.mxu0 0.0
    %4739 = vmatpush.msra.mxu0 0.0
    %4740 = vmatpush.msra.mxu0 0.0
    %4741 = vmatpush.msra.mxu0 0.0
    %4742 = vmatpush.msra.mxu0 0.0
    %4743 = vmatpush.msra.mxu0 0.0
    %4744 = vmatpush.msra.mxu0 0.0
    %4745 = vmatpush.msra.mxu0 0.0
    %4746 = vmatpush.msra.mxu0 %v4688
    %4747 = vmatpush.msra.mxu0 %v4672
    %4748 = vmatpush.msra.mxu0 %v4668
    %4749 = vmatmul.f32.gmra.mxu0 %v4679
    %v4750 = vpop.f32.mrf.mxu0
    %v4751 = vadd.f32 0.0, %v4750
    %4752 = vdwg.mxu0
    %4753 = vmatpush.msra.mxu0 0.0
    %4754 = vmatpush.msra.mxu0 0.0
    %4755 = vmatpush.msra.mxu0 0.0
    %4756 = vmatpush.msra.mxu0 0.0
    %4757 = vmatpush.msra.mxu0 0.0
    %4758 = vmatpush.msra.mxu0 0.0
    %4759 = vmatpush.msra.mxu0 0.0
    %4760 = vmatpush.msra.mxu0 0.0
    %4761 = vmatpush.msra.mxu0 0.0
    %4762 = vmatpush.msra.mxu0 0.0
    %4763 = vmatpush.msra.mxu0 0.0
    %4764 = vmatpush.msra.mxu0 0.0
    %4765 = vmatpush.msra.mxu0 0.0
    %4766 = vmatpush.msra.mxu0 %v4691
    %4767 = vmatpush.msra.mxu0 %v4673
    %4768 = vmatpush.msra.mxu0 %v4669
    %4769 = vmatmul.f32.gmra.mxu0 %v4679
    %v4770 = vpop.f32.mrf.mxu0
    %v4771 = vadd.f32 0.0, %v4770
    %4772 = vdwg.mxu0
    %v4773 = vadd.f32 %v4329, %v4711
    %v4774 = vadd.f32 %v4330, %v4731
    %v4775 = vadd.f32 %v4331, %v4751
    %v4776 = vadd.f32 %v4332, %v4771
    %v4777 = vld [vmem:[%s2482] sm:$0xff]
    %v4778 = vld [vmem:[%s2482 + $0x8] sm:$0xff]
    %v4779 = vld [vmem:[%s2482 + $0x10] sm:$0xff]
    %v4780 = vld [vmem:[%s2482 + $0x18] sm:$0xff]
    %v4781 = vld [vmem:[%s2482 + $0x20] sm:$0xff]
    %v4782 = vld [vmem:[%s2482 + $0x28] sm:$0xff]
    %v4783 = vld [vmem:[%s2482 + $0x30] sm:$0xff]
    %v4784 = vld [vmem:[%s2482 + $0x38] sm:$0xff]
    %v4785 = vld [vmem:[%s2482 + $0x40] sm:$0xf]
    %v4786 = vld [vmem:[%s2482 + $0x48] sm:$0xf]
    %v4787 = vld [vmem:[%s2482 + $0x50] sm:$0xf]
    %v4788 = vld [vmem:[%s2482 + $0x58] sm:$0xf]
    %v4789 = vrot.slane %v492, 2
    %v4790 = vsel %vm52, %v4789, 0
    %v4793 = vsel %vm62, %v4785, 0
    %v4796 = vsel %vm62, %v4786, 0
    %v4799 = vsel %vm62, %v4787, 0
    %v4802 = vsel %vm62, %v4788, 0
    %4804 = vmatpush.msra.mxu0 0.0
    %4805 = vmatpush.msra.mxu0 0.0
    %4806 = vmatpush.msra.mxu0 0.0
    %4807 = vmatpush.msra.mxu0 0.0
    %4808 = vmatpush.msra.mxu0 0.0
    %4809 = vmatpush.msra.mxu0 0.0
    %4810 = vmatpush.msra.mxu0 0.0
    %4811 = vmatpush.msra.mxu0 0.0
    %4812 = vmatpush.msra.mxu0 0.0
    %4813 = vmatpush.msra.mxu0 0.0
    %4814 = vmatpush.msra.mxu0 0.0
    %4815 = vmatpush.msra.mxu0 0.0
    %4816 = vmatpush.msra.mxu0 0.0
    %4817 = vmatpush.msra.mxu0 %v4793
    %4818 = vmatpush.msra.mxu0 %v4781
    %4819 = vmatpush.msra.mxu0 %v4777
    %4820 = vmatmul.f32.gmra.mxu0 %v4790
    %v4821 = vpop.f32.mrf.mxu0
    %v4822 = vadd.f32 0.0, %v4821
    %4823 = vdwg.mxu0
    %4824 = vmatpush.msra.mxu0 0.0
    %4825 = vmatpush.msra.mxu0 0.0
    %4826 = vmatpush.msra.mxu0 0.0
    %4827 = vmatpush.msra.mxu0 0.0
    %4828 = vmatpush.msra.mxu0 0.0
    %4829 = vmatpush.msra.mxu0 0.0
    %4830 = vmatpush.msra.mxu0 0.0
    %4831 = vmatpush.msra.mxu0 0.0
    %4832 = vmatpush.msra.mxu0 0.0
    %4833 = vmatpush.msra.mxu0 0.0
    %4834 = vmatpush.msra.mxu0 0.0
    %4835 = vmatpush.msra.mxu0 0.0
    %4836 = vmatpush.msra.mxu0 0.0
    %4837 = vmatpush.msra.mxu0 %v4796
    %4838 = vmatpush.msra.mxu0 %v4782
    %4839 = vmatpush.msra.mxu0 %v4778
    %4840 = vmatmul.f32.gmra.mxu0 %v4790
    %v4841 = vpop.f32.mrf.mxu0
    %v4842 = vadd.f32 0.0, %v4841
    %4843 = vdwg.mxu0
    %4844 = vmatpush.msra.mxu0 0.0
    %4845 = vmatpush.msra.mxu0 0.0
    %4846 = vmatpush.msra.mxu0 0.0
    %4847 = vmatpush.msra.mxu0 0.0
    %4848 = vmatpush.msra.mxu0 0.0
    %4849 = vmatpush.msra.mxu0 0.0
    %4850 = vmatpush.msra.mxu0 0.0
    %4851 = vmatpush.msra.mxu0 0.0
    %4852 = vmatpush.msra.mxu0 0.0
    %4853 = vmatpush.msra.mxu0 0.0
    %4854 = vmatpush.msra.mxu0 0.0
    %4855 = vmatpush.msra.mxu0 0.0
    %4856 = vmatpush.msra.mxu0 0.0
    %4857 = vmatpush.msra.mxu0 %v4799
    %4858 = vmatpush.msra.mxu0 %v4783
    %4859 = vmatpush.msra.mxu0 %v4779
    %4860 = vmatmul.f32.gmra.mxu0 %v4790
    %v4861 = vpop.f32.mrf.mxu0
    %v4862 = vadd.f32 0.0, %v4861
    %4863 = vdwg.mxu0
    %4864 = vmatpush.msra.mxu0 0.0
    %4865 = vmatpush.msra.mxu0 0.0
    %4866 = vmatpush.msra.mxu0 0.0
    %4867 = vmatpush.msra.mxu0 0.0
    %4868 = vmatpush.msra.mxu0 0.0
    %4869 = vmatpush.msra.mxu0 0.0
    %4870 = vmatpush.msra.mxu0 0.0
    %4871 = vmatpush.msra.mxu0 0.0
    %4872 = vmatpush.msra.mxu0 0.0
    %4873 = vmatpush.msra.mxu0 0.0
    %4874 = vmatpush.msra.mxu0 0.0
    %4875 = vmatpush.msra.mxu0 0.0
    %4876 = vmatpush.msra.mxu0 0.0
    %4877 = vmatpush.msra.mxu0 %v4802
    %4878 = vmatpush.msra.mxu0 %v4784
    %4879 = vmatpush.msra.mxu0 %v4780
    %4880 = vmatmul.f32.gmra.mxu0 %v4790
    %v4881 = vpop.f32.mrf.mxu0
    %v4882 = vadd.f32 0.0, %v4881
    %4883 = vdwg.mxu0
    %v4884 = vadd.f32 %v4440, %v4822
    %v4885 = vadd.f32 %v4441, %v4842
    %v4886 = vadd.f32 %v4442, %v4862
    %v4887 = vadd.f32 %v4443, %v4882
    %v4888 = vld [vmem:[%s2594] sm:$0xff]
    %v4889 = vld [vmem:[%s2594 + $0x8] sm:$0xff]
    %v4890 = vld [vmem:[%s2594 + $0x10] sm:$0xff]
    %v4891 = vld [vmem:[%s2594 + $0x18] sm:$0xff]
    %v4892 = vld [vmem:[%s2594 + $0x20] sm:$0xff]
    %v4893 = vld [vmem:[%s2594 + $0x28] sm:$0xff]
    %v4894 = vld [vmem:[%s2594 + $0x30] sm:$0xff]
    %v4895 = vld [vmem:[%s2594 + $0x38] sm:$0xff]
    %v4896 = vld [vmem:[%s2594 + $0x40] sm:$0xf]
    %v4897 = vld [vmem:[%s2594 + $0x48] sm:$0xf]
    %v4898 = vld [vmem:[%s2594 + $0x50] sm:$0xf]
    %v4899 = vld [vmem:[%s2594 + $0x58] sm:$0xf]
    %v4900 = vrot.slane %v492, 3
    %v4901 = vsel %vm52, %v4900, 0
    %v4904 = vsel %vm62, %v4896, 0
    %v4907 = vsel %vm62, %v4897, 0
    %v4910 = vsel %vm62, %v4898, 0
    %v4913 = vsel %vm62, %v4899, 0
    %4915 = vmatpush.msra.mxu0 0.0
    %4916 = vmatpush.msra.mxu0 0.0
    %4917 = vmatpush.msra.mxu0 0.0
    %4918 = vmatpush.msra.mxu0 0.0
    %4919 = vmatpush.msra.mxu0 0.0
    %4920 = vmatpush.msra.mxu0 0.0
    %4921 = vmatpush.msra.mxu0 0.0
    %4922 = vmatpush.msra.mxu0 0.0
    %4923 = vmatpush.msra.mxu0 0.0
    %4924 = vmatpush.msra.mxu0 0.0
    %4925 = vmatpush.msra.mxu0 0.0
    %4926 = vmatpush.msra.mxu0 0.0
    %4927 = vmatpush.msra.mxu0 0.0
    %4928 = vmatpush.msra.mxu0 %v4904
    %4929 = vmatpush.msra.mxu0 %v4892
    %4930 = vmatpush.msra.mxu0 %v4888
    %4931 = vmatmul.f32.gmra.mxu0 %v4901
    %v4932 = vpop.f32.mrf.mxu0
    %v4933 = vadd.f32 0.0, %v4932
    %4934 = vdwg.mxu0
    %4935 = vmatpush.msra.mxu0 0.0
    %4936 = vmatpush.msra.mxu0 0.0
    %4937 = vmatpush.msra.mxu0 0.0
    %4938 = vmatpush.msra.mxu0 0.0
    %4939 = vmatpush.msra.mxu0 0.0
    %4940 = vmatpush.msra.mxu0 0.0
    %4941 = vmatpush.msra.mxu0 0.0
    %4942 = vmatpush.msra.mxu0 0.0
    %4943 = vmatpush.msra.mxu0 0.0
    %4944 = vmatpush.msra.mxu0 0.0
    %4945 = vmatpush.msra.mxu0 0.0
    %4946 = vmatpush.msra.mxu0 0.0
    %4947 = vmatpush.msra.mxu0 0.0
    %4948 = vmatpush.msra.mxu0 %v4907
    %4949 = vmatpush.msra.mxu0 %v4893
    %4950 = vmatpush.msra.mxu0 %v4889
    %4951 = vmatmul.f32.gmra.mxu0 %v4901
    %v4952 = vpop.f32.mrf.mxu0
    %v4953 = vadd.f32 0.0, %v4952
    %4954 = vdwg.mxu0
    %4955 = vmatpush.msra.mxu0 0.0
    %4956 = vmatpush.msra.mxu0 0.0
    %4957 = vmatpush.msra.mxu0 0.0
    %4958 = vmatpush.msra.mxu0 0.0
    %4959 = vmatpush.msra.mxu0 0.0
    %4960 = vmatpush.msra.mxu0 0.0
    %4961 = vmatpush.msra.mxu0 0.0
    %4962 = vmatpush.msra.mxu0 0.0
    %4963 = vmatpush.msra.mxu0 0.0
    %4964 = vmatpush.msra.mxu0 0.0
    %4965 = vmatpush.msra.mxu0 0.0
    %4966 = vmatpush.msra.mxu0 0.0
    %4967 = vmatpush.msra.mxu0 0.0
    %4968 = vmatpush.msra.mxu0 %v4910
    %4969 = vmatpush.msra.mxu0 %v4894
    %4970 = vmatpush.msra.mxu0 %v4890
    %4971 = vmatmul.f32.gmra.mxu0 %v4901
    %v4972 = vpop.f32.mrf.mxu0
    %v4973 = vadd.f32 0.0, %v4972
    %4974 = vdwg.mxu0
    %4975 = vmatpush.msra.mxu0 0.0
    %4976 = vmatpush.msra.mxu0 0.0
    %4977 = vmatpush.msra.mxu0 0.0
    %4978 = vmatpush.msra.mxu0 0.0
    %4979 = vmatpush.msra.mxu0 0.0
    %4980 = vmatpush.msra.mxu0 0.0
    %4981 = vmatpush.msra.mxu0 0.0
    %4982 = vmatpush.msra.mxu0 0.0
    %4983 = vmatpush.msra.mxu0 0.0
    %4984 = vmatpush.msra.mxu0 0.0
    %4985 = vmatpush.msra.mxu0 0.0
    %4986 = vmatpush.msra.mxu0 0.0
    %4987 = vmatpush.msra.mxu0 0.0
    %4988 = vmatpush.msra.mxu0 %v4913
    %4989 = vmatpush.msra.mxu0 %v4895
    %4990 = vmatpush.msra.mxu0 %v4891
    %4991 = vmatmul.f32.gmra.mxu0 %v4901
    %v4992 = vpop.f32.mrf.mxu0
    %v4993 = vadd.f32 0.0, %v4992
    %4994 = vdwg.mxu0
    %v4995 = vadd.f32 %v4551, %v4933
    %v4996 = vadd.f32 %v4552, %v4953
    %v4997 = vadd.f32 %v4553, %v4973
    %v4998 = vadd.f32 %v4554, %v4993
    %v5003 = vrot.slane %v4663, 7
    %v5004 = vrot.slane %v4664, 6
    %v5005 = vrot.slane %v4665, 5
    %v5006 = vsel %vm2713, %v4662, %v5003
    %v5007 = vsel %vm2715, %v5004, %v5005
    %v5008 = vsel %vm242, %v5006, %v5007
    %v5010 = vadd.f32 %v498, %v5008
    %v5015 = vrot.slane %v4774, 7
    %v5016 = vrot.slane %v4775, 6
    %v5017 = vrot.slane %v4776, 5
    %v5018 = vsel %vm2713, %v4773, %v5015
    %v5019 = vsel %vm2715, %v5016, %v5017
    %v5020 = vsel %vm242, %v5018, %v5019
    %v5022 = vadd.f32 %v5010, %v5020
    %v5027 = vrot.slane %v4885, 7
    %v5028 = vrot.slane %v4886, 6
    %v5029 = vrot.slane %v4887, 5
    %v5030 = vsel %vm2713, %v4884, %v5027
    %v5031 = vsel %vm2715, %v5028, %v5029
    %v5032 = vsel %vm242, %v5030, %v5031
    %v5034 = vadd.f32 %v5022, %v5032
    %v5039 = vrot.slane %v4996, 7
    %v5040 = vrot.slane %v4997, 6
    %v5041 = vrot.slane %v4998, 5
    %v5042 = vsel %vm2713, %v4995, %v5039
    %v5043 = vsel %vm2715, %v5040, %v5041
    %v5044 = vsel %vm242, %v5042, %v5043
    %v5046 = vadd.f32 %v5034, %v5044
    %v5047 = vmul.f32 %v5046, %v5046
    %v5049 = vperm.slane %v5047, 0
    %v5050 = vperm.slane %v5047, 1
    %v5051 = vperm.slane %v5047, 2
    %v5052 = vperm.slane %v5047, 3
    %v5057 = vsel %vm2713, %v5049, 0.0
    %v5058 = vsel %vm2713, %v5050, 0.0
    %v5059 = vadd.f32 %v5057, %v5058
    %v5060 = vsel %vm2713, %v5051, 0.0
    %v5061 = vadd.f32 %v5059, %v5060
    %v5062 = vsel %vm2713, %v5052, 0.0
    %v5063 = vadd.f32 %v5061, %v5062
    %5064 = vadd.xlane.f32.xlu0 %v5063
    %v5065 = vpop.xlane.xlu0 %5064
    %v5066 = vrsqrt.pop %v5065
    %v5067 = vmul.f32 %v5066, %v5065
    %v5068 = vmul.f32 %v5067, %v5066
    %v5069 = vmul.f32 0.5, %v5068
    %v5070 = vsub.f32 1.5, %v5069
    %v5071 = vmul.f32 %v5066, %v5070
    %v5072 = vmul.f32 %v5065, %v5071
    %vm5073 = vcmp.eq.f32.partialorder %v5065, inf
    %v5074 = vsel %vm5073, %v5065, %v5072
    %vm5075 = vcmp.eq.f32.partialorder %v5065, 0.0
    %v5076 = vand.u32 %v5065, 2147483648
    %v5077 = vsel %vm5075, %v5076, %v5074
    %v5078 = vadd.f32 %v5077, 1e-08
    %v5080 = vperm.slane %v5078, 0
    %v5082 = vrcp.pop %v5080
    %v5083 = vmul.f32 %v5080, %v5082
    %v5084 = vsub.f32 1.0, %v5083
    %v5085 = vmul.f32 %v5082, %v5084
    %v5086 = vadd.f32 %v5082, %v5085
    %vm5087 = vweird.f32 %v5080
    %vm5088 = vweird.f32 %v5082
    %vm5089 = vmor %vm5087, %vm5088
    %v5090 = vsel %vm5089, %v5082, %v5086
    %v5091 = vand.u32 2147483647, %v5080
    %vm5092 = vcmp.eq.f32.partialorder %v5091, 8.507059e+37
    %v5093 = vand.u32 %v5080, 2147483648
    %v5094 = vor.u32 1.1754944e-38, %v5093
    %v5095 = vsel %vm5092, %v5094, %v5090
    %v5096 = vmul.f32 %v5046, %v5095
    %s5097 = scalar_lea.vmem [#allocation4], 1
    %5098 = vst.msk [vmem:[%s5097] ss:$2 sm:$0xf] %vm2809, %v5096
    // Predicated region
    $region30: #{tpu_custom_call.1} parent=1 // pred_check
      _
    $region31: #{tpu_custom_call.1} parent=1 // pred_check_branch
      %5100 = sbr.rel (0) target = $region33
    $region32: #{tpu_custom_call.1} parent=1 // pred_region
      %5102 = vsyncadd [#allocation5], 0
      %s5104 = sshll.u32 [#allocation4], 4
      %s5105 = int_to_ptr.vmem [resolvable:$true] %s5104
      %s5106 = sshll.u32 %s7, 4
      %s5107 = int_to_ptr.hbm [resolvable:$true] %s5106
      %5109 = dma.vmem_to_hbm [thread:$0]  %s5105, 128, %s5107, [#allocation5]
    $region33: #{tpu_custom_call.1} parent=1 // pred_fallthru
      _
    // Predicated region
    $region34: #{tpu_custom_call.1} parent=1 // pred_check
      _
    $region35: #{tpu_custom_call.1} parent=1 // pred_check_branch
      %5111 = sbr.rel (0) target = $region37
    $region36: #{tpu_custom_call.1} parent=1 // pred_region
      %5113 = dma.done [#allocation5], 128
    $region37: #{tpu_custom_call.1} parent=1 // pred_fallthru
      _
    %5114 = vsyncpa [#allocation5], 1
  %5115 = vsyncmov [#allocation3]
  %s5116 = vpop.sfrf %5115
  %p5117 = scmp.eq.s32.totalorder %s5116, 0
  %p5118 = pneg %p5117
  %5120 = shalt.err (%p5118)

</llo_original>
